<compile_context>
chip_gen: v7x
topology: tpu7x:2x2x1
jax: 0.10.0
libtpu: 0.0.40
codegen_flags: <defaults>
</compile_context>

<pallas_src>
import functools
import math

import jax
import jax.numpy as jnp
from jax.experimental import pallas as pl
from jax.experimental.pallas import tpu as pltpu


def _vmem_limit_bytes():
    """Generation-aware scoped-VMEM budget: 75% of physical VMEM, capped."""
    cap = 0
    try:
        cap = int(getattr(pltpu.get_tpu_info(), "vmem_capacity_bytes", 0))
    except Exception:
        cap = 0
    if cap <= 0:
        cap = 64 * 1024 * 1024            # conservative fallback (v7x per-TC size)
    return min((cap * 3) // 4, 112 * 1024 * 1024)


# --------------------------------------------------------------------------------------
# Kernel A: RMSNorm1 + per-kv-group QKV projection + RoPE  (head-major bf16 outputs)
# grid = (B, num_q_tiles, num_kv_head); weights streamed per kv-head group.
# --------------------------------------------------------------------------------------
def _qkv_rope_kernel(x_ref, n1_ref, cosk_ref, sink_ref, cosq_ref, sinqh_ref, sinql_ref,
                     wq_ref, wk_ref, wv_ref, q_ref, k_ref, v_ref, hnorm_sc,
                     *, eps, group, head_dim):
    hk = pl.program_id(2)
    half = head_dim // 2

    # RMSNorm computed once per (batch, q-tile) and cached in weight-dtype scratch.
    @pl.when(hk == 0)
    def _():
        xb = x_ref[0].astype(jnp.float32)
        var = jnp.mean(xb * xb, axis=-1, keepdims=True)
        hnorm_sc[...] = (xb * jax.lax.rsqrt(var + eps)
                         * n1_ref[...].astype(jnp.float32)).astype(hnorm_sc.dtype)

    h = hnorm_sc[...]                                       # already in weight dtype

    # --- q: whole kv group in one matmul; grouped RoPE via two XLU rolls.
    # sinqh / sinql are zero-masked so the per-Dh-segment rotate-half is exact even
    # though the rolls span the full group*Dh width.
    qg = jnp.dot(h, wq_ref[0], preferred_element_type=jnp.float32)   # [Tq, group*Dh]
    width = group * head_dim
    q_rot = (qg * cosq_ref[...]
             + pltpu.roll(qg, half, 1) * sinqh_ref[...]
             + pltpu.roll(qg, width - half, 1) * sinql_ref[...])
    for g in range(group):                                   # head-major stores
        q_ref[0, g] = q_rot[:, g * head_dim:(g + 1) * head_dim].astype(q_ref.dtype)

    # --- k (single roll, sign folded into sin table) and v.
    kh = jnp.dot(h, wk_ref[0], preferred_element_type=jnp.float32)   # [Tq, Dh]
    k_ref[0, 0] = (kh * cosk_ref[...]
                   + pltpu.roll(kh, half, 1) * sink_ref[...]).astype(k_ref.dtype)
    v_ref[0, 0] = jnp.dot(h, wv_ref[0],
                          preferred_element_type=jnp.float32).astype(v_ref.dtype)


# --------------------------------------------------------------------------------------
# Kernel B: flash attention (online softmax, whole GQA group per step)
#           + fused out-projection (K = group*Dh) + residual
# grid = (B, num_q_tiles, num_kv_head, num_kv_tiles)
# --------------------------------------------------------------------------------------
def _flash_attn_kernel(x_ref, q_ref, k_ref, v_ref, wo_ref, o_ref,
                       out_acc, m_sc, l_sc, acc_sc,
                       *, scale, causal, q_tile, kv_tile, group):
    qi = pl.program_id(1)
    hk = pl.program_id(2)
    ki = pl.program_id(3)
    n_hk = pl.num_programs(2)
    n_kv = pl.num_programs(3)

    # Residual init of the fused output accumulator (once per (b, q-tile)).
    @pl.when(jnp.logical_and(hk == 0, ki == 0))
    def _():
        out_acc[...] = x_ref[0].astype(jnp.float32)

    # Per-group online-softmax state init (rows = stacked q heads of this kv group).
    @pl.when(ki == 0)
    def _():
        m_sc[...] = jnp.full_like(m_sc, -jnp.inf)
        l_sc[...] = jnp.zeros_like(l_sc)
        acc_sc[...] = jnp.zeros_like(acc_sc)

    if causal:
        # Last kv tile touching this q tile, computed in ELEMENT units (tq != tk safe).
        last_ki = ((qi + 1) * q_tile - 1) // kv_tile
    else:
        last_ki = n_kv - 1

    def update():
        # Stack this kv group's q heads along rows: one big MXU matmul per grid step.
        q = jnp.concatenate([q_ref[0, g] for g in range(group)], axis=0)  # [G*Tq, Dh]
        k = k_ref[0, 0]                                                   # [Tk, Dh]
        s = jax.lax.dot_general(q, k, (((1,), (1,)), ((), ())),
                                preferred_element_type=jnp.float32) * scale
        if causal:
            qpos = qi * q_tile + (
                jax.lax.broadcasted_iota(jnp.int32, s.shape, 0) % q_tile)
            kpos = ki * kv_tile + jax.lax.broadcasted_iota(jnp.int32, s.shape, 1)
            # NaN-safe: kv tile 0 is always processed first and leaves every row with a
            # finite running max, so later fully-masked rows stay finite.
            s = jnp.where(qpos >= kpos, s, -jnp.inf)
        m_prev = m_sc[...]
        m_new = jnp.maximum(m_prev, jnp.max(s, axis=-1, keepdims=True))
        alpha = jnp.exp(m_prev - m_new)
        p = jnp.exp(s - m_new)
        l_sc[...] = alpha * l_sc[...] + jnp.sum(p, axis=-1, keepdims=True)
        acc_sc[...] = alpha * acc_sc[...] + jnp.dot(
            p.astype(v_ref.dtype), v_ref[0, 0], preferred_element_type=jnp.float32)
        m_sc[...] = m_new

    if causal:
        pl.when(ki <= last_ki)(update)     # skip fully-masked kv tiles
    else:
        update()

    # Finalize this kv group: normalize and accumulate its out-projection with a
    # K = group*Dh contraction (>= 256-deep on GQA), wo streamed per group.
    @pl.when(ki == last_ki)
    def _():
        inv_l = pl.reciprocal(l_sc[...], approx=True)            # EUP slot
        o_n = acc_sc[...] * inv_l                                 # [G*Tq, Dh]
        o_wide = jnp.concatenate(
            [o_n[g * q_tile:(g + 1) * q_tile, :] for g in range(group)],
            axis=1).astype(wo_ref.dtype)                          # [Tq, G*Dh]
        out_acc[...] += jnp.dot(o_wide, wo_ref[0], preferred_element_type=jnp.float32)

    @pl.when(jnp.logical_and(hk == n_hk - 1, ki == last_ki))
    def _():
        o_ref[0] = out_acc[...].astype(o_ref.dtype)


# --------------------------------------------------------------------------------------
# Kernel C: RMSNorm2 + gated-SiLU MLP (fused gate|up weight), tiled over FFN + residual
# grid = (B, num_q_tiles, num_f_tiles); wgu/wd streamed per F-tile.
# --------------------------------------------------------------------------------------
def _mlp_kernel(h1_ref, n2_ref, wgu_ref, wd_ref, o_ref, h2_sc, acc_sc, *, eps, f_tile):
    f = pl.program_id(2)
    n_f = pl.num_programs(2)

    @pl.when(f == 0)
    def _():
        h1 = h1_ref[0].astype(jnp.float32)
        var = jnp.mean(h1 * h1, axis=-1, keepdims=True)
        h2_sc[...] = (h1 * jax.lax.rsqrt(var + eps)
                      * n2_ref[...].astype(jnp.float32)).astype(h2_sc.dtype)
        acc_sc[...] = h1                                          # residual

    h2 = h2_sc[...]                                               # weight dtype
    gu = jnp.dot(h2, wgu_ref[0], preferred_element_type=jnp.float32)   # [Tq, 2*TF]
    g = gu[:, :f_tile]
    u = gu[:, f_tile:]
    act = g * jax.nn.sigmoid(g)                                   # SiLU in f32
    acc_sc[...] += jnp.dot((act * u).astype(wd_ref.dtype), wd_ref[...],
                           preferred_element_type=jnp.float32)

    @pl.when(f == n_f - 1)
    def _():
        o_ref[0] = acc_sc[...].astype(o_ref.dtype)


# --------------------------------------------------------------------------------------
# Wrapper
# --------------------------------------------------------------------------------------
def transformer_decoder_layer(x, params, *, num_q_head, num_kv_head, head_dim,
                              eps=1e-5, rope_base=10000, causal=True,
                              softmax_scale=None, qkv_dtype=jnp.bfloat16,
                              q_block=256, kv_block=512, ffn_block=None):
    B, S, H = x.shape
    Dh = head_dim
    assert num_q_head % num_kv_head == 0 and Dh % 2 == 0
    group = num_q_head // num_kv_head
    F = params["w_gate"].shape[1]
    scale = softmax_scale if softmax_scale is not None else 1.0 / math.sqrt(Dh)
    wdt = params["wq"].dtype
    vmem_limit = _vmem_limit_bytes()

    tq = min(q_block, S)
    tk = min(kv_block, S)
    if ffn_block is None:
        # Big FFN tiles only when the VMEM budget supports them (v5e/v6e); cap on v7x.
        ffn_block = 1024 if vmem_limit >= 80 * 1024 * 1024 else 512
    tf = min(ffn_block, F)
    assert S % tq == 0 and S % tk == 0, "seq_len must be divisible by the q/kv tile sizes"
    assert F % tf == 0, "ffh_size must be divisible by the FFN tile size"
    n_sq, n_kv, n_f = S // tq, S // tk, F // tf

    # --- RoPE tables (glue).  Sign folded into sin; for the grouped q tables the
    #     rotate-half segment selection is folded in as zero-masked hi/lo halves.
    half = Dh // 2
    inv_freq = 1.0 / (rope_base ** (jnp.arange(0, half, dtype=jnp.float32) / half))
    freqs = jnp.outer(jnp.arange(S, dtype=jnp.float32), inv_freq)          # [S, Dh/2]
    zero = jnp.zeros_like(freqs)
    cos_k = jnp.concatenate([jnp.cos(freqs), jnp.cos(freqs)], axis=-1)     # [S, Dh]
    sin_k = jnp.concatenate([-jnp.sin(freqs), jnp.sin(freqs)], axis=-1)    # [S, Dh]
    cos_q = jnp.tile(cos_k, (1, group))                                    # [S, G*Dh]
    sin_qh = jnp.tile(jnp.concatenate([zero, jnp.sin(freqs)], -1), (1, group))
    sin_ql = jnp.tile(jnp.concatenate([-jnp.sin(freqs), zero], -1), (1, group))

    # --- reshape weights kv-group-major (glue) ---
    n1 = params["norm1"].reshape(1, H)
    n2 = params["norm2"].reshape(1, H)
    wq_r = params["wq"].reshape(H, num_kv_head, group * Dh).transpose(1, 0, 2)
    wk_r = params["wk"].reshape(H, num_kv_head, Dh).transpose(1, 0, 2)
    wv_r = params["wv"].reshape(H, num_kv_head, Dh).transpose(1, 0, 2)
    wo_r = params["wo"].reshape(num_kv_head, group * Dh, H)
    wgu = jnp.concatenate([params["w_gate"].reshape(H, n_f, tf),
                           params["w_up"].reshape(H, n_f, tf)],
                          axis=-1).transpose(1, 0, 2)                      # [n_f, H, 2tf]
    wd = params["w_down"]

    cdt = qkv_dtype                      # bf16 intermediates by default (HBM + VMEM win)
    isz = jnp.dtype(x.dtype).itemsize
    wsz = jnp.dtype(wdt).itemsize
    csz = jnp.dtype(cdt).itemsize

    # ---------------- Kernel A: QKV + RoPE ----------------
    qkv_kernel = functools.partial(_qkv_rope_kernel, eps=eps, group=group, head_dim=Dh)
    q, k, v = pl.pallas_call(
        qkv_kernel,
        grid=(B, n_sq, num_kv_head),
        in_specs=[
            pl.BlockSpec((1, tq, H), lambda b, i, hk: (b, i, 0)),
            pl.BlockSpec((1, H), lambda b, i, hk: (0, 0)),
            pl.BlockSpec((tq, Dh), lambda b, i, hk: (i, 0)),           # cos_k
            pl.BlockSpec((tq, Dh), lambda b, i, hk: (i, 0)),           # sin_k
            pl.BlockSpec((tq, group * Dh), lambda b, i, hk: (i, 0)),   # cos_q
            pl.BlockSpec((tq, group * Dh), lambda b, i, hk: (i, 0)),   # sin_q (hi half)
            pl.BlockSpec((tq, group * Dh), lambda b, i, hk: (i, 0)),   # sin_q (lo half)
            pl.BlockSpec((1, H, group * Dh), lambda b, i, hk: (hk, 0, 0)),
            pl.BlockSpec((1, H, Dh), lambda b, i, hk: (hk, 0, 0)),
            pl.BlockSpec((1, H, Dh), lambda b, i, hk: (hk, 0, 0)),
        ],
        out_specs=[
            pl.BlockSpec((1, group, tq, Dh), lambda b, i, hk: (b, hk, i, 0)),
            pl.BlockSpec((1, 1, tq, Dh), lambda b, i, hk: (b, hk, i, 0)),
            pl.BlockSpec((1, 1, tq, Dh), lambda b, i, hk: (b, hk, i, 0)),
        ],
        out_shape=[
            jax.ShapeDtypeStruct((B, num_q_head, S, Dh), cdt),
            jax.ShapeDtypeStruct((B, num_kv_head, S, Dh), cdt),
            jax.ShapeDtypeStruct((B, num_kv_head, S, Dh), cdt),
        ],
        scratch_shapes=[pltpu.VMEM((tq, H), wdt)],
        compiler_params=pltpu.CompilerParams(
            dimension_semantics=("parallel", "parallel", "arbitrary"),
            vmem_limit_bytes=vmem_limit),
        cost_estimate=pl.CostEstimate(
            flops=int(2 * B * S * H * Dh * (num_q_head + 2 * num_kv_head)),
            transcendentals=0,
            bytes_accessed=int(x.size * isz
                               + B * n_sq * (wq_r.size + wk_r.size + wv_r.size) * wsz
                               + B * S * Dh * (num_q_head + 2 * num_kv_head) * csz)),
    )(x, n1, cos_k, sin_k, cos_q, sin_qh, sin_ql, wq_r, wk_r, wv_r)

    # ---------------- Kernel B: flash attention + out-proj + residual ----------------
    attn_kernel = functools.partial(_flash_attn_kernel, scale=scale, causal=causal,
                                    q_tile=tq, kv_tile=tk, group=group)
    if causal:
        def kv_map(b, i, h, j):
            # Clamp to the last relevant kv tile: masked tiles re-use the previous block
            # index, so Pallas skips their DMA entirely.
            return (b, h, jnp.minimum(j, ((i + 1) * tq - 1) // tk), 0)
    else:
        def kv_map(b, i, h, j):
            return (b, h, j, 0)

    h1 = pl.pallas_call(
        attn_kernel,
        grid=(B, n_sq, num_kv_head, n_kv),
        in_specs=[
            pl.BlockSpec((1, tq, H), lambda b, i, h, j: (b, i, 0)),
            pl.BlockSpec((1, group, tq, Dh), lambda b, i, h, j: (b, h, i, 0)),
            pl.BlockSpec((1, 1, tk, Dh), kv_map),
            pl.BlockSpec((1, 1, tk, Dh), kv_map),
            pl.BlockSpec((1, group * Dh, H), lambda b, i, h, j: (h, 0, 0)),
        ],
        out_specs=pl.BlockSpec((1, tq, H), lambda b, i, h, j: (b, i, 0)),
        out_shape=jax.ShapeDtypeStruct((B, S, H), x.dtype),
        scratch_shapes=[
            pltpu.VMEM((tq, H), jnp.float32),            # residual + out-proj accumulator
            pltpu.VMEM((group * tq, 1), jnp.float32),    # running max m (stacked heads)
            pltpu.VMEM((group * tq, 1), jnp.float32),    # running sum l
            pltpu.VMEM((group * tq, Dh), jnp.float32),   # unnormalized o accumulator
        ],
        compiler_params=pltpu.CompilerParams(
            dimension_semantics=("parallel", "parallel", "arbitrary", "arbitrary"),
            vmem_limit_bytes=vmem_limit),
        cost_estimate=pl.CostEstimate(
            flops=int(4 * B * num_q_head * S * S * Dh + 2 * B * S * num_q_head * Dh * H),
            transcendentals=int(B * num_q_head * S * S),
            bytes_accessed=int(2 * x.size * isz
                               + (q.size + k.size + v.size) * csz
                               + B * n_sq * wo_r.size * wsz)),
    )(x, q, k, v, wo_r)

    # ---------------- Kernel C: MLP (fused gate|up) tiled over F + residual ----------
    mlp_kernel = functools.partial(_mlp_kernel, eps=eps, f_tile=tf)
    y = pl.pallas_call(
        mlp_kernel,
        grid=(B, n_sq, n_f),
        in_specs=[
            pl.BlockSpec((1, tq, H), lambda b, i, f: (b, i, 0)),
            pl.BlockSpec((1, H), lambda b, i, f: (0, 0)),
            pl.BlockSpec((1, H, 2 * tf), lambda b, i, f: (f, 0, 0)),
            pl.BlockSpec((tf, H), lambda b, i, f: (f, 0)),
        ],
        out_specs=pl.BlockSpec((1, tq, H), lambda b, i, f: (b, i, 0)),
        out_shape=jax.ShapeDtypeStruct((B, S, H), x.dtype),
        scratch_shapes=[pltpu.VMEM((tq, H), wdt),          # cached RMSNorm2(h1)
                        pltpu.VMEM((tq, H), jnp.float32)], # residual + down-proj acc
        compiler_params=pltpu.CompilerParams(
            dimension_semantics=("parallel", "parallel", "arbitrary"),
            vmem_limit_bytes=vmem_limit),
        cost_estimate=pl.CostEstimate(
            flops=int(6 * B * S * H * F),
            transcendentals=int(B * S * F),
            bytes_accessed=int(2 * x.size * isz
                               + B * n_sq * (wgu.size + wd.size) * wsz)),
    )(h1, n2, wgu, wd)

    return y


# --------------------------------------------------------------------------------------
# Pure-JAX reference (correctness oracle)
# --------------------------------------------------------------------------------------
def reference_decoder_layer(x, params, *, num_q_head, num_kv_head, head_dim,
                            eps=1e-5, rope_base=10000, causal=True):
    B, S, H = x.shape
    scale = 1.0 / math.sqrt(head_dim)
    half = head_dim // 2
    inv_freq = 1.0 / (rope_base ** (jnp.arange(0, half, dtype=jnp.float32) / half))
    freqs = jnp.outer(jnp.arange(S, dtype=jnp.float32), inv_freq)
    cos = jnp.concatenate([jnp.cos(freqs)] * 2, -1)[None, :, None, :]
    sin = jnp.concatenate([jnp.sin(freqs)] * 2, -1)[None, :, None, :]

    def rmsnorm(h, w):
        return h * jax.lax.rsqrt(jnp.mean(h * h, -1, keepdims=True) + eps) * w

    def rope(t):  # [B, S, nh, Dh]
        t1, t2 = t[..., :half], t[..., half:]
        return t * cos + jnp.concatenate([-t2, t1], -1) * sin

    hN = rmsnorm(x, params["norm1"])
    q = rope((hN @ params["wq"]).reshape(B, S, num_q_head, head_dim))
    k = rope((hN @ params["wk"]).reshape(B, S, num_kv_head, head_dim))
    v = (hN @ params["wv"]).reshape(B, S, num_kv_head, head_dim)
    rep = num_q_head // num_kv_head
    k = jnp.repeat(k, rep, axis=2)
    v = jnp.repeat(v, rep, axis=2)
    s = jnp.einsum("bqhd,bkhd->bhqk", q, k) * scale
    if causal:
        mask = jnp.tril(jnp.ones((S, S), bool))
        s = jnp.where(mask, s, -jnp.inf)
    p = jax.nn.softmax(s, axis=-1)
    o = jnp.einsum("bhqk,bkhd->bqhd", p, v).reshape(B, S, num_q_head * head_dim)
    h1 = x + o @ params["wo"]
    h2 = rmsnorm(h1, params["norm2"])
    g = h2 @ params["w_gate"]
    u = h2 @ params["w_up"]
    return h1 + (jax.nn.silu(g) * u) @ params["w_down"]


if __name__ == "__main__":
    # Shapes chosen so the new tiling paths are exercised: 4 q-tiles (tq=256),
    # 2 kv-tiles (tk=512, tq != tk), causal clamp/skip, GQA group=2 (K=256 out-proj),
    # 1-2 FFN tiles depending on the chip's VMEM budget.
    B, S, H = 2, 1024, 128
    num_q_head, num_kv_head, head_dim = 4, 2, 128
    ffh = 1024

    key = jax.random.PRNGKey(0)
    ks = jax.random.split(key, 10)
    std = 0.02
    params = {
        "norm1": jax.random.uniform(ks[0], (H,), jnp.float32, -1.0, 1.0),
        "norm2": jax.random.uniform(ks[1], (H,), jnp.float32, -1.0, 1.0),
        "wq": jax.random.normal(ks[2], (H, num_q_head * head_dim), jnp.float32) * std,
        "wk": jax.random.normal(ks[3], (H, num_kv_head * head_dim), jnp.float32) * std,
        "wv": jax.random.normal(ks[4], (H, num_kv_head * head_dim), jnp.float32) * std,
        "wo": jax.random.normal(ks[5], (num_q_head * head_dim, H), jnp.float32) * std,
        "w_gate": jax.random.normal(ks[6], (H, ffh), jnp.float32) * std,
        "w_up": jax.random.normal(ks[7], (H, ffh), jnp.float32) * std,
        "w_down": jax.random.normal(ks[8], (ffh, H), jnp.float32) * std,
    }
    x = jax.random.normal(ks[9], (B, S, H), jnp.float32)

    out = transformer_decoder_layer(
        x, params, num_q_head=num_q_head, num_kv_head=num_kv_head,
        head_dim=head_dim, causal=True)
    out = jax.block_until_ready(out)

    ref = reference_decoder_layer(
        x, params, num_q_head=num_q_head, num_kv_head=num_kv_head,
        head_dim=head_dim, causal=True)
    assert out.shape == x.shape and out.dtype == x.dtype
    assert not bool(jnp.any(jnp.isnan(out))), "NaNs in kernel output"
    max_err = float(jnp.max(jnp.abs(out - ref)))
    # bf16 q/k/v intermediates + approximate reciprocal => compare with relaxed tolerance.
    assert jnp.allclose(out, ref, atol=1e-2, rtol=1e-2), \
        f"mismatch vs reference (max abs err {max_err})"
    print("KERNEL_OK")
</pallas_src>

<mosaic_0001>
module attributes {stable_mosaic.version = 11 : i64} {
  func.func @_qkv_rope_kernel(%arg0: i32, %arg1: i32, %arg2: i32, %arg3: memref<1x256x128xf32, #tpu.memory_space<vmem>>, %arg4: memref<1x128xf32, #tpu.memory_space<vmem>>, %arg5: memref<256x128xf32, #tpu.memory_space<vmem>>, %arg6: memref<256x128xf32, #tpu.memory_space<vmem>>, %arg7: memref<256x256xf32, #tpu.memory_space<vmem>>, %arg8: memref<256x256xf32, #tpu.memory_space<vmem>>, %arg9: memref<256x256xf32, #tpu.memory_space<vmem>>, %arg10: memref<1x128x256xf32, #tpu.memory_space<vmem>>, %arg11: memref<1x128x128xf32, #tpu.memory_space<vmem>>, %arg12: memref<1x128x128xf32, #tpu.memory_space<vmem>>, %arg13: memref<1x2x256x128xbf16, #tpu.memory_space<vmem>>, %arg14: memref<1x1x256x128xbf16, #tpu.memory_space<vmem>>, %arg15: memref<1x1x256x128xbf16, #tpu.memory_space<vmem>>, %arg16: memref<256x128xf32, #tpu.memory_space<vmem>>) attributes {dimension_semantics = [#tpu.dimension_semantics<parallel>, #tpu.dimension_semantics<parallel>, #tpu.dimension_semantics<arbitrary>], iteration_bounds = array<i64: 2, 4, 2>, scalar_prefetch = 0 : i64, scratch_operands = 1 : i64, tpu.core_type = #tpu.core_type<tc>, window_params = [{transform_indices = @transform_0, window_bounds = array<i64: 1, 256, 128>}, {pipeline_mode = #tpu.pipeline_mode<synchronous>, transform_indices = @transform_1, window_bounds = array<i64: 1, 128>}, {transform_indices = @transform_2, window_bounds = array<i64: 256, 128>}, {transform_indices = @transform_3, window_bounds = array<i64: 256, 128>}, {transform_indices = @transform_4, window_bounds = array<i64: 256, 256>}, {transform_indices = @transform_5, window_bounds = array<i64: 256, 256>}, {transform_indices = @transform_6, window_bounds = array<i64: 256, 256>}, {transform_indices = @transform_7, window_bounds = array<i64: 1, 128, 256>}, {transform_indices = @transform_8, window_bounds = array<i64: 1, 128, 128>}, {transform_indices = @transform_9, window_bounds = array<i64: 1, 128, 128>}, {transform_indices = @transform_10, window_bounds = array<i64: 1, 2, 256, 128>}, {transform_indices = @transform_11, window_bounds = array<i64: 1, 1, 256, 128>}, {transform_indices = @transform_12, window_bounds = array<i64: 1, 1, 256, 128>}]} {
    %c0_i32 = arith.constant 0 : i32
    %0 = arith.cmpi eq, %arg2, %c0_i32 : i32
    %1 = arith.extui %0 : i1 to i32
    %c0_i32_0 = arith.constant 0 : i32
    %2 = arith.cmpi ne, %1, %c0_i32_0 : i32
    scf.if %2 {
      %c0_39 = arith.constant 0 : index
      %c0_40 = arith.constant 0 : index
      %c0_41 = arith.constant 0 : index
      %47 = vector.load %arg3[%c0_39, %c0_40, %c0_41] : memref<1x256x128xf32, #tpu.memory_space<vmem>>, vector<1x256x128xf32>
      %48 = vector.shape_cast %47 : vector<1x256x128xf32> to vector<256x128xf32>
      %49 = arith.mulf %48, %48 : vector<256x128xf32>
      %cst_42 = arith.constant dense<0.000000e+00> : vector<256xf32>
      %50 = vector.multi_reduction <add>, %49, %cst_42 [1] : vector<256x128xf32> to vector<256xf32>
      %51 = vector.shape_cast %50 : vector<256xf32> to vector<256x1xf32>
      %cst_43 = arith.constant 1.280000e+02 : f32
      %52 = vector.broadcast %cst_43 : f32 to vector<256x1xf32>
      %53 = arith.divf %51, %52 : vector<256x1xf32>
      %cst_44 = arith.constant 9.99999974E-6 : f32
      %54 = vector.broadcast %cst_44 : f32 to vector<256x1xf32>
      %55 = arith.addf %53, %54 : vector<256x1xf32>
      %56 = math.rsqrt %55 : vector<256x1xf32>
      %57 = vector.broadcast %56 : vector<256x1xf32> to vector<256x128xf32>
      %58 = arith.mulf %48, %57 : vector<256x128xf32>
      %c0_45 = arith.constant 0 : index
      %c0_46 = arith.constant 0 : index
      %59 = vector.load %arg4[%c0_45, %c0_46] : memref<1x128xf32, #tpu.memory_space<vmem>>, vector<1x128xf32>
      %60 = vector.broadcast %59 : vector<1x128xf32> to vector<256x128xf32>
      %61 = arith.mulf %58, %60 : vector<256x128xf32>
      %c0_47 = arith.constant 0 : index
      %c0_48 = arith.constant 0 : index
      %62 = vector.load %arg16[%c0_47, %c0_48] : memref<256x128xf32, #tpu.memory_space<vmem>>, vector<256x128xf32>
      tpu.vector_store %arg16[%c0_47, %c0_48], %61 {strides = array<i32>} : memref<256x128xf32, #tpu.memory_space<vmem>>, vector<256x128xf32>,
    } else {
    }
    %c0 = arith.constant 0 : index
    %c0_1 = arith.constant 0 : index
    %3 = vector.load %arg16[%c0, %c0_1] : memref<256x128xf32, #tpu.memory_space<vmem>>, vector<256x128xf32>
    %c0_2 = arith.constant 0 : index
    %c0_3 = arith.constant 0 : index
    %c0_4 = arith.constant 0 : index
    %4 = vector.load %arg10[%c0_2, %c0_3, %c0_4] : memref<1x128x256xf32, #tpu.memory_space<vmem>>, vector<1x128x256xf32>
    %5 = vector.shape_cast %4 : vector<1x128x256xf32> to vector<128x256xf32>
    %cst = arith.constant dense<0.000000e+00> : vector<256x256xf32>
    %6 = tpu.matmul %3, %5, %cst {dimension_numbers = #tpu.dot_dimension_numbers<[1], [0], [0], [1], [0, 0, 1, 1], [], []>} : vector<256x128xf32>, vector<128x256xf32>, vector<256x256xf32> -> vector<256x256xf32>
    %c0_5 = arith.constant 0 : index
    %c0_6 = arith.constant 0 : index
    %7 = vector.load %arg7[%c0_5, %c0_6] : memref<256x256xf32, #tpu.memory_space<vmem>>, vector<256x256xf32>
    %8 = arith.mulf %6, %7 : vector<256x256xf32>
    %c64_i32 = arith.constant 64 : i32
    %9 = tpu.dynamic_rotate %6 by %c64_i32 dim 1 : vector<256x256xf32>, i32 -> vector<256x256xf32>
    %c0_7 = arith.constant 0 : index
    %c0_8 = arith.constant 0 : index
    %10 = vector.load %arg8[%c0_7, %c0_8] : memref<256x256xf32, #tpu.memory_space<vmem>>, vector<256x256xf32>
    %11 = arith.mulf %9, %10 : vector<256x256xf32>
    %12 = arith.addf %8, %11 : vector<256x256xf32>
    %c192_i32 = arith.constant 192 : i32
    %13 = tpu.dynamic_rotate %6 by %c192_i32 dim 1 : vector<256x256xf32>, i32 -> vector<256x256xf32>
    %c0_9 = arith.constant 0 : index
    %c0_10 = arith.constant 0 : index
    %14 = vector.load %arg9[%c0_9, %c0_10] : memref<256x256xf32, #tpu.memory_space<vmem>>, vector<256x256xf32>
    %15 = arith.mulf %13, %14 : vector<256x256xf32>
    %16 = arith.addf %12, %15 : vector<256x256xf32>
    %17 = vector.extract_strided_slice %16 {offsets = [0, 0], sizes = [256, 128], strides = [1, 1]} : vector<256x256xf32> to vector<256x128xf32>
    %18 = arith.truncf %17 : vector<256x128xf32> to vector<256x128xbf16>
    %c0_11 = arith.constant 0 : index
    %c0_12 = arith.constant 0 : index
    %c0_13 = arith.constant 0 : index
    %c0_14 = arith.constant 0 : index
    %19 = vector.load %arg13[%c0_11, %c0_12, %c0_13, %c0_14] : memref<1x2x256x128xbf16, #tpu.memory_space<vmem>>, vector<1x1x256x128xbf16>
    %20 = vector.shape_cast %19 : vector<1x1x256x128xbf16> to vector<256x128xbf16>
    %21 = vector.shape_cast %18 : vector<256x128xbf16> to vector<1x1x256x128xbf16>
    tpu.vector_store %arg13[%c0_11, %c0_12, %c0_13, %c0_14], %21 {strides = array<i32>} : memref<1x2x256x128xbf16, #tpu.memory_space<vmem>>, vector<1x1x256x128xbf16>,
    %22 = vector.extract_strided_slice %16 {offsets = [0, 128], sizes = [256, 128], strides = [1, 1]} : vector<256x256xf32> to vector<256x128xf32>
    %23 = arith.truncf %22 : vector<256x128xf32> to vector<256x128xbf16>
    %c0_15 = arith.constant 0 : index
    %c1 = arith.constant 1 : index
    %c0_16 = arith.constant 0 : index
    %c0_17 = arith.constant 0 : index
    %24 = vector.load %arg13[%c0_15, %c1, %c0_16, %c0_17] : memref<1x2x256x128xbf16, #tpu.memory_space<vmem>>, vector<1x1x256x128xbf16>
    %25 = vector.shape_cast %24 : vector<1x1x256x128xbf16> to vector<256x128xbf16>
    %26 = vector.shape_cast %23 : vector<256x128xbf16> to vector<1x1x256x128xbf16>
    tpu.vector_store %arg13[%c0_15, %c1, %c0_16, %c0_17], %26 {strides = array<i32>} : memref<1x2x256x128xbf16, #tpu.memory_space<vmem>>, vector<1x1x256x128xbf16>,
    %c0_18 = arith.constant 0 : index
    %c0_19 = arith.constant 0 : index
    %c0_20 = arith.constant 0 : index
    %27 = vector.load %arg11[%c0_18, %c0_19, %c0_20] : memref<1x128x128xf32, #tpu.memory_space<vmem>>, vector<1x128x128xf32>
    %28 = vector.shape_cast %27 : vector<1x128x128xf32> to vector<128x128xf32>
    %cst_21 = arith.constant dense<0.000000e+00> : vector<256x128xf32>
    %29 = tpu.matmul %3, %28, %cst_21 {dimension_numbers = #tpu.dot_dimension_numbers<[1], [0], [0], [1], [0, 0, 1, 1], [], []>} : vector<256x128xf32>, vector<128x128xf32>, vector<256x128xf32> -> vector<256x128xf32>
    %c0_22 = arith.constant 0 : index
    %c0_23 = arith.constant 0 : index
    %30 = vector.load %arg5[%c0_22, %c0_23] : memref<256x128xf32, #tpu.memory_space<vmem>>, vector<256x128xf32>
    %31 = arith.mulf %29, %30 : vector<256x128xf32>
    %c64_i32_24 = arith.constant 64 : i32
    %32 = tpu.dynamic_rotate %29 by %c64_i32_24 dim 1 : vector<256x128xf32>, i32 -> vector<256x128xf32>
    %c0_25 = arith.constant 0 : index
    %c0_26 = arith.constant 0 : index
    %33 = vector.load %arg6[%c0_25, %c0_26] : memref<256x128xf32, #tpu.memory_space<vmem>>, vector<256x128xf32>
    %34 = arith.mulf %32, %33 : vector<256x128xf32>
    %35 = arith.addf %31, %34 : vector<256x128xf32>
    %36 = arith.truncf %35 : vector<256x128xf32> to vector<256x128xbf16>
    %c0_27 = arith.constant 0 : index
    %c0_28 = arith.constant 0 : index
    %c0_29 = arith.constant 0 : index
    %c0_30 = arith.constant 0 : index
    %37 = vector.load %arg14[%c0_27, %c0_28, %c0_29, %c0_30] : memref<1x1x256x128xbf16, #tpu.memory_space<vmem>>, vector<1x1x256x128xbf16>
    %38 = vector.shape_cast %37 : vector<1x1x256x128xbf16> to vector<256x128xbf16>
    %39 = vector.shape_cast %36 : vector<256x128xbf16> to vector<1x1x256x128xbf16>
    tpu.vector_store %arg14[%c0_27, %c0_28, %c0_29, %c0_30], %39 {strides = array<i32>} : memref<1x1x256x128xbf16, #tpu.memory_space<vmem>>, vector<1x1x256x128xbf16>,
    %c0_31 = arith.constant 0 : index
    %c0_32 = arith.constant 0 : index
    %c0_33 = arith.constant 0 : index
    %40 = vector.load %arg12[%c0_31, %c0_32, %c0_33] : memref<1x128x128xf32, #tpu.memory_space<vmem>>, vector<1x128x128xf32>
    %41 = vector.shape_cast %40 : vector<1x128x128xf32> to vector<128x128xf32>
    %cst_34 = arith.constant dense<0.000000e+00> : vector<256x128xf32>
    %42 = tpu.matmul %3, %41, %cst_34 {dimension_numbers = #tpu.dot_dimension_numbers<[1], [0], [0], [1], [0, 0, 1, 1], [], []>} : vector<256x128xf32>, vector<128x128xf32>, vector<256x128xf32> -> vector<256x128xf32>
    %43 = arith.truncf %42 : vector<256x128xf32> to vector<256x128xbf16>
    %c0_35 = arith.constant 0 : index
    %c0_36 = arith.constant 0 : index
    %c0_37 = arith.constant 0 : index
    %c0_38 = arith.constant 0 : index
    %44 = vector.load %arg15[%c0_35, %c0_36, %c0_37, %c0_38] : memref<1x1x256x128xbf16, #tpu.memory_space<vmem>>, vector<1x1x256x128xbf16>
    %45 = vector.shape_cast %44 : vector<1x1x256x128xbf16> to vector<256x128xbf16>
    %46 = vector.shape_cast %43 : vector<256x128xbf16> to vector<1x1x256x128xbf16>
    tpu.vector_store %arg15[%c0_35, %c0_36, %c0_37, %c0_38], %46 {strides = array<i32>} : memref<1x1x256x128xbf16, #tpu.memory_space<vmem>>, vector<1x1x256x128xbf16>,
    return
  }
  func.func @transform_0(%arg0: i32, %arg1: i32, %arg2: i32) -> (i32, i32, i32) {
    %c0_i32 = arith.constant 0 : i32
    %c0_i32_0 = arith.constant 0 : i32
    return %arg0, %arg1, %c0_i32 : i32, i32, i32
  }
  func.func @transform_1(%arg0: i32, %arg1: i32, %arg2: i32) -> (i32, i32) {
    %c0_i32 = arith.constant 0 : i32
    %c0_i32_0 = arith.constant 0 : i32
    %c0_i32_1 = arith.constant 0 : i32
    return %c0_i32, %c0_i32_0 : i32, i32
  }
  func.func @transform_2(%arg0: i32, %arg1: i32, %arg2: i32) -> (i32, i32) {
    %c0_i32 = arith.constant 0 : i32
    %c0_i32_0 = arith.constant 0 : i32
    return %arg1, %c0_i32 : i32, i32
  }
  func.func @transform_3(%arg0: i32, %arg1: i32, %arg2: i32) -> (i32, i32) {
    %c0_i32 = arith.constant 0 : i32
    %c0_i32_0 = arith.constant 0 : i32
    return %arg1, %c0_i32 : i32, i32
  }
  func.func @transform_4(%arg0: i32, %arg1: i32, %arg2: i32) -> (i32, i32) {
    %c0_i32 = arith.constant 0 : i32
    %c0_i32_0 = arith.constant 0 : i32
    return %arg1, %c0_i32 : i32, i32
  }
  func.func @transform_5(%arg0: i32, %arg1: i32, %arg2: i32) -> (i32, i32) {
    %c0_i32 = arith.constant 0 : i32
    %c0_i32_0 = arith.constant 0 : i32
    return %arg1, %c0_i32 : i32, i32
  }
  func.func @transform_6(%arg0: i32, %arg1: i32, %arg2: i32) -> (i32, i32) {
    %c0_i32 = arith.constant 0 : i32
    %c0_i32_0 = arith.constant 0 : i32
    return %arg1, %c0_i32 : i32, i32
  }
  func.func @transform_7(%arg0: i32, %arg1: i32, %arg2: i32) -> (i32, i32, i32) {
    %c0_i32 = arith.constant 0 : i32
    %c0_i32_0 = arith.constant 0 : i32
    %c0_i32_1 = arith.constant 0 : i32
    return %arg2, %c0_i32, %c0_i32_0 : i32, i32, i32
  }
  func.func @transform_8(%arg0: i32, %arg1: i32, %arg2: i32) -> (i32, i32, i32) {
    %c0_i32 = arith.constant 0 : i32
    %c0_i32_0 = arith.constant 0 : i32
    %c0_i32_1 = arith.constant 0 : i32
    return %arg2, %c0_i32, %c0_i32_0 : i32, i32, i32
  }
  func.func @transform_9(%arg0: i32, %arg1: i32, %arg2: i32) -> (i32, i32, i32) {
    %c0_i32 = arith.constant 0 : i32
    %c0_i32_0 = arith.constant 0 : i32
    %c0_i32_1 = arith.constant 0 : i32
    return %arg2, %c0_i32, %c0_i32_0 : i32, i32, i32
  }
  func.func @transform_10(%arg0: i32, %arg1: i32, %arg2: i32) -> (i32, i32, i32, i32) {
    %c0_i32 = arith.constant 0 : i32
    %c0_i32_0 = arith.constant 0 : i32
    return %arg0, %arg2, %arg1, %c0_i32 : i32, i32, i32, i32
  }
  func.func @transform_11(%arg0: i32, %arg1: i32, %arg2: i32) -> (i32, i32, i32, i32) {
    %c0_i32 = arith.constant 0 : i32
    %c0_i32_0 = arith.constant 0 : i32
    return %arg0, %arg2, %arg1, %c0_i32 : i32, i32, i32, i32
  }
  func.func @transform_12(%arg0: i32, %arg1: i32, %arg2: i32) -> (i32, i32, i32, i32) {
    %c0_i32 = arith.constant 0 : i32
    %c0_i32_0 = arith.constant 0 : i32
    return %arg0, %arg2, %arg1, %c0_i32 : i32, i32, i32, i32
  }
}

</mosaic_0001>

<llo_original>
// kernel: tpu_custom_call.1
$region0: #{tpu_custom_call.1}
  #allocation0 [shape = 'u32[]', space=smem, size = 0x4, offset = 0x4, fixed_abs, tag = 'smem constant byte address 0x4 - core index']
  #allocation1 [shape = 'u32[144,128]{1,0:T(1,128)}', space=vmem, size = 0x12000, scoped, tag = 'internal scratch']
  #allocation2 [shape = 'f32[256,128]{1,0:T(8,128)}', space=vmem, size = 0x20000, scoped, tag = 'scratch operand']
  #allocation20 [shape = 's32[]', space=sflag, size = 0x4, offset = 0, fixed_abs, tag = 'sflag constant byte address 0x0 - dummy sync flag']
  %s0 = inlined_call_operand.hbm [shape: f32[2,1024,128], index: 0, kind: input, shape index: {}]
  %s1 = inlined_call_operand.hbm [shape: f32[1,128], index: 1, kind: input, shape index: {}]
  %s2 = inlined_call_operand.hbm [shape: f32[1024,128], index: 2, kind: input, shape index: {}]
  %s3 = inlined_call_operand.hbm [shape: f32[1024,128], index: 3, kind: input, shape index: {}]
  %s4 = inlined_call_operand.hbm [shape: f32[1024,256], index: 4, kind: input, shape index: {}]
  %s5 = inlined_call_operand.hbm [shape: f32[1024,256], index: 5, kind: input, shape index: {}]
  %s6 = inlined_call_operand.hbm [shape: f32[1024,256], index: 6, kind: input, shape index: {}]
  %s7 = inlined_call_operand.hbm [shape: f32[2,128,256], index: 7, kind: input, shape index: {}]
  %s8 = inlined_call_operand.hbm [shape: f32[2,128,128], index: 8, kind: input, shape index: {}]
  %s9 = inlined_call_operand.hbm [shape: f32[2,128,128], index: 9, kind: input, shape index: {}]
  %s10 = inlined_call_operand.hbm [shape: bf16[2,4,1024,128], index: 10, kind: output, shape index: {0}]
  %s11 = inlined_call_operand.hbm [shape: bf16[2,2,1024,128], index: 11, kind: output, shape index: {1}]
  %s12 = inlined_call_operand.hbm [shape: bf16[2,2,1024,128], index: 12, kind: output, shape index: {2}]
  %13 = xla_tuple %s10, %s11, %s12
  %s14 = sld [smem:[#allocation0]]
  $region133: #{tpu_custom_call.1} parent=0
    _
  %s16 = ssub.s32 1, %s14
  %s17 = scalar_select 0, %s16, %s14
  $region1: #{tpu_custom_call.1} parent=0
    #allocation3 [shape = 'u8[262144]{0}', space=vmem, size = 0x40000, scoped, tag = 'input window, operand 0']
    #allocation4 [shape = 's32[2]{0}', space=sflag, size = 0x8, scoped, tag = 'scoped memory for tpu_custom_call.1']
    #allocation5 [shape = 's32[2]{0}', space=sflag, size = 0x8, scoped, tag = 'scoped memory for tpu_custom_call.1']
    #allocation6 [shape = 'u8[512]{0}', space=vmem, size = 0x400, scoped, tag = 'input window, operand 1, single buffered']
    #allocation7 [shape = 's32[1]{0}', space=sflag, size = 0x4, scoped, tag = 'scoped memory for tpu_custom_call.1']
    #allocation8 [shape = 'u8[262144]{0}', space=vmem, size = 0x40000, scoped, tag = 'input window, operand 2']
    #allocation9 [shape = 'u8[262144]{0}', space=vmem, size = 0x40000, scoped, tag = 'input window, operand 3']
    #allocation10 [shape = 'u8[524288]{0}', space=vmem, size = 0x80000, scoped, tag = 'input window, operand 4']
    #allocation11 [shape = 'u8[524288]{0}', space=vmem, size = 0x80000, scoped, tag = 'input window, operand 5']
    #allocation12 [shape = 'u8[524288]{0}', space=vmem, size = 0x80000, scoped, tag = 'input window, operand 6']
    #allocation13 [shape = 'u8[262144]{0}', space=vmem, size = 0x40000, scoped, tag = 'input window, operand 7']
    #allocation14 [shape = 'u8[131072]{0}', space=vmem, size = 0x20000, scoped, tag = 'input window, operand 8']
    #allocation15 [shape = 'u8[131072]{0}', space=vmem, size = 0x20000, scoped, tag = 'input window, operand 9']
    #allocation16 [shape = 'u8[262144]{0}', space=vmem, size = 0x40000, scoped, tag = 'output window, operand 0']
    #allocation17 [shape = 'u8[131072]{0}', space=vmem, size = 0x20000, scoped, tag = 'output window, operand 1']
    #allocation18 [shape = 's32[2]{0}', space=sflag, size = 0x8, scoped, tag = 'scoped memory for tpu_custom_call.1']
    #allocation19 [shape = 'u8[131072]{0}', space=vmem, size = 0x20000, scoped, tag = 'output window, operand 2']
    %18 = vsyncpa [#allocation4], 0
    %s19 = scalar_lea.sflag [#allocation4], 1
    %20 = vsyncpa %s19, 0
    %21 = vsyncpa [#allocation7], 0
    %22 = vsyncpa [#allocation5], 0
    %s23 = scalar_lea.sflag [#allocation5], 1
    %24 = vsyncpa %s23, 0
    %25 = vsyncpa [#allocation18], 0
    %s26 = scalar_lea.sflag [#allocation18], 1
    %27 = vsyncpa %s26, 0
    loop: start=0, step=1, limit=18
    $region2: #{tpu_custom_call.1} parent=1 // loop_pre_header
      _
    $region3: #{tpu_custom_call.1} parent=1 // loop_header
      %s29 = sphi 0, %s33
      %p30 = scmp.ge.s32.totalorder %s29, 18
      %s36 = sphi 0, %s55
      %s37 = sphi 0, %s51
      %s38 = sphi 0, %s47
      %s39 = sphi 0, %s36
      %s40 = sphi 0, %s37
      %s41 = sphi 0, %s38
      %s42 = sphi 0, %s39
      %s43 = sphi 0, %s40
      %s44 = sphi 0, %s41
      %s60 = sphi 0, %s62
      %s63 = sphi 0, %s60
      %s64 = sphi 0, %s63
      %s80 = sphi 0, %s64
      %s84 = sphi 0, %s84
      %s86 = sphi 0, %s84
      %s87 = sphi 0, %s86
      %s101 = sphi 0, %s87
      %s107 = sphi 0, %s109
      %s110 = sphi 0, %s107
      %s111 = sphi 0, %s110
      %s127 = sphi 0, %s111
      %s133 = sphi 0, %s135
      %s136 = sphi 0, %s133
      %s137 = sphi 0, %s136
      %s153 = sphi 0, %s137
      %s159 = sphi 0, %s161
      %s162 = sphi 0, %s159
      %s163 = sphi 0, %s162
      %s179 = sphi 0, %s163
      %s185 = sphi 0, %s187
      %s188 = sphi 0, %s185
      %s189 = sphi 0, %s188
      %s205 = sphi 0, %s189
      %s211 = sphi 0, %s213
      %s214 = sphi 0, %s211
      %s215 = sphi 0, %s214
      %s231 = sphi 0, %s215
      %s237 = sphi 0, %s239
      %s240 = sphi 0, %s237
      %s241 = sphi 0, %s240
      %s257 = sphi 0, %s241
      %s263 = sphi 0, %s265
      %s266 = sphi 0, %s263
      %s267 = sphi 0, %s266
      %s283 = sphi 0, %s267
      %s289 = sphi 0, %s291
      %s292 = sphi 0, %s289
      %s293 = sphi 0, %s292
      %s309 = sphi 0, %s293
      %s319 = sphi 0, %s321
      %s322 = sphi 0, %s319
      %s323 = sphi 0, %s322
      %s339 = sphi 0, %s323
      %s349 = sphi 0, %s351
      %s352 = sphi 0, %s349
      %s353 = sphi 0, %s352
      %s369 = sphi 0, %s353
      %s379 = sphi 0, %s381
      %s382 = sphi 0, %s379
      %s383 = sphi 0, %s382
      %s399 = sphi 0, %s383
    $region4: #{tpu_custom_call.1} parent=1 // loop_header_branch
      %32 = sbr.rel (%p30) target = $region8
    $region5: #{tpu_custom_call.1} parent=1 // loop_body
      %s34 = ssub.s32 %s29, 1
      %s35 = ssub.s32 %s29, 2
      %s45 = sadd.s32 1, %s38
      %p46 = scmp.ge.s32.totalorder %s45, 2
      %s47 = scalar_select %p46, 0, %s45
      %s48 = sadd.s32 1, %s37
      %s49 = scalar_select %p46, %s48, %s37
      %p50 = scmp.ge.s32.totalorder %s49, 4
      %s51 = scalar_select %p50, 0, %s49
      %s52 = sadd.s32 1, %s36
      %s53 = scalar_select %p50, %s52, %s36
      %p54 = scmp.ge.s32.totalorder %s53, 2
      %s55 = scalar_select %p54, 0, %s53
      %s56 = ssub.s32 %s36, %s55
      %s57 = ssub.s32 %s37, %s51
      %s58 = sor.u32 %s56, %s57
      %p59 = scmp.eq.s32.totalorder %s58, 0
      %s61 = sadd.s32 %s60, 1
      %s62 = scalar_select %p59, %s60, %s61
      %p65 = pneg %p59
      %p66 = scmp.eq.s32.totalorder %s29, 15
      %p67 = por %p65, %p66
      %p68 = scmp.ne.s32.totalorder %s60, %s63
      %p69 = scmp.eq.s32.totalorder %s29, 0
      %p70 = por %p68, %p69
      %p71 = scmp.ne.s32.totalorder %s60, %s63
      %p72 = scmp.eq.s32.totalorder %s34, 15
      %p73 = por %p71, %p72
      %p74 = scmp.ne.s32.totalorder %s63, %s64
      %p75 = scmp.eq.s32.totalorder %s34, 0
      %p76 = por %p74, %p75
      %p77 = scmp.ne.s32.totalorder %s63, %s64
      %p78 = scmp.eq.s32.totalorder %s35, 15
      %p79 = por %p77, %p78
      %p81 = scmp.ne.s32.totalorder %s64, %s80
      %p82 = scmp.eq.s32.totalorder %s35, 0
      %p83 = por %p81, %p82
      %s85 = sadd.s32 %s84, 1
      %p88 = scmp.eq.s32.totalorder %s29, 15
      %p89 = scmp.ne.s32.totalorder %s84, %s86
      %p90 = scmp.eq.s32.totalorder %s29, 0
      %p91 = por %p89, %p90
      %p92 = scmp.ne.s32.totalorder %s84, %s86
      %p93 = scmp.eq.s32.totalorder %s34, 15
      %p94 = por %p92, %p93
      %p95 = scmp.ne.s32.totalorder %s86, %s87
      %p96 = scmp.eq.s32.totalorder %s34, 0
      %p97 = por %p95, %p96
      %p98 = scmp.ne.s32.totalorder %s86, %s87
      %p99 = scmp.eq.s32.totalorder %s35, 15
      %p100 = por %p98, %p99
      %p102 = scmp.ne.s32.totalorder %s87, %s101
      %p103 = scmp.eq.s32.totalorder %s35, 0
      %p104 = por %p102, %p103
      %s105 = ssub.s32 %s37, %s51
      %p106 = scmp.eq.s32.totalorder %s105, 0
      %s108 = sadd.s32 %s107, 1
      %s109 = scalar_select %p106, %s107, %s108
      %p112 = pneg %p106
      %p113 = scmp.eq.s32.totalorder %s29, 15
      %p114 = por %p112, %p113
      %p115 = scmp.ne.s32.totalorder %s107, %s110
      %p116 = scmp.eq.s32.totalorder %s29, 0
      %p117 = por %p115, %p116
      %p118 = scmp.ne.s32.totalorder %s107, %s110
      %p119 = scmp.eq.s32.totalorder %s34, 15
      %p120 = por %p118, %p119
      %p121 = scmp.ne.s32.totalorder %s110, %s111
      %p122 = scmp.eq.s32.totalorder %s34, 0
      %p123 = por %p121, %p122
      %p124 = scmp.ne.s32.totalorder %s110, %s111
      %p125 = scmp.eq.s32.totalorder %s35, 15
      %p126 = por %p124, %p125
      %p128 = scmp.ne.s32.totalorder %s111, %s127
      %p129 = scmp.eq.s32.totalorder %s35, 0
      %p130 = por %p128, %p129
      %s131 = ssub.s32 %s37, %s51
      %p132 = scmp.eq.s32.totalorder %s131, 0
      %s134 = sadd.s32 %s133, 1
      %s135 = scalar_select %p132, %s133, %s134
      %p138 = pneg %p132
      %p139 = scmp.eq.s32.totalorder %s29, 15
      %p140 = por %p138, %p139
      %p141 = scmp.ne.s32.totalorder %s133, %s136
      %p142 = scmp.eq.s32.totalorder %s29, 0
      %p143 = por %p141, %p142
      %p144 = scmp.ne.s32.totalorder %s133, %s136
      %p145 = scmp.eq.s32.totalorder %s34, 15
      %p146 = por %p144, %p145
      %p147 = scmp.ne.s32.totalorder %s136, %s137
      %p148 = scmp.eq.s32.totalorder %s34, 0
      %p149 = por %p147, %p148
      %p150 = scmp.ne.s32.totalorder %s136, %s137
      %p151 = scmp.eq.s32.totalorder %s35, 15
      %p152 = por %p150, %p151
      %p154 = scmp.ne.s32.totalorder %s137, %s153
      %p155 = scmp.eq.s32.totalorder %s35, 0
      %p156 = por %p154, %p155
      %s157 = ssub.s32 %s37, %s51
      %p158 = scmp.eq.s32.totalorder %s157, 0
      %s160 = sadd.s32 %s159, 1
      %s161 = scalar_select %p158, %s159, %s160
      %p164 = pneg %p158
      %p165 = scmp.eq.s32.totalorder %s29, 15
      %p166 = por %p164, %p165
      %p167 = scmp.ne.s32.totalorder %s159, %s162
      %p168 = scmp.eq.s32.totalorder %s29, 0
      %p169 = por %p167, %p168
      %p170 = scmp.ne.s32.totalorder %s159, %s162
      %p171 = scmp.eq.s32.totalorder %s34, 15
      %p172 = por %p170, %p171
      %p173 = scmp.ne.s32.totalorder %s162, %s163
      %p174 = scmp.eq.s32.totalorder %s34, 0
      %p175 = por %p173, %p174
      %p176 = scmp.ne.s32.totalorder %s162, %s163
      %p177 = scmp.eq.s32.totalorder %s35, 15
      %p178 = por %p176, %p177
      %p180 = scmp.ne.s32.totalorder %s163, %s179
      %p181 = scmp.eq.s32.totalorder %s35, 0
      %p182 = por %p180, %p181
      %s183 = ssub.s32 %s37, %s51
      %p184 = scmp.eq.s32.totalorder %s183, 0
      %s186 = sadd.s32 %s185, 1
      %s187 = scalar_select %p184, %s185, %s186
      %p190 = pneg %p184
      %p191 = scmp.eq.s32.totalorder %s29, 15
      %p192 = por %p190, %p191
      %p193 = scmp.ne.s32.totalorder %s185, %s188
      %p194 = scmp.eq.s32.totalorder %s29, 0
      %p195 = por %p193, %p194
      %p196 = scmp.ne.s32.totalorder %s185, %s188
      %p197 = scmp.eq.s32.totalorder %s34, 15
      %p198 = por %p196, %p197
      %p199 = scmp.ne.s32.totalorder %s188, %s189
      %p200 = scmp.eq.s32.totalorder %s34, 0
      %p201 = por %p199, %p200
      %p202 = scmp.ne.s32.totalorder %s188, %s189
      %p203 = scmp.eq.s32.totalorder %s35, 15
      %p204 = por %p202, %p203
      %p206 = scmp.ne.s32.totalorder %s189, %s205
      %p207 = scmp.eq.s32.totalorder %s35, 0
      %p208 = por %p206, %p207
      %s209 = ssub.s32 %s37, %s51
      %p210 = scmp.eq.s32.totalorder %s209, 0
      %s212 = sadd.s32 %s211, 1
      %s213 = scalar_select %p210, %s211, %s212
      %p216 = pneg %p210
      %p217 = scmp.eq.s32.totalorder %s29, 15
      %p218 = por %p216, %p217
      %p219 = scmp.ne.s32.totalorder %s211, %s214
      %p220 = scmp.eq.s32.totalorder %s29, 0
      %p221 = por %p219, %p220
      %p222 = scmp.ne.s32.totalorder %s211, %s214
      %p223 = scmp.eq.s32.totalorder %s34, 15
      %p224 = por %p222, %p223
      %p225 = scmp.ne.s32.totalorder %s214, %s215
      %p226 = scmp.eq.s32.totalorder %s34, 0
      %p227 = por %p225, %p226
      %p228 = scmp.ne.s32.totalorder %s214, %s215
      %p229 = scmp.eq.s32.totalorder %s35, 15
      %p230 = por %p228, %p229
      %p232 = scmp.ne.s32.totalorder %s215, %s231
      %p233 = scmp.eq.s32.totalorder %s35, 0
      %p234 = por %p232, %p233
      %s235 = ssub.s32 %s38, %s47
      %p236 = scmp.eq.s32.totalorder %s235, 0
      %s238 = sadd.s32 %s237, 1
      %s239 = scalar_select %p236, %s237, %s238
      %p242 = pneg %p236
      %p243 = scmp.eq.s32.totalorder %s29, 15
      %p244 = por %p242, %p243
      %p245 = scmp.ne.s32.totalorder %s237, %s240
      %p246 = scmp.eq.s32.totalorder %s29, 0
      %p247 = por %p245, %p246
      %p248 = scmp.ne.s32.totalorder %s237, %s240
      %p249 = scmp.eq.s32.totalorder %s34, 15
      %p250 = por %p248, %p249
      %p251 = scmp.ne.s32.totalorder %s240, %s241
      %p252 = scmp.eq.s32.totalorder %s34, 0
      %p253 = por %p251, %p252
      %p254 = scmp.ne.s32.totalorder %s240, %s241
      %p255 = scmp.eq.s32.totalorder %s35, 15
      %p256 = por %p254, %p255
      %p258 = scmp.ne.s32.totalorder %s241, %s257
      %p259 = scmp.eq.s32.totalorder %s35, 0
      %p260 = por %p258, %p259
      %s261 = ssub.s32 %s38, %s47
      %p262 = scmp.eq.s32.totalorder %s261, 0
      %s264 = sadd.s32 %s263, 1
      %s265 = scalar_select %p262, %s263, %s264
      %p268 = pneg %p262
      %p269 = scmp.eq.s32.totalorder %s29, 15
      %p270 = por %p268, %p269
      %p271 = scmp.ne.s32.totalorder %s263, %s266
      %p272 = scmp.eq.s32.totalorder %s29, 0
      %p273 = por %p271, %p272
      %p274 = scmp.ne.s32.totalorder %s263, %s266
      %p275 = scmp.eq.s32.totalorder %s34, 15
      %p276 = por %p274, %p275
      %p277 = scmp.ne.s32.totalorder %s266, %s267
      %p278 = scmp.eq.s32.totalorder %s34, 0
      %p279 = por %p277, %p278
      %p280 = scmp.ne.s32.totalorder %s266, %s267
      %p281 = scmp.eq.s32.totalorder %s35, 15
      %p282 = por %p280, %p281
      %p284 = scmp.ne.s32.totalorder %s267, %s283
      %p285 = scmp.eq.s32.totalorder %s35, 0
      %p286 = por %p284, %p285
      %s287 = ssub.s32 %s38, %s47
      %p288 = scmp.eq.s32.totalorder %s287, 0
      %s290 = sadd.s32 %s289, 1
      %s291 = scalar_select %p288, %s289, %s290
      %p294 = pneg %p288
      %p295 = scmp.eq.s32.totalorder %s29, 15
      %p296 = por %p294, %p295
      %p297 = scmp.ne.s32.totalorder %s289, %s292
      %p298 = scmp.eq.s32.totalorder %s29, 0
      %p299 = por %p297, %p298
      %p300 = scmp.ne.s32.totalorder %s289, %s292
      %p301 = scmp.eq.s32.totalorder %s34, 15
      %p302 = por %p300, %p301
      %p303 = scmp.ne.s32.totalorder %s292, %s293
      %p304 = scmp.eq.s32.totalorder %s34, 0
      %p305 = por %p303, %p304
      %p306 = scmp.ne.s32.totalorder %s292, %s293
      %p307 = scmp.eq.s32.totalorder %s35, 15
      %p308 = por %p306, %p307
      %p310 = scmp.ne.s32.totalorder %s293, %s309
      %p311 = scmp.eq.s32.totalorder %s35, 0
      %p312 = por %p310, %p311
      %s313 = ssub.s32 %s36, %s55
      %s314 = ssub.s32 %s38, %s47
      %s315 = sor.u32 %s313, %s314
      %s316 = ssub.s32 %s37, %s51
      %s317 = sor.u32 %s315, %s316
      %p318 = scmp.eq.s32.totalorder %s317, 0
      %s320 = sadd.s32 %s319, 1
      %s321 = scalar_select %p318, %s319, %s320
      %p324 = pneg %p318
      %p325 = scmp.eq.s32.totalorder %s29, 15
      %p326 = por %p324, %p325
      %p327 = scmp.ne.s32.totalorder %s319, %s322
      %p328 = scmp.eq.s32.totalorder %s29, 0
      %p329 = por %p327, %p328
      %p330 = scmp.ne.s32.totalorder %s319, %s322
      %p331 = scmp.eq.s32.totalorder %s34, 15
      %p332 = por %p330, %p331
      %p333 = scmp.ne.s32.totalorder %s322, %s323
      %p334 = scmp.eq.s32.totalorder %s34, 0
      %p335 = por %p333, %p334
      %p336 = scmp.ne.s32.totalorder %s322, %s323
      %p337 = scmp.eq.s32.totalorder %s35, 15
      %p338 = por %p336, %p337
      %p340 = scmp.ne.s32.totalorder %s323, %s339
      %p341 = scmp.eq.s32.totalorder %s35, 0
      %p342 = por %p340, %p341
      %s343 = ssub.s32 %s36, %s55
      %s344 = ssub.s32 %s38, %s47
      %s345 = sor.u32 %s343, %s344
      %s346 = ssub.s32 %s37, %s51
      %s347 = sor.u32 %s345, %s346
      %p348 = scmp.eq.s32.totalorder %s347, 0
      %s350 = sadd.s32 %s349, 1
      %s351 = scalar_select %p348, %s349, %s350
      %p354 = pneg %p348
      %p355 = scmp.eq.s32.totalorder %s29, 15
      %p356 = por %p354, %p355
      %p357 = scmp.ne.s32.totalorder %s349, %s352
      %p358 = scmp.eq.s32.totalorder %s29, 0
      %p359 = por %p357, %p358
      %p360 = scmp.ne.s32.totalorder %s349, %s352
      %p361 = scmp.eq.s32.totalorder %s34, 15
      %p362 = por %p360, %p361
      %p363 = scmp.ne.s32.totalorder %s352, %s353
      %p364 = scmp.eq.s32.totalorder %s34, 0
      %p365 = por %p363, %p364
      %p366 = scmp.ne.s32.totalorder %s352, %s353
      %p367 = scmp.eq.s32.totalorder %s35, 15
      %p368 = por %p366, %p367
      %p370 = scmp.ne.s32.totalorder %s353, %s369
      %p371 = scmp.eq.s32.totalorder %s35, 0
      %p372 = por %p370, %p371
      %s373 = ssub.s32 %s36, %s55
      %s374 = ssub.s32 %s38, %s47
      %s375 = sor.u32 %s373, %s374
      %s376 = ssub.s32 %s37, %s51
      %s377 = sor.u32 %s375, %s376
      %p378 = scmp.eq.s32.totalorder %s377, 0
      %s380 = sadd.s32 %s379, 1
      %s381 = scalar_select %p378, %s379, %s380
      %p384 = pneg %p378
      %p385 = scmp.eq.s32.totalorder %s29, 15
      %p386 = por %p384, %p385
      %p387 = scmp.ne.s32.totalorder %s379, %s382
      %p388 = scmp.eq.s32.totalorder %s29, 0
      %p389 = por %p387, %p388
      %p390 = scmp.ne.s32.totalorder %s379, %s382
      %p391 = scmp.eq.s32.totalorder %s34, 15
      %p392 = por %p390, %p391
      %p393 = scmp.ne.s32.totalorder %s382, %s383
      %p394 = scmp.eq.s32.totalorder %s34, 0
      %p395 = por %p393, %p394
      %p396 = scmp.ne.s32.totalorder %s382, %s383
      %p397 = scmp.eq.s32.totalorder %s35, 15
      %p398 = por %p396, %p397
      %p400 = scmp.ne.s32.totalorder %s383, %s399
      %p401 = scmp.eq.s32.totalorder %s35, 0
      %p402 = por %p400, %p401
      %p403 = scmp.le.s32.totalorder 1, %s29
      %p404 = scmp.lt.s32.totalorder %s29, 17
      %p405 = pnand %p403, %p404
      %p406 = pneg %p405
      // Predicated region
      $region9: #{tpu_custom_call.1} parent=5 // pred_check
        _
      $region10: #{tpu_custom_call.1} parent=5 // pred_check_branch
        %408 = sbr.rel (%p405) target = $region12
      $region11: #{tpu_custom_call.1} parent=5 // pred_region
        %s409 = ssub.s32 %s29, 1
        // Predicated region
        $region13: #{tpu_custom_call.1} parent=11 // pred_check
          %p410 = pneg %p97
        $region14: #{tpu_custom_call.1} parent=11 // pred_check_branch
          %412 = sbr.rel (%p410) target = $region16
        $region15: #{tpu_custom_call.1} parent=11 // pred_region
          %s414 = ssub.s32 16, 16
          %415 = vsyncadd [#allocation7], %s414
          %s417 = sshll.u32 [#allocation6], 4
          %s418 = int_to_ptr.vmem [resolvable:$true] %s417
          %420 = dma.hbm_to_vmem [thread:$0]  %s1, 16, %s418, [#allocation7]
        $region16: #{tpu_custom_call.1} parent=11 // pred_fallthru
          _
      $region12: #{tpu_custom_call.1} parent=5 // pred_fallthru
        _
      %p421 = scmp.lt.s32.totalorder %s29, 16
      // Predicated region
      $region17: #{tpu_custom_call.1} parent=5 // pred_check
        %p422 = pneg %p421
      $region18: #{tpu_custom_call.1} parent=5 // pred_check_branch
        %424 = sbr.rel (%p422) target = $region20
      $region19: #{tpu_custom_call.1} parent=5 // pred_region
        // Predicated region
        $region21: #{tpu_custom_call.1} parent=19 // pred_check
          %p425 = pneg %p70
        $region22: #{tpu_custom_call.1} parent=19 // pred_check_branch
          %427 = sbr.rel (%p425) target = $region24
        $region23: #{tpu_custom_call.1} parent=19 // pred_region
          %s428 = sand.u32 %s29, 1
          %s429 = scalar_lea.sflag [#allocation4], %s428
          %s430 = sand.u32 %s60, 1
          %s431 = smul.addr %s430, 256
          %s432 = scalar_lea.vmem [#allocation3], %s431
          %s433 = smul.u32 32, %s37
          %s435 = ssub.s32 4096, 4096
          %436 = vsyncadd %s429, %s435
          %s437 = smul.addr %s36, 128
          %s438 = sadd.s32 %s433, %s437
          %s439 = smul.addr %s438, 128
          %s440 = scalar_lea.hbm %s0, %s439
          %s441 = sshll.u32 %s432, 4
          %s442 = int_to_ptr.vmem [resolvable:$true] %s441
          %447 = dma.hbm_to_vmem [thread:$0]  %s440, 4096, %s442, %s429, 128, 128, 8
        $region24: #{tpu_custom_call.1} parent=19 // pred_fallthru
          _
        // Predicated region
        $region25: #{tpu_custom_call.1} parent=19 // pred_check
          %p448 = pneg %p117
        $region26: #{tpu_custom_call.1} parent=19 // pred_check_branch
          %450 = sbr.rel (%p448) target = $region28
        $region27: #{tpu_custom_call.1} parent=19 // pred_region
          %s451 = sand.u32 %s29, 1
          %s452 = scalar_lea.sflag [#allocation4], %s451
          %s453 = sand.u32 %s107, 1
          %s454 = smul.addr %s453, 256
          %s455 = scalar_lea.vmem [#allocation8], %s454
          %s456 = smul.u32 32, %s37
          %s458 = ssub.s32 4096, 4096
          %459 = vsyncadd %s452, %s458
          %s460 = smul.addr %s456, 128
          %s461 = scalar_lea.hbm %s2, %s460
          %s462 = sshll.u32 %s455, 4
          %s463 = int_to_ptr.vmem [resolvable:$true] %s462
          %468 = dma.hbm_to_vmem [thread:$0]  %s461, 4096, %s463, %s452, 128, 128, 8
        $region28: #{tpu_custom_call.1} parent=19 // pred_fallthru
          _
        // Predicated region
        $region29: #{tpu_custom_call.1} parent=19 // pred_check
          %p469 = pneg %p143
        $region30: #{tpu_custom_call.1} parent=19 // pred_check_branch
          %471 = sbr.rel (%p469) target = $region32
        $region31: #{tpu_custom_call.1} parent=19 // pred_region
          %s472 = sand.u32 %s29, 1
          %s473 = scalar_lea.sflag [#allocation4], %s472
          %s474 = sand.u32 %s133, 1
          %s475 = smul.addr %s474, 256
          %s476 = scalar_lea.vmem [#allocation9], %s475
          %s477 = smul.u32 32, %s37
          %s479 = ssub.s32 4096, 4096
          %480 = vsyncadd %s473, %s479
          %s481 = smul.addr %s477, 128
          %s482 = scalar_lea.hbm %s3, %s481
          %s483 = sshll.u32 %s476, 4
          %s484 = int_to_ptr.vmem [resolvable:$true] %s483
          %489 = dma.hbm_to_vmem [thread:$0]  %s482, 4096, %s484, %s473, 128, 128, 8
        $region32: #{tpu_custom_call.1} parent=19 // pred_fallthru
          _
        // Predicated region
        $region33: #{tpu_custom_call.1} parent=19 // pred_check
          %p490 = pneg %p169
        $region34: #{tpu_custom_call.1} parent=19 // pred_check_branch
          %492 = sbr.rel (%p490) target = $region36
        $region35: #{tpu_custom_call.1} parent=19 // pred_region
          %s493 = sand.u32 %s29, 1
          %s494 = scalar_lea.sflag [#allocation4], %s493
          %s495 = sand.u32 %s159, 1
          %s496 = smul.addr %s495, 512
          %s497 = scalar_lea.vmem [#allocation10], %s496
          %s498 = smul.u32 32, %s37
          %s500 = ssub.s32 8192, 8192
          %501 = vsyncadd %s494, %s500
          %s502 = smul.addr %s498, 2
          %s503 = smul.addr %s502, 128
          %s504 = scalar_lea.hbm %s4, %s503
          %s505 = sshll.u32 %s497, 4
          %s506 = int_to_ptr.vmem [resolvable:$true] %s505
          %511 = dma.hbm_to_vmem [thread:$0]  %s504, 8192, %s506, %s494, 256, 256, 16
        $region36: #{tpu_custom_call.1} parent=19 // pred_fallthru
          _
        // Predicated region
        $region37: #{tpu_custom_call.1} parent=19 // pred_check
          %p512 = pneg %p195
        $region38: #{tpu_custom_call.1} parent=19 // pred_check_branch
          %514 = sbr.rel (%p512) target = $region40
        $region39: #{tpu_custom_call.1} parent=19 // pred_region
          %s515 = sand.u32 %s29, 1
          %s516 = scalar_lea.sflag [#allocation4], %s515
          %s517 = sand.u32 %s185, 1
          %s518 = smul.addr %s517, 512
          %s519 = scalar_lea.vmem [#allocation11], %s518
          %s520 = smul.u32 32, %s37
          %s522 = ssub.s32 8192, 8192
          %523 = vsyncadd %s516, %s522
          %s524 = smul.addr %s520, 2
          %s525 = smul.addr %s524, 128
          %s526 = scalar_lea.hbm %s5, %s525
          %s527 = sshll.u32 %s519, 4
          %s528 = int_to_ptr.vmem [resolvable:$true] %s527
          %533 = dma.hbm_to_vmem [thread:$0]  %s526, 8192, %s528, %s516, 256, 256, 16
        $region40: #{tpu_custom_call.1} parent=19 // pred_fallthru
          _
        // Predicated region
        $region41: #{tpu_custom_call.1} parent=19 // pred_check
          %p534 = pneg %p221
        $region42: #{tpu_custom_call.1} parent=19 // pred_check_branch
          %536 = sbr.rel (%p534) target = $region44
        $region43: #{tpu_custom_call.1} parent=19 // pred_region
          %s537 = sand.u32 %s29, 1
          %s538 = scalar_lea.sflag [#allocation4], %s537
          %s539 = sand.u32 %s211, 1
          %s540 = smul.addr %s539, 512
          %s541 = scalar_lea.vmem [#allocation12], %s540
          %s542 = smul.u32 32, %s37
          %s544 = ssub.s32 8192, 8192
          %545 = vsyncadd %s538, %s544
          %s546 = smul.addr %s542, 2
          %s547 = smul.addr %s546, 128
          %s548 = scalar_lea.hbm %s6, %s547
          %s549 = sshll.u32 %s541, 4
          %s550 = int_to_ptr.vmem [resolvable:$true] %s549
          %555 = dma.hbm_to_vmem [thread:$0]  %s548, 8192, %s550, %s538, 256, 256, 16
        $region44: #{tpu_custom_call.1} parent=19 // pred_fallthru
          _
        // Predicated region
        $region45: #{tpu_custom_call.1} parent=19 // pred_check
          %p556 = pneg %p247
        $region46: #{tpu_custom_call.1} parent=19 // pred_check_branch
          %558 = sbr.rel (%p556) target = $region48
        $region47: #{tpu_custom_call.1} parent=19 // pred_region
          %s559 = sand.u32 %s29, 1
          %s560 = scalar_lea.sflag [#allocation4], %s559
          %s561 = sand.u32 %s237, 1
          %s562 = smul.addr %s561, 256
          %s563 = scalar_lea.vmem [#allocation13], %s562
          %s565 = ssub.s32 4096, 4096
          %566 = vsyncadd %s560, %s565
          %s567 = smul.addr %s38, 32
          %s568 = smul.addr %s567, 128
          %s569 = scalar_lea.hbm %s7, %s568
          %s570 = sshll.u32 %s563, 4
          %s571 = int_to_ptr.vmem [resolvable:$true] %s570
          %576 = dma.hbm_to_vmem [thread:$0]  %s569, 4096, %s571, %s560, 256, 256, 16
        $region48: #{tpu_custom_call.1} parent=19 // pred_fallthru
          _
        // Predicated region
        $region49: #{tpu_custom_call.1} parent=19 // pred_check
          %p577 = pneg %p273
        $region50: #{tpu_custom_call.1} parent=19 // pred_check_branch
          %579 = sbr.rel (%p577) target = $region52
        $region51: #{tpu_custom_call.1} parent=19 // pred_region
          %s580 = sand.u32 %s29, 1
          %s581 = scalar_lea.sflag [#allocation4], %s580
          %s582 = sand.u32 %s263, 1
          %s583 = smul.addr %s582, 128
          %s584 = scalar_lea.vmem [#allocation14], %s583
          %s586 = ssub.s32 2048, 2048
          %587 = vsyncadd %s581, %s586
          %s588 = smul.addr %s38, 16
          %s589 = smul.addr %s588, 128
          %s590 = scalar_lea.hbm %s8, %s589
          %s591 = sshll.u32 %s584, 4
          %s592 = int_to_ptr.vmem [resolvable:$true] %s591
          %597 = dma.hbm_to_vmem [thread:$0]  %s590, 2048, %s592, %s581, 128, 128, 8
        $region52: #{tpu_custom_call.1} parent=19 // pred_fallthru
          _
        // Predicated region
        $region53: #{tpu_custom_call.1} parent=19 // pred_check
          %p598 = pneg %p299
        $region54: #{tpu_custom_call.1} parent=19 // pred_check_branch
          %600 = sbr.rel (%p598) target = $region56
        $region55: #{tpu_custom_call.1} parent=19 // pred_region
          %s601 = sand.u32 %s29, 1
          %s602 = scalar_lea.sflag [#allocation4], %s601
          %s603 = sand.u32 %s289, 1
          %s604 = smul.addr %s603, 128
          %s605 = scalar_lea.vmem [#allocation15], %s604
          %s607 = ssub.s32 2048, 2048
          %608 = vsyncadd %s602, %s607
          %s609 = smul.addr %s38, 16
          %s610 = smul.addr %s609, 128
          %s611 = scalar_lea.hbm %s9, %s610
          %s612 = sshll.u32 %s605, 4
          %s613 = int_to_ptr.vmem [resolvable:$true] %s612
          %618 = dma.hbm_to_vmem [thread:$0]  %s611, 2048, %s613, %s602, 128, 128, 8
        $region56: #{tpu_custom_call.1} parent=19 // pred_fallthru
          _
      $region20: #{tpu_custom_call.1} parent=5 // pred_fallthru
        _
      %p619 = scmp.le.s32.totalorder 1, %s29
      %p620 = scmp.lt.s32.totalorder %s29, 17
      %p621 = pnand %p619, %p620
      %p622 = pneg %p621
      // Predicated region
      $region57: #{tpu_custom_call.1} parent=5 // pred_check
        _
      $region58: #{tpu_custom_call.1} parent=5 // pred_check_branch
        %624 = sbr.rel (%p621) target = $region60
      $region59: #{tpu_custom_call.1} parent=5 // pred_region
        %s625 = ssub.s32 %s29, 1
        %s626 = sand.u32 %s34, 1
        %s627 = scalar_lea.sflag [#allocation4], %s626
        %s628 = sand.u32 %s63, 1
        %s629 = smul.addr %s628, 256
        %s630 = scalar_lea.vmem [#allocation3], %s629
        // Predicated region
        $region61: #{tpu_custom_call.1} parent=59 // pred_check
          %p631 = pneg %p76
        $region62: #{tpu_custom_call.1} parent=59 // pred_check_branch
          %633 = sbr.rel (%p631) target = $region64
        $region63: #{tpu_custom_call.1} parent=59 // pred_region
          %634 = dma.done %s627, 4096
        $region64: #{tpu_custom_call.1} parent=59 // pred_fallthru
          _
        // Predicated region
        $region65: #{tpu_custom_call.1} parent=59 // pred_check
          %p635 = pneg %p97
        $region66: #{tpu_custom_call.1} parent=59 // pred_check_branch
          %637 = sbr.rel (%p635) target = $region68
        $region67: #{tpu_custom_call.1} parent=59 // pred_region
          %638 = dma.done [#allocation7], 16
        $region68: #{tpu_custom_call.1} parent=59 // pred_fallthru
          _
        %s639 = sand.u32 %s34, 1
        %s640 = scalar_lea.sflag [#allocation4], %s639
        %s641 = sand.u32 %s110, 1
        %s642 = smul.addr %s641, 256
        %s643 = scalar_lea.vmem [#allocation8], %s642
        // Predicated region
        $region69: #{tpu_custom_call.1} parent=59 // pred_check
          %p644 = pneg %p123
        $region70: #{tpu_custom_call.1} parent=59 // pred_check_branch
          %646 = sbr.rel (%p644) target = $region72
        $region71: #{tpu_custom_call.1} parent=59 // pred_region
          %647 = dma.done %s640, 4096
        $region72: #{tpu_custom_call.1} parent=59 // pred_fallthru
          _
        %s648 = sand.u32 %s34, 1
        %s649 = scalar_lea.sflag [#allocation4], %s648
        %s650 = sand.u32 %s136, 1
        %s651 = smul.addr %s650, 256
        %s652 = scalar_lea.vmem [#allocation9], %s651
        // Predicated region
        $region73: #{tpu_custom_call.1} parent=59 // pred_check
          %p653 = pneg %p149
        $region74: #{tpu_custom_call.1} parent=59 // pred_check_branch
          %655 = sbr.rel (%p653) target = $region76
        $region75: #{tpu_custom_call.1} parent=59 // pred_region
          %656 = dma.done %s649, 4096
        $region76: #{tpu_custom_call.1} parent=59 // pred_fallthru
          _
        %s657 = sand.u32 %s34, 1
        %s658 = scalar_lea.sflag [#allocation4], %s657
        %s659 = sand.u32 %s162, 1
        %s660 = smul.addr %s659, 512
        %s661 = scalar_lea.vmem [#allocation10], %s660
        // Predicated region
        $region77: #{tpu_custom_call.1} parent=59 // pred_check
          %p662 = pneg %p175
        $region78: #{tpu_custom_call.1} parent=59 // pred_check_branch
          %664 = sbr.rel (%p662) target = $region80
        $region79: #{tpu_custom_call.1} parent=59 // pred_region
          %665 = dma.done %s658, 8192
        $region80: #{tpu_custom_call.1} parent=59 // pred_fallthru
          _
        %s666 = sand.u32 %s34, 1
        %s667 = scalar_lea.sflag [#allocation4], %s666
        %s668 = sand.u32 %s188, 1
        %s669 = smul.addr %s668, 512
        %s670 = scalar_lea.vmem [#allocation11], %s669
        // Predicated region
        $region81: #{tpu_custom_call.1} parent=59 // pred_check
          %p671 = pneg %p201
        $region82: #{tpu_custom_call.1} parent=59 // pred_check_branch
          %673 = sbr.rel (%p671) target = $region84
        $region83: #{tpu_custom_call.1} parent=59 // pred_region
          %674 = dma.done %s667, 8192
        $region84: #{tpu_custom_call.1} parent=59 // pred_fallthru
          _
        %s675 = sand.u32 %s34, 1
        %s676 = scalar_lea.sflag [#allocation4], %s675
        %s677 = sand.u32 %s214, 1
        %s678 = smul.addr %s677, 512
        %s679 = scalar_lea.vmem [#allocation12], %s678
        // Predicated region
        $region85: #{tpu_custom_call.1} parent=59 // pred_check
          %p680 = pneg %p227
        $region86: #{tpu_custom_call.1} parent=59 // pred_check_branch
          %682 = sbr.rel (%p680) target = $region88
        $region87: #{tpu_custom_call.1} parent=59 // pred_region
          %683 = dma.done %s676, 8192
        $region88: #{tpu_custom_call.1} parent=59 // pred_fallthru
          _
        %s684 = sand.u32 %s34, 1
        %s685 = scalar_lea.sflag [#allocation4], %s684
        %s686 = sand.u32 %s240, 1
        %s687 = smul.addr %s686, 256
        %s688 = scalar_lea.vmem [#allocation13], %s687
        // Predicated region
        $region89: #{tpu_custom_call.1} parent=59 // pred_check
          %p689 = pneg %p253
        $region90: #{tpu_custom_call.1} parent=59 // pred_check_branch
          %691 = sbr.rel (%p689) target = $region92
        $region91: #{tpu_custom_call.1} parent=59 // pred_region
          %692 = dma.done %s685, 4096
        $region92: #{tpu_custom_call.1} parent=59 // pred_fallthru
          _
        %s693 = sand.u32 %s34, 1
        %s694 = scalar_lea.sflag [#allocation4], %s693
        %s695 = sand.u32 %s266, 1
        %s696 = smul.addr %s695, 128
        %s697 = scalar_lea.vmem [#allocation14], %s696
        // Predicated region
        $region93: #{tpu_custom_call.1} parent=59 // pred_check
          %p698 = pneg %p279
        $region94: #{tpu_custom_call.1} parent=59 // pred_check_branch
          %700 = sbr.rel (%p698) target = $region96
        $region95: #{tpu_custom_call.1} parent=59 // pred_region
          %701 = dma.done %s694, 2048
        $region96: #{tpu_custom_call.1} parent=59 // pred_fallthru
          _
        %s702 = sand.u32 %s34, 1
        %s703 = scalar_lea.sflag [#allocation4], %s702
        %s704 = sand.u32 %s292, 1
        %s705 = smul.addr %s704, 128
        %s706 = scalar_lea.vmem [#allocation15], %s705
        // Predicated region
        $region97: #{tpu_custom_call.1} parent=59 // pred_check
          %p707 = pneg %p305
        $region98: #{tpu_custom_call.1} parent=59 // pred_check_branch
          %709 = sbr.rel (%p707) target = $region100
        $region99: #{tpu_custom_call.1} parent=59 // pred_region
          %710 = dma.done %s703, 2048
        $region100: #{tpu_custom_call.1} parent=59 // pred_fallthru
          _
        %s711 = sand.u32 %s34, 1
        %s712 = scalar_lea.sflag [#allocation4], %s711
        %s713 = sand.u32 %s63, 1
        %s714 = smul.addr %s713, 256
        %s715 = scalar_lea.vmem [#allocation3], %s714
        %p716 = pneg %p76
        %p717 = pneg %p73
        %p718 = pneg %p97
        %p719 = pneg %p94
        %s720 = sand.u32 %s34, 1
        %s721 = scalar_lea.sflag [#allocation4], %s720
        %s722 = sand.u32 %s110, 1
        %s723 = smul.addr %s722, 256
        %s724 = scalar_lea.vmem [#allocation8], %s723
        %p725 = pneg %p123
        %p726 = pneg %p120
        %s727 = sand.u32 %s34, 1
        %s728 = scalar_lea.sflag [#allocation4], %s727
        %s729 = sand.u32 %s136, 1
        %s730 = smul.addr %s729, 256
        %s731 = scalar_lea.vmem [#allocation9], %s730
        %p732 = pneg %p149
        %p733 = pneg %p146
        %s734 = sand.u32 %s34, 1
        %s735 = scalar_lea.sflag [#allocation4], %s734
        %s736 = sand.u32 %s162, 1
        %s737 = smul.addr %s736, 512
        %s738 = scalar_lea.vmem [#allocation10], %s737
        %p739 = pneg %p175
        %p740 = pneg %p172
        %s741 = sand.u32 %s34, 1
        %s742 = scalar_lea.sflag [#allocation4], %s741
        %s743 = sand.u32 %s188, 1
        %s744 = smul.addr %s743, 512
        %s745 = scalar_lea.vmem [#allocation11], %s744
        %p746 = pneg %p201
        %p747 = pneg %p198
        %s748 = sand.u32 %s34, 1
        %s749 = scalar_lea.sflag [#allocation4], %s748
        %s750 = sand.u32 %s214, 1
        %s751 = smul.addr %s750, 512
        %s752 = scalar_lea.vmem [#allocation12], %s751
        %p753 = pneg %p227
        %p754 = pneg %p224
        %s755 = sand.u32 %s34, 1
        %s756 = scalar_lea.sflag [#allocation4], %s755
        %s757 = sand.u32 %s240, 1
        %s758 = smul.addr %s757, 256
        %s759 = scalar_lea.vmem [#allocation13], %s758
        %p760 = pneg %p253
        %p761 = pneg %p250
        %s762 = sand.u32 %s34, 1
        %s763 = scalar_lea.sflag [#allocation4], %s762
        %s764 = sand.u32 %s266, 1
        %s765 = smul.addr %s764, 128
        %s766 = scalar_lea.vmem [#allocation14], %s765
        %p767 = pneg %p279
        %p768 = pneg %p276
        %s769 = sand.u32 %s34, 1
        %s770 = scalar_lea.sflag [#allocation4], %s769
        %s771 = sand.u32 %s292, 1
        %s772 = smul.addr %s771, 128
        %s773 = scalar_lea.vmem [#allocation15], %s772
        %p774 = pneg %p305
        %p775 = pneg %p302
        %p776 = pneg %p335
        %p777 = pneg %p332
        %s778 = sand.u32 %s322, 1
        %s779 = scalar_lea.sflag [#allocation5], %s778
        %s780 = sand.u32 %s322, 1
        %s781 = smul.addr %s780, 256
        %s782 = scalar_lea.vmem [#allocation16], %s781
        %p783 = pneg %p365
        %p784 = pneg %p362
        %s785 = sand.u32 %s34, 1
        %s786 = scalar_lea.sflag [#allocation18], %s785
        %s787 = sand.u32 %s352, 1
        %s788 = smul.addr %s787, 128
        %s789 = scalar_lea.vmem [#allocation17], %s788
        %p790 = pneg %p395
        %p791 = pneg %p392
        %s792 = sand.u32 %s34, 1
        %s793 = scalar_lea.sflag [#allocation18], %s792
        %s794 = sand.u32 %s382, 1
        %s795 = smul.addr %s794, 128
        %s796 = scalar_lea.vmem [#allocation19], %s795
        %s797 = smul.u32 32, %s40
        %s798 = smul.u32 32, %s40
        %s799 = smul.u32 32, %s40
        %s800 = smul.u32 32, %s40
        %s801 = smul.u32 32, %s40
        %s802 = smul.u32 32, %s40
        %s803 = smul.u32 2, %s41
        %s804 = smul.u32 32, %s40
        %s805 = smul.u32 32, %s40
        %s806 = smul.u32 32, %s40
        %p807 = scmp.eq.s32.totalorder %s41, 0
        // Predicated region
        $region101: #{tpu_custom_call.1} parent=59 // pred_check
          %p808 = pneg %p807
        $region102: #{tpu_custom_call.1} parent=59 // pred_check_branch
          %810 = sbr.rel (%p808) target = $region104
        $region103: #{tpu_custom_call.1} parent=59 // pred_region
          %v811 = vld [vmem:[%s630] sm:$0xff]
          %v812 = vld [vmem:[%s630 + $0x8] sm:$0xff]
          %v813 = vld [vmem:[%s630 + $0x10] sm:$0xff]
          %v814 = vld [vmem:[%s630 + $0x18] sm:$0xff]
          %v815 = vld [vmem:[%s630 + $0x20] sm:$0xff]
          %v816 = vld [vmem:[%s630 + $0x28] sm:$0xff]
          %v817 = vld [vmem:[%s630 + $0x30] sm:$0xff]
          %v818 = vld [vmem:[%s630 + $0x38] sm:$0xff]
          %v819 = vld [vmem:[%s630 + $0x40] sm:$0xff]
          %v820 = vld [vmem:[%s630 + $0x48] sm:$0xff]
          %v821 = vld [vmem:[%s630 + $0x50] sm:$0xff]
          %v822 = vld [vmem:[%s630 + $0x58] sm:$0xff]
          %v823 = vld [vmem:[%s630 + $0x60] sm:$0xff]
          %v824 = vld [vmem:[%s630 + $0x68] sm:$0xff]
          %v825 = vld [vmem:[%s630 + $0x70] sm:$0xff]
          %v826 = vld [vmem:[%s630 + $0x78] sm:$0xff]
          %v827 = vld [vmem:[%s630 + $0x80] sm:$0xff]
          %v828 = vld [vmem:[%s630 + $0x88] sm:$0xff]
          %v829 = vld [vmem:[%s630 + $0x90] sm:$0xff]
          %v830 = vld [vmem:[%s630 + $0x98] sm:$0xff]
          %v831 = vld [vmem:[%s630 + $0xa0] sm:$0xff]
          %v832 = vld [vmem:[%s630 + $0xa8] sm:$0xff]
          %v833 = vld [vmem:[%s630 + $0xb0] sm:$0xff]
          %v834 = vld [vmem:[%s630 + $0xb8] sm:$0xff]
          %v835 = vld [vmem:[%s630 + $0xc0] sm:$0xff]
          %v836 = vld [vmem:[%s630 + $0xc8] sm:$0xff]
          %v837 = vld [vmem:[%s630 + $0xd0] sm:$0xff]
          %v838 = vld [vmem:[%s630 + $0xd8] sm:$0xff]
          %v839 = vld [vmem:[%s630 + $0xe0] sm:$0xff]
          %v840 = vld [vmem:[%s630 + $0xe8] sm:$0xff]
          %v841 = vld [vmem:[%s630 + $0xf0] sm:$0xff]
          %v842 = vld [vmem:[%s630 + $0xf8] sm:$0xff]
          %v843 = vmul.f32 %v811, %v811
          %v844 = vmul.f32 %v812, %v812
          %v845 = vmul.f32 %v813, %v813
          %v846 = vmul.f32 %v814, %v814
          %v847 = vmul.f32 %v815, %v815
          %v848 = vmul.f32 %v816, %v816
          %v849 = vmul.f32 %v817, %v817
          %v850 = vmul.f32 %v818, %v818
          %v851 = vmul.f32 %v819, %v819
          %v852 = vmul.f32 %v820, %v820
          %v853 = vmul.f32 %v821, %v821
          %v854 = vmul.f32 %v822, %v822
          %v855 = vmul.f32 %v823, %v823
          %v856 = vmul.f32 %v824, %v824
          %v857 = vmul.f32 %v825, %v825
          %v858 = vmul.f32 %v826, %v826
          %v859 = vmul.f32 %v827, %v827
          %v860 = vmul.f32 %v828, %v828
          %v861 = vmul.f32 %v829, %v829
          %v862 = vmul.f32 %v830, %v830
          %v863 = vmul.f32 %v831, %v831
          %v864 = vmul.f32 %v832, %v832
          %v865 = vmul.f32 %v833, %v833
          %v866 = vmul.f32 %v834, %v834
          %v867 = vmul.f32 %v835, %v835
          %v868 = vmul.f32 %v836, %v836
          %v869 = vmul.f32 %v837, %v837
          %v870 = vmul.f32 %v838, %v838
          %v871 = vmul.f32 %v839, %v839
          %v872 = vmul.f32 %v840, %v840
          %v873 = vmul.f32 %v841, %v841
          %v874 = vmul.f32 %v842, %v842
          %875 = vadd.xlane.f32.xlu0 %v843
          %v876 = vpop.xlane.xlu0 %875
          %877 = vadd.xlane.f32.xlu0 %v844
          %v878 = vpop.xlane.xlu0 %877
          %879 = vadd.xlane.f32.xlu0 %v845
          %v880 = vpop.xlane.xlu0 %879
          %881 = vadd.xlane.f32.xlu0 %v846
          %v882 = vpop.xlane.xlu0 %881
          %883 = vadd.xlane.f32.xlu0 %v847
          %v884 = vpop.xlane.xlu0 %883
          %885 = vadd.xlane.f32.xlu0 %v848
          %v886 = vpop.xlane.xlu0 %885
          %887 = vadd.xlane.f32.xlu0 %v849
          %v888 = vpop.xlane.xlu0 %887
          %889 = vadd.xlane.f32.xlu0 %v850
          %v890 = vpop.xlane.xlu0 %889
          %891 = vadd.xlane.f32.xlu0 %v851
          %v892 = vpop.xlane.xlu0 %891
          %893 = vadd.xlane.f32.xlu0 %v852
          %v894 = vpop.xlane.xlu0 %893
          %895 = vadd.xlane.f32.xlu0 %v853
          %v896 = vpop.xlane.xlu0 %895
          %897 = vadd.xlane.f32.xlu0 %v854
          %v898 = vpop.xlane.xlu0 %897
          %899 = vadd.xlane.f32.xlu0 %v855
          %v900 = vpop.xlane.xlu0 %899
          %901 = vadd.xlane.f32.xlu0 %v856
          %v902 = vpop.xlane.xlu0 %901
          %903 = vadd.xlane.f32.xlu0 %v857
          %v904 = vpop.xlane.xlu0 %903
          %905 = vadd.xlane.f32.xlu0 %v858
          %v906 = vpop.xlane.xlu0 %905
          %907 = vadd.xlane.f32.xlu0 %v859
          %v908 = vpop.xlane.xlu0 %907
          %909 = vadd.xlane.f32.xlu0 %v860
          %v910 = vpop.xlane.xlu0 %909
          %911 = vadd.xlane.f32.xlu0 %v861
          %v912 = vpop.xlane.xlu0 %911
          %913 = vadd.xlane.f32.xlu0 %v862
          %v914 = vpop.xlane.xlu0 %913
          %915 = vadd.xlane.f32.xlu0 %v863
          %v916 = vpop.xlane.xlu0 %915
          %917 = vadd.xlane.f32.xlu0 %v864
          %v918 = vpop.xlane.xlu0 %917
          %919 = vadd.xlane.f32.xlu0 %v865
          %v920 = vpop.xlane.xlu0 %919
          %921 = vadd.xlane.f32.xlu0 %v866
          %v922 = vpop.xlane.xlu0 %921
          %923 = vadd.xlane.f32.xlu0 %v867
          %v924 = vpop.xlane.xlu0 %923
          %925 = vadd.xlane.f32.xlu0 %v868
          %v926 = vpop.xlane.xlu0 %925
          %927 = vadd.xlane.f32.xlu0 %v869
          %v928 = vpop.xlane.xlu0 %927
          %929 = vadd.xlane.f32.xlu0 %v870
          %v930 = vpop.xlane.xlu0 %929
          %931 = vadd.xlane.f32.xlu0 %v871
          %v932 = vpop.xlane.xlu0 %931
          %933 = vadd.xlane.f32.xlu0 %v872
          %v934 = vpop.xlane.xlu0 %933
          %935 = vadd.xlane.f32.xlu0 %v873
          %v936 = vpop.xlane.xlu0 %935
          %937 = vadd.xlane.f32.xlu0 %v874
          %v938 = vpop.xlane.xlu0 %937
          %v939 = vrcp.pop 128.0
          %v940 = vmul.f32 %v876, %v939
          %v941 = vmul.f32 %v878, %v939
          %v942 = vmul.f32 %v880, %v939
          %v943 = vmul.f32 %v882, %v939
          %v944 = vmul.f32 %v884, %v939
          %v945 = vmul.f32 %v886, %v939
          %v946 = vmul.f32 %v888, %v939
          %v947 = vmul.f32 %v890, %v939
          %v948 = vmul.f32 %v892, %v939
          %v949 = vmul.f32 %v894, %v939
          %v950 = vmul.f32 %v896, %v939
          %v951 = vmul.f32 %v898, %v939
          %v952 = vmul.f32 %v900, %v939
          %v953 = vmul.f32 %v902, %v939
          %v954 = vmul.f32 %v904, %v939
          %v955 = vmul.f32 %v906, %v939
          %v956 = vmul.f32 %v908, %v939
          %v957 = vmul.f32 %v910, %v939
          %v958 = vmul.f32 %v912, %v939
          %v959 = vmul.f32 %v914, %v939
          %v960 = vmul.f32 %v916, %v939
          %v961 = vmul.f32 %v918, %v939
          %v962 = vmul.f32 %v920, %v939
          %v963 = vmul.f32 %v922, %v939
          %v964 = vmul.f32 %v924, %v939
          %v965 = vmul.f32 %v926, %v939
          %v966 = vmul.f32 %v928, %v939
          %v967 = vmul.f32 %v930, %v939
          %v968 = vmul.f32 %v932, %v939
          %v969 = vmul.f32 %v934, %v939
          %v970 = vmul.f32 %v936, %v939
          %v971 = vmul.f32 %v938, %v939
          %v972 = vadd.f32 %v940, 1e-05
          %v973 = vadd.f32 %v941, 1e-05
          %v974 = vadd.f32 %v942, 1e-05
          %v975 = vadd.f32 %v943, 1e-05
          %v976 = vadd.f32 %v944, 1e-05
          %v977 = vadd.f32 %v945, 1e-05
          %v978 = vadd.f32 %v946, 1e-05
          %v979 = vadd.f32 %v947, 1e-05
          %v980 = vadd.f32 %v948, 1e-05
          %v981 = vadd.f32 %v949, 1e-05
          %v982 = vadd.f32 %v950, 1e-05
          %v983 = vadd.f32 %v951, 1e-05
          %v984 = vadd.f32 %v952, 1e-05
          %v985 = vadd.f32 %v953, 1e-05
          %v986 = vadd.f32 %v954, 1e-05
          %v987 = vadd.f32 %v955, 1e-05
          %v988 = vadd.f32 %v956, 1e-05
          %v989 = vadd.f32 %v957, 1e-05
          %v990 = vadd.f32 %v958, 1e-05
          %v991 = vadd.f32 %v959, 1e-05
          %v992 = vadd.f32 %v960, 1e-05
          %v993 = vadd.f32 %v961, 1e-05
          %v994 = vadd.f32 %v962, 1e-05
          %v995 = vadd.f32 %v963, 1e-05
          %v996 = vadd.f32 %v964, 1e-05
          %v997 = vadd.f32 %v965, 1e-05
          %v998 = vadd.f32 %v966, 1e-05
          %v999 = vadd.f32 %v967, 1e-05
          %v1000 = vadd.f32 %v968, 1e-05
          %v1001 = vadd.f32 %v969, 1e-05
          %v1002 = vadd.f32 %v970, 1e-05
          %v1003 = vadd.f32 %v971, 1e-05
          %v1004 = vrsqrt.pop %v972
          %v1005 = vrsqrt.pop %v973
          %v1006 = vrsqrt.pop %v974
          %v1007 = vrsqrt.pop %v975
          %v1008 = vrsqrt.pop %v976
          %v1009 = vrsqrt.pop %v977
          %v1010 = vrsqrt.pop %v978
          %v1011 = vrsqrt.pop %v979
          %v1012 = vrsqrt.pop %v980
          %v1013 = vrsqrt.pop %v981
          %v1014 = vrsqrt.pop %v982
          %v1015 = vrsqrt.pop %v983
          %v1016 = vrsqrt.pop %v984
          %v1017 = vrsqrt.pop %v985
          %v1018 = vrsqrt.pop %v986
          %v1019 = vrsqrt.pop %v987
          %v1020 = vrsqrt.pop %v988
          %v1021 = vrsqrt.pop %v989
          %v1022 = vrsqrt.pop %v990
          %v1023 = vrsqrt.pop %v991
          %v1024 = vrsqrt.pop %v992
          %v1025 = vrsqrt.pop %v993
          %v1026 = vrsqrt.pop %v994
          %v1027 = vrsqrt.pop %v995
          %v1028 = vrsqrt.pop %v996
          %v1029 = vrsqrt.pop %v997
          %v1030 = vrsqrt.pop %v998
          %v1031 = vrsqrt.pop %v999
          %v1032 = vrsqrt.pop %v1000
          %v1033 = vrsqrt.pop %v1001
          %v1034 = vrsqrt.pop %v1002
          %v1035 = vrsqrt.pop %v1003
          %v1036 = vmul.f32 %v811, %v1004
          %v1037 = vmul.f32 %v812, %v1005
          %v1038 = vmul.f32 %v813, %v1006
          %v1039 = vmul.f32 %v814, %v1007
          %v1040 = vmul.f32 %v815, %v1008
          %v1041 = vmul.f32 %v816, %v1009
          %v1042 = vmul.f32 %v817, %v1010
          %v1043 = vmul.f32 %v818, %v1011
          %v1044 = vmul.f32 %v819, %v1012
          %v1045 = vmul.f32 %v820, %v1013
          %v1046 = vmul.f32 %v821, %v1014
          %v1047 = vmul.f32 %v822, %v1015
          %v1048 = vmul.f32 %v823, %v1016
          %v1049 = vmul.f32 %v824, %v1017
          %v1050 = vmul.f32 %v825, %v1018
          %v1051 = vmul.f32 %v826, %v1019
          %v1052 = vmul.f32 %v827, %v1020
          %v1053 = vmul.f32 %v828, %v1021
          %v1054 = vmul.f32 %v829, %v1022
          %v1055 = vmul.f32 %v830, %v1023
          %v1056 = vmul.f32 %v831, %v1024
          %v1057 = vmul.f32 %v832, %v1025
          %v1058 = vmul.f32 %v833, %v1026
          %v1059 = vmul.f32 %v834, %v1027
          %v1060 = vmul.f32 %v835, %v1028
          %v1061 = vmul.f32 %v836, %v1029
          %v1062 = vmul.f32 %v837, %v1030
          %v1063 = vmul.f32 %v838, %v1031
          %v1064 = vmul.f32 %v839, %v1032
          %v1065 = vmul.f32 %v840, %v1033
          %v1066 = vmul.f32 %v841, %v1034
          %v1067 = vmul.f32 %v842, %v1035
          %v1068 = vld [vmem:[#allocation6] sm:$0x1]
          %v1070 = vlaneseq
          %v1071 = vshrl.u32 %v1070, 7
          %v1072 = vsub.s32 0, %v1071
          %v1073 = vrot.slane %v1068, %v1072
          %v1075 = vmul.f32 %v1036, %v1073
          %v1076 = vmul.f32 %v1037, %v1073
          %v1077 = vmul.f32 %v1038, %v1073
          %v1078 = vmul.f32 %v1039, %v1073
          %v1079 = vmul.f32 %v1040, %v1073
          %v1080 = vmul.f32 %v1041, %v1073
          %v1081 = vmul.f32 %v1042, %v1073
          %v1082 = vmul.f32 %v1043, %v1073
          %v1083 = vmul.f32 %v1044, %v1073
          %v1084 = vmul.f32 %v1045, %v1073
          %v1085 = vmul.f32 %v1046, %v1073
          %v1086 = vmul.f32 %v1047, %v1073
          %v1087 = vmul.f32 %v1048, %v1073
          %v1088 = vmul.f32 %v1049, %v1073
          %v1089 = vmul.f32 %v1050, %v1073
          %v1090 = vmul.f32 %v1051, %v1073
          %v1091 = vmul.f32 %v1052, %v1073
          %v1092 = vmul.f32 %v1053, %v1073
          %v1093 = vmul.f32 %v1054, %v1073
          %v1094 = vmul.f32 %v1055, %v1073
          %v1095 = vmul.f32 %v1056, %v1073
          %v1096 = vmul.f32 %v1057, %v1073
          %v1097 = vmul.f32 %v1058, %v1073
          %v1098 = vmul.f32 %v1059, %v1073
          %v1099 = vmul.f32 %v1060, %v1073
          %v1100 = vmul.f32 %v1061, %v1073
          %v1101 = vmul.f32 %v1062, %v1073
          %v1102 = vmul.f32 %v1063, %v1073
          %v1103 = vmul.f32 %v1064, %v1073
          %v1104 = vmul.f32 %v1065, %v1073
          %v1105 = vmul.f32 %v1066, %v1073
          %v1106 = vmul.f32 %v1067, %v1073
          %1107 = vst [vmem:[#allocation2] sm:$0xff] %v1075
          %1108 = vst [vmem:[#allocation2 + $0x8] sm:$0xff] %v1076
          %1109 = vst [vmem:[#allocation2 + $0x10] sm:$0xff] %v1077
          %1110 = vst [vmem:[#allocation2 + $0x18] sm:$0xff] %v1078
          %1111 = vst [vmem:[#allocation2 + $0x20] sm:$0xff] %v1079
          %1112 = vst [vmem:[#allocation2 + $0x28] sm:$0xff] %v1080
          %1113 = vst [vmem:[#allocation2 + $0x30] sm:$0xff] %v1081
          %1114 = vst [vmem:[#allocation2 + $0x38] sm:$0xff] %v1082
          %1115 = vst [vmem:[#allocation2 + $0x40] sm:$0xff] %v1083
          %1116 = vst [vmem:[#allocation2 + $0x48] sm:$0xff] %v1084
          %1117 = vst [vmem:[#allocation2 + $0x50] sm:$0xff] %v1085
          %1118 = vst [vmem:[#allocation2 + $0x58] sm:$0xff] %v1086
          %1119 = vst [vmem:[#allocation2 + $0x60] sm:$0xff] %v1087
          %1120 = vst [vmem:[#allocation2 + $0x68] sm:$0xff] %v1088
          %1121 = vst [vmem:[#allocation2 + $0x70] sm:$0xff] %v1089
          %1122 = vst [vmem:[#allocation2 + $0x78] sm:$0xff] %v1090
          %1123 = vst [vmem:[#allocation2 + $0x80] sm:$0xff] %v1091
          %1124 = vst [vmem:[#allocation2 + $0x88] sm:$0xff] %v1092
          %1125 = vst [vmem:[#allocation2 + $0x90] sm:$0xff] %v1093
          %1126 = vst [vmem:[#allocation2 + $0x98] sm:$0xff] %v1094
          %1127 = vst [vmem:[#allocation2 + $0xa0] sm:$0xff] %v1095
          %1128 = vst [vmem:[#allocation2 + $0xa8] sm:$0xff] %v1096
          %1129 = vst [vmem:[#allocation2 + $0xb0] sm:$0xff] %v1097
          %1130 = vst [vmem:[#allocation2 + $0xb8] sm:$0xff] %v1098
          %1131 = vst [vmem:[#allocation2 + $0xc0] sm:$0xff] %v1099
          %1132 = vst [vmem:[#allocation2 + $0xc8] sm:$0xff] %v1100
          %1133 = vst [vmem:[#allocation2 + $0xd0] sm:$0xff] %v1101
          %1134 = vst [vmem:[#allocation2 + $0xd8] sm:$0xff] %v1102
          %1135 = vst [vmem:[#allocation2 + $0xe0] sm:$0xff] %v1103
          %1136 = vst [vmem:[#allocation2 + $0xe8] sm:$0xff] %v1104
          %1137 = vst [vmem:[#allocation2 + $0xf0] sm:$0xff] %v1105
          %1138 = vst [vmem:[#allocation2 + $0xf8] sm:$0xff] %v1106
        $region104: #{tpu_custom_call.1} parent=59 // pred_fallthru
          _
        %v1139 = vld [vmem:[#allocation2] sm:$0xff]
        %v1140 = vld [vmem:[#allocation2 + $0x8] sm:$0xff]
        %v1141 = vld [vmem:[#allocation2 + $0x10] sm:$0xff]
        %v1142 = vld [vmem:[#allocation2 + $0x18] sm:$0xff]
        %v1143 = vld [vmem:[#allocation2 + $0x20] sm:$0xff]
        %v1144 = vld [vmem:[#allocation2 + $0x28] sm:$0xff]
        %v1145 = vld [vmem:[#allocation2 + $0x30] sm:$0xff]
        %v1146 = vld [vmem:[#allocation2 + $0x38] sm:$0xff]
        %v1147 = vld [vmem:[#allocation2 + $0x40] sm:$0xff]
        %v1148 = vld [vmem:[#allocation2 + $0x48] sm:$0xff]
        %v1149 = vld [vmem:[#allocation2 + $0x50] sm:$0xff]
        %v1150 = vld [vmem:[#allocation2 + $0x58] sm:$0xff]
        %v1151 = vld [vmem:[#allocation2 + $0x60] sm:$0xff]
        %v1152 = vld [vmem:[#allocation2 + $0x68] sm:$0xff]
        %v1153 = vld [vmem:[#allocation2 + $0x70] sm:$0xff]
        %v1154 = vld [vmem:[#allocation2 + $0x78] sm:$0xff]
        %v1155 = vld [vmem:[#allocation2 + $0x80] sm:$0xff]
        %v1156 = vld [vmem:[#allocation2 + $0x88] sm:$0xff]
        %v1157 = vld [vmem:[#allocation2 + $0x90] sm:$0xff]
        %v1158 = vld [vmem:[#allocation2 + $0x98] sm:$0xff]
        %v1159 = vld [vmem:[#allocation2 + $0xa0] sm:$0xff]
        %v1160 = vld [vmem:[#allocation2 + $0xa8] sm:$0xff]
        %v1161 = vld [vmem:[#allocation2 + $0xb0] sm:$0xff]
        %v1162 = vld [vmem:[#allocation2 + $0xb8] sm:$0xff]
        %v1163 = vld [vmem:[#allocation2 + $0xc0] sm:$0xff]
        %v1164 = vld [vmem:[#allocation2 + $0xc8] sm:$0xff]
        %v1165 = vld [vmem:[#allocation2 + $0xd0] sm:$0xff]
        %v1166 = vld [vmem:[#allocation2 + $0xd8] sm:$0xff]
        %v1167 = vld [vmem:[#allocation2 + $0xe0] sm:$0xff]
        %v1168 = vld [vmem:[#allocation2 + $0xe8] sm:$0xff]
        %v1169 = vld [vmem:[#allocation2 + $0xf0] sm:$0xff]
        %v1170 = vld [vmem:[#allocation2 + $0xf8] sm:$0xff]
        %v1171 = vld [vmem:[%s688] sm:$0xff]
        %v1172 = vld [vmem:[%s688 + $0x8] sm:$0xff]
        %v1173 = vld [vmem:[%s688 + $0x10] sm:$0xff]
        %v1174 = vld [vmem:[%s688 + $0x18] sm:$0xff]
        %v1175 = vld [vmem:[%s688 + $0x20] sm:$0xff]
        %v1176 = vld [vmem:[%s688 + $0x28] sm:$0xff]
        %v1177 = vld [vmem:[%s688 + $0x30] sm:$0xff]
        %v1178 = vld [vmem:[%s688 + $0x38] sm:$0xff]
        %v1179 = vld [vmem:[%s688 + $0x40] sm:$0xff]
        %v1180 = vld [vmem:[%s688 + $0x48] sm:$0xff]
        %v1181 = vld [vmem:[%s688 + $0x50] sm:$0xff]
        %v1182 = vld [vmem:[%s688 + $0x58] sm:$0xff]
        %v1183 = vld [vmem:[%s688 + $0x60] sm:$0xff]
        %v1184 = vld [vmem:[%s688 + $0x68] sm:$0xff]
        %v1185 = vld [vmem:[%s688 + $0x70] sm:$0xff]
        %v1186 = vld [vmem:[%s688 + $0x78] sm:$0xff]
        %v1187 = vld [vmem:[%s688 + $0x80] sm:$0xff]
        %v1188 = vld [vmem:[%s688 + $0x88] sm:$0xff]
        %v1189 = vld [vmem:[%s688 + $0x90] sm:$0xff]
        %v1190 = vld [vmem:[%s688 + $0x98] sm:$0xff]
        %v1191 = vld [vmem:[%s688 + $0xa0] sm:$0xff]
        %v1192 = vld [vmem:[%s688 + $0xa8] sm:$0xff]
        %v1193 = vld [vmem:[%s688 + $0xb0] sm:$0xff]
        %v1194 = vld [vmem:[%s688 + $0xb8] sm:$0xff]
        %v1195 = vld [vmem:[%s688 + $0xc0] sm:$0xff]
        %v1196 = vld [vmem:[%s688 + $0xc8] sm:$0xff]
        %v1197 = vld [vmem:[%s688 + $0xd0] sm:$0xff]
        %v1198 = vld [vmem:[%s688 + $0xd8] sm:$0xff]
        %v1199 = vld [vmem:[%s688 + $0xe0] sm:$0xff]
        %v1200 = vld [vmem:[%s688 + $0xe8] sm:$0xff]
        %v1201 = vld [vmem:[%s688 + $0xf0] sm:$0xff]
        %v1202 = vld [vmem:[%s688 + $0xf8] sm:$0xff]
        %1203 = vmatprep.subr.mxu0 %v1172
        %1204 = vmatpush1.msra.mxu0 %v1171
        %1205 = vmatprep.subr.mxu0 %v1174
        %1206 = vmatpush1.msra.mxu0 %v1173
        %1207 = vmatprep.subr.mxu0 %v1176
        %1208 = vmatpush1.msra.mxu0 %v1175
        %1209 = vmatprep.subr.mxu0 %v1178
        %1210 = vmatpush1.msra.mxu0 %v1177
        %1211 = vmatprep.subr.mxu0 %v1180
        %1212 = vmatpush1.msra.mxu0 %v1179
        %1213 = vmatprep.subr.mxu0 %v1182
        %1214 = vmatpush1.msra.mxu0 %v1181
        %1215 = vmatprep.subr.mxu0 %v1184
        %1216 = vmatpush1.msra.mxu0 %v1183
        %1217 = vmatprep.subr.mxu0 %v1186
        %1218 = vmatpush1.msra.mxu0 %v1185
        %1219 = vmatprep.subr.mxu0 %v1188
        %1220 = vmatpush1.msra.mxu0 %v1187
        %1221 = vmatprep.subr.mxu0 %v1190
        %1222 = vmatpush1.msra.mxu0 %v1189
        %1223 = vmatprep.subr.mxu0 %v1192
        %1224 = vmatpush1.msra.mxu0 %v1191
        %1225 = vmatprep.subr.mxu0 %v1194
        %1226 = vmatpush1.msra.mxu0 %v1193
        %1227 = vmatprep.subr.mxu0 %v1196
        %1228 = vmatpush1.msra.mxu0 %v1195
        %1229 = vmatprep.subr.mxu0 %v1198
        %1230 = vmatpush1.msra.mxu0 %v1197
        %1231 = vmatprep.subr.mxu0 %v1200
        %1232 = vmatpush1.msra.mxu0 %v1199
        %1233 = vmatprep.subr.mxu0 %v1202
        %1234 = vmatpush1.msra.mxu0 %v1201
        %1235 = vmatprep.subr.mxu0 0.0
        %1236 = vmatpush1.msra.mxu0 0.0
        %1237 = vmatprep.subr.mxu0 0.0
        %1238 = vmatpush1.msra.mxu0 0.0
        %1239 = vmatprep.subr.mxu0 0.0
        %1240 = vmatpush1.msra.mxu0 0.0
        %1241 = vmatprep.subr.mxu0 0.0
        %1242 = vmatpush1.msra.mxu0 0.0
        %1243 = vmatprep.subr.mxu0 0.0
        %1244 = vmatpush1.msra.mxu0 0.0
        %1245 = vmatprep.subr.mxu0 0.0
        %1246 = vmatpush1.msra.mxu0 0.0
        %1247 = vmatprep.subr.mxu0 0.0
        %1248 = vmatpush1.msra.mxu0 0.0
        %1249 = vmatprep.subr.mxu0 0.0
        %1250 = vmatpush1.msra.mxu0 0.0
        %1251 = vmatprep.subr.mxu0 0.0
        %1252 = vmatpush1.msra.mxu0 0.0
        %1253 = vmatprep.subr.mxu0 0.0
        %1254 = vmatpush1.msra.mxu0 0.0
        %1255 = vmatprep.subr.mxu0 0.0
        %1256 = vmatpush1.msra.mxu0 0.0
        %1257 = vmatprep.subr.mxu0 0.0
        %1258 = vmatpush1.msra.mxu0 0.0
        %1259 = vmatprep.subr.mxu0 0.0
        %1260 = vmatpush1.msra.mxu0 0.0
        %1261 = vmatprep.subr.mxu0 0.0
        %1262 = vmatpush1.msra.mxu0 0.0
        %1263 = vmatprep.subr.mxu0 0.0
        %1264 = vmatpush1.msra.mxu0 0.0
        %1265 = vmatprep.subr.mxu0 0.0
        %1266 = vmatpush1.msra.mxu0 0.0
        %1267 = vmatprep.mubr.f32.mxu0 0.0
        %1268 = vmatmul.mubr.f32.gmra.mrb[0].mxu0 %v1139
        %v1269 = vpop.f32.mrb[0].mxu0
        %v1270 = vadd.f32 0.0, %v1269
        %v1271 = vpop.f32.mrb[0].mxu0
        %v1272 = vadd.f32 0.0, %v1271
        %1273 = vmatprep.mubr.f32.mxu0 0.0
        %1274 = vmatmul.mubr.f32.gmra.mrb[0].mxu0 %v1140
        %v1275 = vpop.f32.mrb[0].mxu0
        %v1276 = vadd.f32 0.0, %v1275
        %v1277 = vpop.f32.mrb[0].mxu0
        %v1278 = vadd.f32 0.0, %v1277
        %1279 = vmatprep.mubr.f32.mxu0 0.0
        %1280 = vmatmul.mubr.f32.gmra.mrb[0].mxu0 %v1141
        %v1281 = vpop.f32.mrb[0].mxu0
        %v1282 = vadd.f32 0.0, %v1281
        %v1283 = vpop.f32.mrb[0].mxu0
        %v1284 = vadd.f32 0.0, %v1283
        %1285 = vmatprep.mubr.f32.mxu0 0.0
        %1286 = vmatmul.mubr.f32.gmra.mrb[0].mxu0 %v1142
        %v1287 = vpop.f32.mrb[0].mxu0
        %v1288 = vadd.f32 0.0, %v1287
        %v1289 = vpop.f32.mrb[0].mxu0
        %v1290 = vadd.f32 0.0, %v1289
        %1291 = vmatprep.mubr.f32.mxu0 0.0
        %1292 = vmatmul.mubr.f32.gmra.mrb[0].mxu0 %v1143
        %v1293 = vpop.f32.mrb[0].mxu0
        %v1294 = vadd.f32 0.0, %v1293
        %v1295 = vpop.f32.mrb[0].mxu0
        %v1296 = vadd.f32 0.0, %v1295
        %1297 = vmatprep.mubr.f32.mxu0 0.0
        %1298 = vmatmul.mubr.f32.gmra.mrb[0].mxu0 %v1144
        %v1299 = vpop.f32.mrb[0].mxu0
        %v1300 = vadd.f32 0.0, %v1299
        %v1301 = vpop.f32.mrb[0].mxu0
        %v1302 = vadd.f32 0.0, %v1301
        %1303 = vmatprep.mubr.f32.mxu0 0.0
        %1304 = vmatmul.mubr.f32.gmra.mrb[0].mxu0 %v1145
        %v1305 = vpop.f32.mrb[0].mxu0
        %v1306 = vadd.f32 0.0, %v1305
        %v1307 = vpop.f32.mrb[0].mxu0
        %v1308 = vadd.f32 0.0, %v1307
        %1309 = vmatprep.mubr.f32.mxu0 0.0
        %1310 = vmatmul.mubr.f32.gmra.mrb[0].mxu0 %v1146
        %v1311 = vpop.f32.mrb[0].mxu0
        %v1312 = vadd.f32 0.0, %v1311
        %v1313 = vpop.f32.mrb[0].mxu0
        %v1314 = vadd.f32 0.0, %v1313
        %1315 = vmatprep.mubr.f32.mxu0 0.0
        %1316 = vmatmul.mubr.f32.gmra.mrb[0].mxu0 %v1147
        %v1317 = vpop.f32.mrb[0].mxu0
        %v1318 = vadd.f32 0.0, %v1317
        %v1319 = vpop.f32.mrb[0].mxu0
        %v1320 = vadd.f32 0.0, %v1319
        %1321 = vmatprep.mubr.f32.mxu0 0.0
        %1322 = vmatmul.mubr.f32.gmra.mrb[0].mxu0 %v1148
        %v1323 = vpop.f32.mrb[0].mxu0
        %v1324 = vadd.f32 0.0, %v1323
        %v1325 = vpop.f32.mrb[0].mxu0
        %v1326 = vadd.f32 0.0, %v1325
        %1327 = vmatprep.mubr.f32.mxu0 0.0
        %1328 = vmatmul.mubr.f32.gmra.mrb[0].mxu0 %v1149
        %v1329 = vpop.f32.mrb[0].mxu0
        %v1330 = vadd.f32 0.0, %v1329
        %v1331 = vpop.f32.mrb[0].mxu0
        %v1332 = vadd.f32 0.0, %v1331
        %1333 = vmatprep.mubr.f32.mxu0 0.0
        %1334 = vmatmul.mubr.f32.gmra.mrb[0].mxu0 %v1150
        %v1335 = vpop.f32.mrb[0].mxu0
        %v1336 = vadd.f32 0.0, %v1335
        %v1337 = vpop.f32.mrb[0].mxu0
        %v1338 = vadd.f32 0.0, %v1337
        %1339 = vmatprep.mubr.f32.mxu0 0.0
        %1340 = vmatmul.mubr.f32.gmra.mrb[0].mxu0 %v1151
        %v1341 = vpop.f32.mrb[0].mxu0
        %v1342 = vadd.f32 0.0, %v1341
        %v1343 = vpop.f32.mrb[0].mxu0
        %v1344 = vadd.f32 0.0, %v1343
        %1345 = vmatprep.mubr.f32.mxu0 0.0
        %1346 = vmatmul.mubr.f32.gmra.mrb[0].mxu0 %v1152
        %v1347 = vpop.f32.mrb[0].mxu0
        %v1348 = vadd.f32 0.0, %v1347
        %v1349 = vpop.f32.mrb[0].mxu0
        %v1350 = vadd.f32 0.0, %v1349
        %1351 = vmatprep.mubr.f32.mxu0 0.0
        %1352 = vmatmul.mubr.f32.gmra.mrb[0].mxu0 %v1153
        %v1353 = vpop.f32.mrb[0].mxu0
        %v1354 = vadd.f32 0.0, %v1353
        %v1355 = vpop.f32.mrb[0].mxu0
        %v1356 = vadd.f32 0.0, %v1355
        %1357 = vmatprep.mubr.f32.mxu0 0.0
        %1358 = vmatmul.mubr.f32.gmra.mrb[0].mxu0 %v1154
        %v1359 = vpop.f32.mrb[0].mxu0
        %v1360 = vadd.f32 0.0, %v1359
        %v1361 = vpop.f32.mrb[0].mxu0
        %v1362 = vadd.f32 0.0, %v1361
        %1363 = vmatprep.mubr.f32.mxu0 0.0
        %1364 = vmatmul.mubr.f32.gmra.mrb[0].mxu0 %v1155
        %v1365 = vpop.f32.mrb[0].mxu0
        %v1366 = vadd.f32 0.0, %v1365
        %v1367 = vpop.f32.mrb[0].mxu0
        %v1368 = vadd.f32 0.0, %v1367
        %1369 = vmatprep.mubr.f32.mxu0 0.0
        %1370 = vmatmul.mubr.f32.gmra.mrb[0].mxu0 %v1156
        %v1371 = vpop.f32.mrb[0].mxu0
        %v1372 = vadd.f32 0.0, %v1371
        %v1373 = vpop.f32.mrb[0].mxu0
        %v1374 = vadd.f32 0.0, %v1373
        %1375 = vmatprep.mubr.f32.mxu0 0.0
        %1376 = vmatmul.mubr.f32.gmra.mrb[0].mxu0 %v1157
        %v1377 = vpop.f32.mrb[0].mxu0
        %v1378 = vadd.f32 0.0, %v1377
        %v1379 = vpop.f32.mrb[0].mxu0
        %v1380 = vadd.f32 0.0, %v1379
        %1381 = vmatprep.mubr.f32.mxu0 0.0
        %1382 = vmatmul.mubr.f32.gmra.mrb[0].mxu0 %v1158
        %v1383 = vpop.f32.mrb[0].mxu0
        %v1384 = vadd.f32 0.0, %v1383
        %v1385 = vpop.f32.mrb[0].mxu0
        %v1386 = vadd.f32 0.0, %v1385
        %1387 = vmatprep.mubr.f32.mxu0 0.0
        %1388 = vmatmul.mubr.f32.gmra.mrb[0].mxu0 %v1159
        %v1389 = vpop.f32.mrb[0].mxu0
        %v1390 = vadd.f32 0.0, %v1389
        %v1391 = vpop.f32.mrb[0].mxu0
        %v1392 = vadd.f32 0.0, %v1391
        %1393 = vmatprep.mubr.f32.mxu0 0.0
        %1394 = vmatmul.mubr.f32.gmra.mrb[0].mxu0 %v1160
        %v1395 = vpop.f32.mrb[0].mxu0
        %v1396 = vadd.f32 0.0, %v1395
        %v1397 = vpop.f32.mrb[0].mxu0
        %v1398 = vadd.f32 0.0, %v1397
        %1399 = vmatprep.mubr.f32.mxu0 0.0
        %1400 = vmatmul.mubr.f32.gmra.mrb[0].mxu0 %v1161
        %v1401 = vpop.f32.mrb[0].mxu0
        %v1402 = vadd.f32 0.0, %v1401
        %v1403 = vpop.f32.mrb[0].mxu0
        %v1404 = vadd.f32 0.0, %v1403
        %1405 = vmatprep.mubr.f32.mxu0 0.0
        %1406 = vmatmul.mubr.f32.gmra.mrb[0].mxu0 %v1162
        %v1407 = vpop.f32.mrb[0].mxu0
        %v1408 = vadd.f32 0.0, %v1407
        %v1409 = vpop.f32.mrb[0].mxu0
        %v1410 = vadd.f32 0.0, %v1409
        %1411 = vmatprep.mubr.f32.mxu0 0.0
        %1412 = vmatmul.mubr.f32.gmra.mrb[0].mxu0 %v1163
        %v1413 = vpop.f32.mrb[0].mxu0
        %v1414 = vadd.f32 0.0, %v1413
        %v1415 = vpop.f32.mrb[0].mxu0
        %v1416 = vadd.f32 0.0, %v1415
        %1417 = vmatprep.mubr.f32.mxu0 0.0
        %1418 = vmatmul.mubr.f32.gmra.mrb[0].mxu0 %v1164
        %v1419 = vpop.f32.mrb[0].mxu0
        %v1420 = vadd.f32 0.0, %v1419
        %v1421 = vpop.f32.mrb[0].mxu0
        %v1422 = vadd.f32 0.0, %v1421
        %1423 = vmatprep.mubr.f32.mxu0 0.0
        %1424 = vmatmul.mubr.f32.gmra.mrb[0].mxu0 %v1165
        %v1425 = vpop.f32.mrb[0].mxu0
        %v1426 = vadd.f32 0.0, %v1425
        %v1427 = vpop.f32.mrb[0].mxu0
        %v1428 = vadd.f32 0.0, %v1427
        %1429 = vmatprep.mubr.f32.mxu0 0.0
        %1430 = vmatmul.mubr.f32.gmra.mrb[0].mxu0 %v1166
        %v1431 = vpop.f32.mrb[0].mxu0
        %v1432 = vadd.f32 0.0, %v1431
        %v1433 = vpop.f32.mrb[0].mxu0
        %v1434 = vadd.f32 0.0, %v1433
        %1435 = vmatprep.mubr.f32.mxu0 0.0
        %1436 = vmatmul.mubr.f32.gmra.mrb[0].mxu0 %v1167
        %v1437 = vpop.f32.mrb[0].mxu0
        %v1438 = vadd.f32 0.0, %v1437
        %v1439 = vpop.f32.mrb[0].mxu0
        %v1440 = vadd.f32 0.0, %v1439
        %1441 = vmatprep.mubr.f32.mxu0 0.0
        %1442 = vmatmul.mubr.f32.gmra.mrb[0].mxu0 %v1168
        %v1443 = vpop.f32.mrb[0].mxu0
        %v1444 = vadd.f32 0.0, %v1443
        %v1445 = vpop.f32.mrb[0].mxu0
        %v1446 = vadd.f32 0.0, %v1445
        %1447 = vmatprep.mubr.f32.mxu0 0.0
        %1448 = vmatmul.mubr.f32.gmra.mrb[0].mxu0 %v1169
        %v1449 = vpop.f32.mrb[0].mxu0
        %v1450 = vadd.f32 0.0, %v1449
        %v1451 = vpop.f32.mrb[0].mxu0
        %v1452 = vadd.f32 0.0, %v1451
        %1453 = vmatprep.mubr.f32.mxu0 0.0
        %1454 = vmatmul.mubr.f32.gmra.mrb[0].mxu0 %v1170
        %v1455 = vpop.f32.mrb[0].mxu0
        %v1456 = vadd.f32 0.0, %v1455
        %v1457 = vpop.f32.mrb[0].mxu0
        %v1458 = vadd.f32 0.0, %v1457
        %1459 = vdwg.mxu0
        %v1460 = vld [vmem:[%s661] sm:$0xff]
        %v1461 = vld [vmem:[%s661 + $0x8] sm:$0xff]
        %v1462 = vld [vmem:[%s661 + $0x10] sm:$0xff]
        %v1463 = vld [vmem:[%s661 + $0x18] sm:$0xff]
        %v1464 = vld [vmem:[%s661 + $0x20] sm:$0xff]
        %v1465 = vld [vmem:[%s661 + $0x28] sm:$0xff]
        %v1466 = vld [vmem:[%s661 + $0x30] sm:$0xff]
        %v1467 = vld [vmem:[%s661 + $0x38] sm:$0xff]
        %v1468 = vld [vmem:[%s661 + $0x40] sm:$0xff]
        %v1469 = vld [vmem:[%s661 + $0x48] sm:$0xff]
        %v1470 = vld [vmem:[%s661 + $0x50] sm:$0xff]
        %v1471 = vld [vmem:[%s661 + $0x58] sm:$0xff]
        %v1472 = vld [vmem:[%s661 + $0x60] sm:$0xff]
        %v1473 = vld [vmem:[%s661 + $0x68] sm:$0xff]
        %v1474 = vld [vmem:[%s661 + $0x70] sm:$0xff]
        %v1475 = vld [vmem:[%s661 + $0x78] sm:$0xff]
        %v1476 = vld [vmem:[%s661 + $0x80] sm:$0xff]
        %v1477 = vld [vmem:[%s661 + $0x88] sm:$0xff]
        %v1478 = vld [vmem:[%s661 + $0x90] sm:$0xff]
        %v1479 = vld [vmem:[%s661 + $0x98] sm:$0xff]
        %v1480 = vld [vmem:[%s661 + $0xa0] sm:$0xff]
        %v1481 = vld [vmem:[%s661 + $0xa8] sm:$0xff]
        %v1482 = vld [vmem:[%s661 + $0xb0] sm:$0xff]
        %v1483 = vld [vmem:[%s661 + $0xb8] sm:$0xff]
        %v1484 = vld [vmem:[%s661 + $0xc0] sm:$0xff]
        %v1485 = vld [vmem:[%s661 + $0xc8] sm:$0xff]
        %v1486 = vld [vmem:[%s661 + $0xd0] sm:$0xff]
        %v1487 = vld [vmem:[%s661 + $0xd8] sm:$0xff]
        %v1488 = vld [vmem:[%s661 + $0xe0] sm:$0xff]
        %v1489 = vld [vmem:[%s661 + $0xe8] sm:$0xff]
        %v1490 = vld [vmem:[%s661 + $0xf0] sm:$0xff]
        %v1491 = vld [vmem:[%s661 + $0xf8] sm:$0xff]
        %v1492 = vld [vmem:[%s661 + $0x100] sm:$0xff]
        %v1493 = vld [vmem:[%s661 + $0x108] sm:$0xff]
        %v1494 = vld [vmem:[%s661 + $0x110] sm:$0xff]
        %v1495 = vld [vmem:[%s661 + $0x118] sm:$0xff]
        %v1496 = vld [vmem:[%s661 + $0x120] sm:$0xff]
        %v1497 = vld [vmem:[%s661 + $0x128] sm:$0xff]
        %v1498 = vld [vmem:[%s661 + $0x130] sm:$0xff]
        %v1499 = vld [vmem:[%s661 + $0x138] sm:$0xff]
        %v1500 = vld [vmem:[%s661 + $0x140] sm:$0xff]
        %v1501 = vld [vmem:[%s661 + $0x148] sm:$0xff]
        %v1502 = vld [vmem:[%s661 + $0x150] sm:$0xff]
        %v1503 = vld [vmem:[%s661 + $0x158] sm:$0xff]
        %v1504 = vld [vmem:[%s661 + $0x160] sm:$0xff]
        %v1505 = vld [vmem:[%s661 + $0x168] sm:$0xff]
        %v1506 = vld [vmem:[%s661 + $0x170] sm:$0xff]
        %v1507 = vld [vmem:[%s661 + $0x178] sm:$0xff]
        %v1508 = vld [vmem:[%s661 + $0x180] sm:$0xff]
        %v1509 = vld [vmem:[%s661 + $0x188] sm:$0xff]
        %v1510 = vld [vmem:[%s661 + $0x190] sm:$0xff]
        %v1511 = vld [vmem:[%s661 + $0x198] sm:$0xff]
        %v1512 = vld [vmem:[%s661 + $0x1a0] sm:$0xff]
        %v1513 = vld [vmem:[%s661 + $0x1a8] sm:$0xff]
        %v1514 = vld [vmem:[%s661 + $0x1b0] sm:$0xff]
        %v1515 = vld [vmem:[%s661 + $0x1b8] sm:$0xff]
        %v1516 = vld [vmem:[%s661 + $0x1c0] sm:$0xff]
        %v1517 = vld [vmem:[%s661 + $0x1c8] sm:$0xff]
        %v1518 = vld [vmem:[%s661 + $0x1d0] sm:$0xff]
        %v1519 = vld [vmem:[%s661 + $0x1d8] sm:$0xff]
        %v1520 = vld [vmem:[%s661 + $0x1e0] sm:$0xff]
        %v1521 = vld [vmem:[%s661 + $0x1e8] sm:$0xff]
        %v1522 = vld [vmem:[%s661 + $0x1f0] sm:$0xff]
        %v1523 = vld [vmem:[%s661 + $0x1f8] sm:$0xff]
        %v1524 = vmul.f32 %v1270, %v1460
        %v1525 = vmul.f32 %v1272, %v1461
        %v1526 = vmul.f32 %v1276, %v1462
        %v1527 = vmul.f32 %v1278, %v1463
        %v1528 = vmul.f32 %v1282, %v1464
        %v1529 = vmul.f32 %v1284, %v1465
        %v1530 = vmul.f32 %v1288, %v1466
        %v1531 = vmul.f32 %v1290, %v1467
        %v1532 = vmul.f32 %v1294, %v1468
        %v1533 = vmul.f32 %v1296, %v1469
        %v1534 = vmul.f32 %v1300, %v1470
        %v1535 = vmul.f32 %v1302, %v1471
        %v1536 = vmul.f32 %v1306, %v1472
        %v1537 = vmul.f32 %v1308, %v1473
        %v1538 = vmul.f32 %v1312, %v1474
        %v1539 = vmul.f32 %v1314, %v1475
        %v1540 = vmul.f32 %v1318, %v1476
        %v1541 = vmul.f32 %v1320, %v1477
        %v1542 = vmul.f32 %v1324, %v1478
        %v1543 = vmul.f32 %v1326, %v1479
        %v1544 = vmul.f32 %v1330, %v1480
        %v1545 = vmul.f32 %v1332, %v1481
        %v1546 = vmul.f32 %v1336, %v1482
        %v1547 = vmul.f32 %v1338, %v1483
        %v1548 = vmul.f32 %v1342, %v1484
        %v1549 = vmul.f32 %v1344, %v1485
        %v1550 = vmul.f32 %v1348, %v1486
        %v1551 = vmul.f32 %v1350, %v1487
        %v1552 = vmul.f32 %v1354, %v1488
        %v1553 = vmul.f32 %v1356, %v1489
        %v1554 = vmul.f32 %v1360, %v1490
        %v1555 = vmul.f32 %v1362, %v1491
        %v1556 = vmul.f32 %v1366, %v1492
        %v1557 = vmul.f32 %v1368, %v1493
        %v1558 = vmul.f32 %v1372, %v1494
        %v1559 = vmul.f32 %v1374, %v1495
        %v1560 = vmul.f32 %v1378, %v1496
        %v1561 = vmul.f32 %v1380, %v1497
        %v1562 = vmul.f32 %v1384, %v1498
        %v1563 = vmul.f32 %v1386, %v1499
        %v1564 = vmul.f32 %v1390, %v1500
        %v1565 = vmul.f32 %v1392, %v1501
        %v1566 = vmul.f32 %v1396, %v1502
        %v1567 = vmul.f32 %v1398, %v1503
        %v1568 = vmul.f32 %v1402, %v1504
        %v1569 = vmul.f32 %v1404, %v1505
        %v1570 = vmul.f32 %v1408, %v1506
        %v1571 = vmul.f32 %v1410, %v1507
        %v1572 = vmul.f32 %v1414, %v1508
        %v1573 = vmul.f32 %v1416, %v1509
        %v1574 = vmul.f32 %v1420, %v1510
        %v1575 = vmul.f32 %v1422, %v1511
        %v1576 = vmul.f32 %v1426, %v1512
        %v1577 = vmul.f32 %v1428, %v1513
        %v1578 = vmul.f32 %v1432, %v1514
        %v1579 = vmul.f32 %v1434, %v1515
        %v1580 = vmul.f32 %v1438, %v1516
        %v1581 = vmul.f32 %v1440, %v1517
        %v1582 = vmul.f32 %v1444, %v1518
        %v1583 = vmul.f32 %v1446, %v1519
        %v1584 = vmul.f32 %v1450, %v1520
        %v1585 = vmul.f32 %v1452, %v1521
        %v1586 = vmul.f32 %v1456, %v1522
        %v1587 = vmul.f32 %v1458, %v1523
        %1588 = vrot.lane.b32.xlu0 %v1270, 64
        %v1589 = vpop.permute.xlu0 %1588
        %1590 = vrot.lane.b32.xlu0 %v1276, 64
        %v1591 = vpop.permute.xlu0 %1590
        %1592 = vrot.lane.b32.xlu0 %v1282, 64
        %v1593 = vpop.permute.xlu0 %1592
        %1594 = vrot.lane.b32.xlu0 %v1288, 64
        %v1595 = vpop.permute.xlu0 %1594
        %1596 = vrot.lane.b32.xlu0 %v1294, 64
        %v1597 = vpop.permute.xlu0 %1596
        %1598 = vrot.lane.b32.xlu0 %v1300, 64
        %v1599 = vpop.permute.xlu0 %1598
        %1600 = vrot.lane.b32.xlu0 %v1306, 64
        %v1601 = vpop.permute.xlu0 %1600
        %1602 = vrot.lane.b32.xlu0 %v1312, 64
        %v1603 = vpop.permute.xlu0 %1602
        %1604 = vrot.lane.b32.xlu0 %v1318, 64
        %v1605 = vpop.permute.xlu0 %1604
        %1606 = vrot.lane.b32.xlu0 %v1324, 64
        %v1607 = vpop.permute.xlu0 %1606
        %1608 = vrot.lane.b32.xlu0 %v1330, 64
        %v1609 = vpop.permute.xlu0 %1608
        %1610 = vrot.lane.b32.xlu0 %v1336, 64
        %v1611 = vpop.permute.xlu0 %1610
        %1612 = vrot.lane.b32.xlu0 %v1342, 64
        %v1613 = vpop.permute.xlu0 %1612
        %1614 = vrot.lane.b32.xlu0 %v1348, 64
        %v1615 = vpop.permute.xlu0 %1614
        %1616 = vrot.lane.b32.xlu0 %v1354, 64
        %v1617 = vpop.permute.xlu0 %1616
        %1618 = vrot.lane.b32.xlu0 %v1360, 64
        %v1619 = vpop.permute.xlu0 %1618
        %1620 = vrot.lane.b32.xlu0 %v1366, 64
        %v1621 = vpop.permute.xlu0 %1620
        %1622 = vrot.lane.b32.xlu0 %v1372, 64
        %v1623 = vpop.permute.xlu0 %1622
        %1624 = vrot.lane.b32.xlu0 %v1378, 64
        %v1625 = vpop.permute.xlu0 %1624
        %1626 = vrot.lane.b32.xlu0 %v1384, 64
        %v1627 = vpop.permute.xlu0 %1626
        %1628 = vrot.lane.b32.xlu0 %v1390, 64
        %v1629 = vpop.permute.xlu0 %1628
        %1630 = vrot.lane.b32.xlu0 %v1396, 64
        %v1631 = vpop.permute.xlu0 %1630
        %1632 = vrot.lane.b32.xlu0 %v1402, 64
        %v1633 = vpop.permute.xlu0 %1632
        %1634 = vrot.lane.b32.xlu0 %v1408, 64
        %v1635 = vpop.permute.xlu0 %1634
        %1636 = vrot.lane.b32.xlu0 %v1414, 64
        %v1637 = vpop.permute.xlu0 %1636
        %1638 = vrot.lane.b32.xlu0 %v1420, 64
        %v1639 = vpop.permute.xlu0 %1638
        %1640 = vrot.lane.b32.xlu0 %v1426, 64
        %v1641 = vpop.permute.xlu0 %1640
        %1642 = vrot.lane.b32.xlu0 %v1432, 64
        %v1643 = vpop.permute.xlu0 %1642
        %1644 = vrot.lane.b32.xlu0 %v1438, 64
        %v1645 = vpop.permute.xlu0 %1644
        %1646 = vrot.lane.b32.xlu0 %v1444, 64
        %v1647 = vpop.permute.xlu0 %1646
        %1648 = vrot.lane.b32.xlu0 %v1450, 64
        %v1649 = vpop.permute.xlu0 %1648
        %1650 = vrot.lane.b32.xlu0 %v1456, 64
        %v1651 = vpop.permute.xlu0 %1650
        %1652 = vrot.lane.b32.xlu0 %v1272, 64
        %v1653 = vpop.permute.xlu0 %1652
        %1654 = vrot.lane.b32.xlu0 %v1278, 64
        %v1655 = vpop.permute.xlu0 %1654
        %1656 = vrot.lane.b32.xlu0 %v1284, 64
        %v1657 = vpop.permute.xlu0 %1656
        %1658 = vrot.lane.b32.xlu0 %v1290, 64
        %v1659 = vpop.permute.xlu0 %1658
        %1660 = vrot.lane.b32.xlu0 %v1296, 64
        %v1661 = vpop.permute.xlu0 %1660
        %1662 = vrot.lane.b32.xlu0 %v1302, 64
        %v1663 = vpop.permute.xlu0 %1662
        %1664 = vrot.lane.b32.xlu0 %v1308, 64
        %v1665 = vpop.permute.xlu0 %1664
        %1666 = vrot.lane.b32.xlu0 %v1314, 64
        %v1667 = vpop.permute.xlu0 %1666
        %1668 = vrot.lane.b32.xlu0 %v1320, 64
        %v1669 = vpop.permute.xlu0 %1668
        %1670 = vrot.lane.b32.xlu0 %v1326, 64
        %v1671 = vpop.permute.xlu0 %1670
        %1672 = vrot.lane.b32.xlu0 %v1332, 64
        %v1673 = vpop.permute.xlu0 %1672
        %1674 = vrot.lane.b32.xlu0 %v1338, 64
        %v1675 = vpop.permute.xlu0 %1674
        %1676 = vrot.lane.b32.xlu0 %v1344, 64
        %v1677 = vpop.permute.xlu0 %1676
        %1678 = vrot.lane.b32.xlu0 %v1350, 64
        %v1679 = vpop.permute.xlu0 %1678
        %1680 = vrot.lane.b32.xlu0 %v1356, 64
        %v1681 = vpop.permute.xlu0 %1680
        %1682 = vrot.lane.b32.xlu0 %v1362, 64
        %v1683 = vpop.permute.xlu0 %1682
        %1684 = vrot.lane.b32.xlu0 %v1368, 64
        %v1685 = vpop.permute.xlu0 %1684
        %1686 = vrot.lane.b32.xlu0 %v1374, 64
        %v1687 = vpop.permute.xlu0 %1686
        %1688 = vrot.lane.b32.xlu0 %v1380, 64
        %v1689 = vpop.permute.xlu0 %1688
        %1690 = vrot.lane.b32.xlu0 %v1386, 64
        %v1691 = vpop.permute.xlu0 %1690
        %1692 = vrot.lane.b32.xlu0 %v1392, 64
        %v1693 = vpop.permute.xlu0 %1692
        %1694 = vrot.lane.b32.xlu0 %v1398, 64
        %v1695 = vpop.permute.xlu0 %1694
        %1696 = vrot.lane.b32.xlu0 %v1404, 64
        %v1697 = vpop.permute.xlu0 %1696
        %1698 = vrot.lane.b32.xlu0 %v1410, 64
        %v1699 = vpop.permute.xlu0 %1698
        %1700 = vrot.lane.b32.xlu0 %v1416, 64
        %v1701 = vpop.permute.xlu0 %1700
        %1702 = vrot.lane.b32.xlu0 %v1422, 64
        %v1703 = vpop.permute.xlu0 %1702
        %1704 = vrot.lane.b32.xlu0 %v1428, 64
        %v1705 = vpop.permute.xlu0 %1704
        %1706 = vrot.lane.b32.xlu0 %v1434, 64
        %v1707 = vpop.permute.xlu0 %1706
        %1708 = vrot.lane.b32.xlu0 %v1440, 64
        %v1709 = vpop.permute.xlu0 %1708
        %1710 = vrot.lane.b32.xlu0 %v1446, 64
        %v1711 = vpop.permute.xlu0 %1710
        %1712 = vrot.lane.b32.xlu0 %v1452, 64
        %v1713 = vpop.permute.xlu0 %1712
        %1714 = vrot.lane.b32.xlu0 %v1458, 64
        %v1715 = vpop.permute.xlu0 %1714
        %v1716 = vlaneseq
        %v1717 = vand.u32 %v1716, 127
        %vm1718 = vcmp.lt.s32.totalorder %v1717, 64
        %v1719 = vsel %vm1718, %v1589, %v1653
        %v1720 = vsel %vm1718, %v1591, %v1655
        %v1721 = vsel %vm1718, %v1593, %v1657
        %v1722 = vsel %vm1718, %v1595, %v1659
        %v1723 = vsel %vm1718, %v1597, %v1661
        %v1724 = vsel %vm1718, %v1599, %v1663
        %v1725 = vsel %vm1718, %v1601, %v1665
        %v1726 = vsel %vm1718, %v1603, %v1667
        %v1727 = vsel %vm1718, %v1605, %v1669
        %v1728 = vsel %vm1718, %v1607, %v1671
        %v1729 = vsel %vm1718, %v1609, %v1673
        %v1730 = vsel %vm1718, %v1611, %v1675
        %v1731 = vsel %vm1718, %v1613, %v1677
        %v1732 = vsel %vm1718, %v1615, %v1679
        %v1733 = vsel %vm1718, %v1617, %v1681
        %v1734 = vsel %vm1718, %v1619, %v1683
        %v1735 = vsel %vm1718, %v1621, %v1685
        %v1736 = vsel %vm1718, %v1623, %v1687
        %v1737 = vsel %vm1718, %v1625, %v1689
        %v1738 = vsel %vm1718, %v1627, %v1691
        %v1739 = vsel %vm1718, %v1629, %v1693
        %v1740 = vsel %vm1718, %v1631, %v1695
        %v1741 = vsel %vm1718, %v1633, %v1697
        %v1742 = vsel %vm1718, %v1635, %v1699
        %v1743 = vsel %vm1718, %v1637, %v1701
        %v1744 = vsel %vm1718, %v1639, %v1703
        %v1745 = vsel %vm1718, %v1641, %v1705
        %v1746 = vsel %vm1718, %v1643, %v1707
        %v1747 = vsel %vm1718, %v1645, %v1709
        %v1748 = vsel %vm1718, %v1647, %v1711
        %v1749 = vsel %vm1718, %v1649, %v1713
        %v1750 = vsel %vm1718, %v1651, %v1715
        %v1751 = vsel %vm1718, %v1653, %v1589
        %v1752 = vsel %vm1718, %v1655, %v1591
        %v1753 = vsel %vm1718, %v1657, %v1593
        %v1754 = vsel %vm1718, %v1659, %v1595
        %v1755 = vsel %vm1718, %v1661, %v1597
        %v1756 = vsel %vm1718, %v1663, %v1599
        %v1757 = vsel %vm1718, %v1665, %v1601
        %v1758 = vsel %vm1718, %v1667, %v1603
        %v1759 = vsel %vm1718, %v1669, %v1605
        %v1760 = vsel %vm1718, %v1671, %v1607
        %v1761 = vsel %vm1718, %v1673, %v1609
        %v1762 = vsel %vm1718, %v1675, %v1611
        %v1763 = vsel %vm1718, %v1677, %v1613
        %v1764 = vsel %vm1718, %v1679, %v1615
        %v1765 = vsel %vm1718, %v1681, %v1617
        %v1766 = vsel %vm1718, %v1683, %v1619
        %v1767 = vsel %vm1718, %v1685, %v1621
        %v1768 = vsel %vm1718, %v1687, %v1623
        %v1769 = vsel %vm1718, %v1689, %v1625
        %v1770 = vsel %vm1718, %v1691, %v1627
        %v1771 = vsel %vm1718, %v1693, %v1629
        %v1772 = vsel %vm1718, %v1695, %v1631
        %v1773 = vsel %vm1718, %v1697, %v1633
        %v1774 = vsel %vm1718, %v1699, %v1635
        %v1775 = vsel %vm1718, %v1701, %v1637
        %v1776 = vsel %vm1718, %v1703, %v1639
        %v1777 = vsel %vm1718, %v1705, %v1641
        %v1778 = vsel %vm1718, %v1707, %v1643
        %v1779 = vsel %vm1718, %v1709, %v1645
        %v1780 = vsel %vm1718, %v1711, %v1647
        %v1781 = vsel %vm1718, %v1713, %v1649
        %v1782 = vsel %vm1718, %v1715, %v1651
        %v1783 = vld [vmem:[%s670] sm:$0xff]
        %v1784 = vld [vmem:[%s670 + $0x8] sm:$0xff]
        %v1785 = vld [vmem:[%s670 + $0x10] sm:$0xff]
        %v1786 = vld [vmem:[%s670 + $0x18] sm:$0xff]
        %v1787 = vld [vmem:[%s670 + $0x20] sm:$0xff]
        %v1788 = vld [vmem:[%s670 + $0x28] sm:$0xff]
        %v1789 = vld [vmem:[%s670 + $0x30] sm:$0xff]
        %v1790 = vld [vmem:[%s670 + $0x38] sm:$0xff]
        %v1791 = vld [vmem:[%s670 + $0x40] sm:$0xff]
        %v1792 = vld [vmem:[%s670 + $0x48] sm:$0xff]
        %v1793 = vld [vmem:[%s670 + $0x50] sm:$0xff]
        %v1794 = vld [vmem:[%s670 + $0x58] sm:$0xff]
        %v1795 = vld [vmem:[%s670 + $0x60] sm:$0xff]
        %v1796 = vld [vmem:[%s670 + $0x68] sm:$0xff]
        %v1797 = vld [vmem:[%s670 + $0x70] sm:$0xff]
        %v1798 = vld [vmem:[%s670 + $0x78] sm:$0xff]
        %v1799 = vld [vmem:[%s670 + $0x80] sm:$0xff]
        %v1800 = vld [vmem:[%s670 + $0x88] sm:$0xff]
        %v1801 = vld [vmem:[%s670 + $0x90] sm:$0xff]
        %v1802 = vld [vmem:[%s670 + $0x98] sm:$0xff]
        %v1803 = vld [vmem:[%s670 + $0xa0] sm:$0xff]
        %v1804 = vld [vmem:[%s670 + $0xa8] sm:$0xff]
        %v1805 = vld [vmem:[%s670 + $0xb0] sm:$0xff]
        %v1806 = vld [vmem:[%s670 + $0xb8] sm:$0xff]
        %v1807 = vld [vmem:[%s670 + $0xc0] sm:$0xff]
        %v1808 = vld [vmem:[%s670 + $0xc8] sm:$0xff]
        %v1809 = vld [vmem:[%s670 + $0xd0] sm:$0xff]
        %v1810 = vld [vmem:[%s670 + $0xd8] sm:$0xff]
        %v1811 = vld [vmem:[%s670 + $0xe0] sm:$0xff]
        %v1812 = vld [vmem:[%s670 + $0xe8] sm:$0xff]
        %v1813 = vld [vmem:[%s670 + $0xf0] sm:$0xff]
        %v1814 = vld [vmem:[%s670 + $0xf8] sm:$0xff]
        %v1815 = vld [vmem:[%s670 + $0x100] sm:$0xff]
        %v1816 = vld [vmem:[%s670 + $0x108] sm:$0xff]
        %v1817 = vld [vmem:[%s670 + $0x110] sm:$0xff]
        %v1818 = vld [vmem:[%s670 + $0x118] sm:$0xff]
        %v1819 = vld [vmem:[%s670 + $0x120] sm:$0xff]
        %v1820 = vld [vmem:[%s670 + $0x128] sm:$0xff]
        %v1821 = vld [vmem:[%s670 + $0x130] sm:$0xff]
        %v1822 = vld [vmem:[%s670 + $0x138] sm:$0xff]
        %v1823 = vld [vmem:[%s670 + $0x140] sm:$0xff]
        %v1824 = vld [vmem:[%s670 + $0x148] sm:$0xff]
        %v1825 = vld [vmem:[%s670 + $0x150] sm:$0xff]
        %v1826 = vld [vmem:[%s670 + $0x158] sm:$0xff]
        %v1827 = vld [vmem:[%s670 + $0x160] sm:$0xff]
        %v1828 = vld [vmem:[%s670 + $0x168] sm:$0xff]
        %v1829 = vld [vmem:[%s670 + $0x170] sm:$0xff]
        %v1830 = vld [vmem:[%s670 + $0x178] sm:$0xff]
        %v1831 = vld [vmem:[%s670 + $0x180] sm:$0xff]
        %v1832 = vld [vmem:[%s670 + $0x188] sm:$0xff]
        %v1833 = vld [vmem:[%s670 + $0x190] sm:$0xff]
        %v1834 = vld [vmem:[%s670 + $0x198] sm:$0xff]
        %v1835 = vld [vmem:[%s670 + $0x1a0] sm:$0xff]
        %v1836 = vld [vmem:[%s670 + $0x1a8] sm:$0xff]
        %v1837 = vld [vmem:[%s670 + $0x1b0] sm:$0xff]
        %v1838 = vld [vmem:[%s670 + $0x1b8] sm:$0xff]
        %v1839 = vld [vmem:[%s670 + $0x1c0] sm:$0xff]
        %v1840 = vld [vmem:[%s670 + $0x1c8] sm:$0xff]
        %v1841 = vld [vmem:[%s670 + $0x1d0] sm:$0xff]
        %v1842 = vld [vmem:[%s670 + $0x1d8] sm:$0xff]
        %v1843 = vld [vmem:[%s670 + $0x1e0] sm:$0xff]
        %v1844 = vld [vmem:[%s670 + $0x1e8] sm:$0xff]
        %v1845 = vld [vmem:[%s670 + $0x1f0] sm:$0xff]
        %v1846 = vld [vmem:[%s670 + $0x1f8] sm:$0xff]
        %v1847 = vmul.f32 %v1751, %v1783
        %v1848 = vmul.f32 %v1719, %v1784
        %v1849 = vmul.f32 %v1752, %v1785
        %v1850 = vmul.f32 %v1720, %v1786
        %v1851 = vmul.f32 %v1753, %v1787
        %v1852 = vmul.f32 %v1721, %v1788
        %v1853 = vmul.f32 %v1754, %v1789
        %v1854 = vmul.f32 %v1722, %v1790
        %v1855 = vmul.f32 %v1755, %v1791
        %v1856 = vmul.f32 %v1723, %v1792
        %v1857 = vmul.f32 %v1756, %v1793
        %v1858 = vmul.f32 %v1724, %v1794
        %v1859 = vmul.f32 %v1757, %v1795
        %v1860 = vmul.f32 %v1725, %v1796
        %v1861 = vmul.f32 %v1758, %v1797
        %v1862 = vmul.f32 %v1726, %v1798
        %v1863 = vmul.f32 %v1759, %v1799
        %v1864 = vmul.f32 %v1727, %v1800
        %v1865 = vmul.f32 %v1760, %v1801
        %v1866 = vmul.f32 %v1728, %v1802
        %v1867 = vmul.f32 %v1761, %v1803
        %v1868 = vmul.f32 %v1729, %v1804
        %v1869 = vmul.f32 %v1762, %v1805
        %v1870 = vmul.f32 %v1730, %v1806
        %v1871 = vmul.f32 %v1763, %v1807
        %v1872 = vmul.f32 %v1731, %v1808
        %v1873 = vmul.f32 %v1764, %v1809
        %v1874 = vmul.f32 %v1732, %v1810
        %v1875 = vmul.f32 %v1765, %v1811
        %v1876 = vmul.f32 %v1733, %v1812
        %v1877 = vmul.f32 %v1766, %v1813
        %v1878 = vmul.f32 %v1734, %v1814
        %v1879 = vmul.f32 %v1767, %v1815
        %v1880 = vmul.f32 %v1735, %v1816
        %v1881 = vmul.f32 %v1768, %v1817
        %v1882 = vmul.f32 %v1736, %v1818
        %v1883 = vmul.f32 %v1769, %v1819
        %v1884 = vmul.f32 %v1737, %v1820
        %v1885 = vmul.f32 %v1770, %v1821
        %v1886 = vmul.f32 %v1738, %v1822
        %v1887 = vmul.f32 %v1771, %v1823
        %v1888 = vmul.f32 %v1739, %v1824
        %v1889 = vmul.f32 %v1772, %v1825
        %v1890 = vmul.f32 %v1740, %v1826
        %v1891 = vmul.f32 %v1773, %v1827
        %v1892 = vmul.f32 %v1741, %v1828
        %v1893 = vmul.f32 %v1774, %v1829
        %v1894 = vmul.f32 %v1742, %v1830
        %v1895 = vmul.f32 %v1775, %v1831
        %v1896 = vmul.f32 %v1743, %v1832
        %v1897 = vmul.f32 %v1776, %v1833
        %v1898 = vmul.f32 %v1744, %v1834
        %v1899 = vmul.f32 %v1777, %v1835
        %v1900 = vmul.f32 %v1745, %v1836
        %v1901 = vmul.f32 %v1778, %v1837
        %v1902 = vmul.f32 %v1746, %v1838
        %v1903 = vmul.f32 %v1779, %v1839
        %v1904 = vmul.f32 %v1747, %v1840
        %v1905 = vmul.f32 %v1780, %v1841
        %v1906 = vmul.f32 %v1748, %v1842
        %v1907 = vmul.f32 %v1781, %v1843
        %v1908 = vmul.f32 %v1749, %v1844
        %v1909 = vmul.f32 %v1782, %v1845
        %v1910 = vmul.f32 %v1750, %v1846
        %v1911 = vadd.f32 %v1524, %v1847
        %v1912 = vadd.f32 %v1525, %v1848
        %v1913 = vadd.f32 %v1526, %v1849
        %v1914 = vadd.f32 %v1527, %v1850
        %v1915 = vadd.f32 %v1528, %v1851
        %v1916 = vadd.f32 %v1529, %v1852
        %v1917 = vadd.f32 %v1530, %v1853
        %v1918 = vadd.f32 %v1531, %v1854
        %v1919 = vadd.f32 %v1532, %v1855
        %v1920 = vadd.f32 %v1533, %v1856
        %v1921 = vadd.f32 %v1534, %v1857
        %v1922 = vadd.f32 %v1535, %v1858
        %v1923 = vadd.f32 %v1536, %v1859
        %v1924 = vadd.f32 %v1537, %v1860
        %v1925 = vadd.f32 %v1538, %v1861
        %v1926 = vadd.f32 %v1539, %v1862
        %v1927 = vadd.f32 %v1540, %v1863
        %v1928 = vadd.f32 %v1541, %v1864
        %v1929 = vadd.f32 %v1542, %v1865
        %v1930 = vadd.f32 %v1543, %v1866
        %v1931 = vadd.f32 %v1544, %v1867
        %v1932 = vadd.f32 %v1545, %v1868
        %v1933 = vadd.f32 %v1546, %v1869
        %v1934 = vadd.f32 %v1547, %v1870
        %v1935 = vadd.f32 %v1548, %v1871
        %v1936 = vadd.f32 %v1549, %v1872
        %v1937 = vadd.f32 %v1550, %v1873
        %v1938 = vadd.f32 %v1551, %v1874
        %v1939 = vadd.f32 %v1552, %v1875
        %v1940 = vadd.f32 %v1553, %v1876
        %v1941 = vadd.f32 %v1554, %v1877
        %v1942 = vadd.f32 %v1555, %v1878
        %v1943 = vadd.f32 %v1556, %v1879
        %v1944 = vadd.f32 %v1557, %v1880
        %v1945 = vadd.f32 %v1558, %v1881
        %v1946 = vadd.f32 %v1559, %v1882
        %v1947 = vadd.f32 %v1560, %v1883
        %v1948 = vadd.f32 %v1561, %v1884
        %v1949 = vadd.f32 %v1562, %v1885
        %v1950 = vadd.f32 %v1563, %v1886
        %v1951 = vadd.f32 %v1564, %v1887
        %v1952 = vadd.f32 %v1565, %v1888
        %v1953 = vadd.f32 %v1566, %v1889
        %v1954 = vadd.f32 %v1567, %v1890
        %v1955 = vadd.f32 %v1568, %v1891
        %v1956 = vadd.f32 %v1569, %v1892
        %v1957 = vadd.f32 %v1570, %v1893
        %v1958 = vadd.f32 %v1571, %v1894
        %v1959 = vadd.f32 %v1572, %v1895
        %v1960 = vadd.f32 %v1573, %v1896
        %v1961 = vadd.f32 %v1574, %v1897
        %v1962 = vadd.f32 %v1575, %v1898
        %v1963 = vadd.f32 %v1576, %v1899
        %v1964 = vadd.f32 %v1577, %v1900
        %v1965 = vadd.f32 %v1578, %v1901
        %v1966 = vadd.f32 %v1579, %v1902
        %v1967 = vadd.f32 %v1580, %v1903
        %v1968 = vadd.f32 %v1581, %v1904
        %v1969 = vadd.f32 %v1582, %v1905
        %v1970 = vadd.f32 %v1583, %v1906
        %v1971 = vadd.f32 %v1584, %v1907
        %v1972 = vadd.f32 %v1585, %v1908
        %v1973 = vadd.f32 %v1586, %v1909
        %v1974 = vadd.f32 %v1587, %v1910
        %v1975 = vld [vmem:[%s679] sm:$0xff]
        %v1976 = vld [vmem:[%s679 + $0x8] sm:$0xff]
        %v1977 = vld [vmem:[%s679 + $0x10] sm:$0xff]
        %v1978 = vld [vmem:[%s679 + $0x18] sm:$0xff]
        %v1979 = vld [vmem:[%s679 + $0x20] sm:$0xff]
        %v1980 = vld [vmem:[%s679 + $0x28] sm:$0xff]
        %v1981 = vld [vmem:[%s679 + $0x30] sm:$0xff]
        %v1982 = vld [vmem:[%s679 + $0x38] sm:$0xff]
        %v1983 = vld [vmem:[%s679 + $0x40] sm:$0xff]
        %v1984 = vld [vmem:[%s679 + $0x48] sm:$0xff]
        %v1985 = vld [vmem:[%s679 + $0x50] sm:$0xff]
        %v1986 = vld [vmem:[%s679 + $0x58] sm:$0xff]
        %v1987 = vld [vmem:[%s679 + $0x60] sm:$0xff]
        %v1988 = vld [vmem:[%s679 + $0x68] sm:$0xff]
        %v1989 = vld [vmem:[%s679 + $0x70] sm:$0xff]
        %v1990 = vld [vmem:[%s679 + $0x78] sm:$0xff]
        %v1991 = vld [vmem:[%s679 + $0x80] sm:$0xff]
        %v1992 = vld [vmem:[%s679 + $0x88] sm:$0xff]
        %v1993 = vld [vmem:[%s679 + $0x90] sm:$0xff]
        %v1994 = vld [vmem:[%s679 + $0x98] sm:$0xff]
        %v1995 = vld [vmem:[%s679 + $0xa0] sm:$0xff]
        %v1996 = vld [vmem:[%s679 + $0xa8] sm:$0xff]
        %v1997 = vld [vmem:[%s679 + $0xb0] sm:$0xff]
        %v1998 = vld [vmem:[%s679 + $0xb8] sm:$0xff]
        %v1999 = vld [vmem:[%s679 + $0xc0] sm:$0xff]
        %v2000 = vld [vmem:[%s679 + $0xc8] sm:$0xff]
        %v2001 = vld [vmem:[%s679 + $0xd0] sm:$0xff]
        %v2002 = vld [vmem:[%s679 + $0xd8] sm:$0xff]
        %v2003 = vld [vmem:[%s679 + $0xe0] sm:$0xff]
        %v2004 = vld [vmem:[%s679 + $0xe8] sm:$0xff]
        %v2005 = vld [vmem:[%s679 + $0xf0] sm:$0xff]
        %v2006 = vld [vmem:[%s679 + $0xf8] sm:$0xff]
        %v2007 = vld [vmem:[%s679 + $0x100] sm:$0xff]
        %v2008 = vld [vmem:[%s679 + $0x108] sm:$0xff]
        %v2009 = vld [vmem:[%s679 + $0x110] sm:$0xff]
        %v2010 = vld [vmem:[%s679 + $0x118] sm:$0xff]
        %v2011 = vld [vmem:[%s679 + $0x120] sm:$0xff]
        %v2012 = vld [vmem:[%s679 + $0x128] sm:$0xff]
        %v2013 = vld [vmem:[%s679 + $0x130] sm:$0xff]
        %v2014 = vld [vmem:[%s679 + $0x138] sm:$0xff]
        %v2015 = vld [vmem:[%s679 + $0x140] sm:$0xff]
        %v2016 = vld [vmem:[%s679 + $0x148] sm:$0xff]
        %v2017 = vld [vmem:[%s679 + $0x150] sm:$0xff]
        %v2018 = vld [vmem:[%s679 + $0x158] sm:$0xff]
        %v2019 = vld [vmem:[%s679 + $0x160] sm:$0xff]
        %v2020 = vld [vmem:[%s679 + $0x168] sm:$0xff]
        %v2021 = vld [vmem:[%s679 + $0x170] sm:$0xff]
        %v2022 = vld [vmem:[%s679 + $0x178] sm:$0xff]
        %v2023 = vld [vmem:[%s679 + $0x180] sm:$0xff]
        %v2024 = vld [vmem:[%s679 + $0x188] sm:$0xff]
        %v2025 = vld [vmem:[%s679 + $0x190] sm:$0xff]
        %v2026 = vld [vmem:[%s679 + $0x198] sm:$0xff]
        %v2027 = vld [vmem:[%s679 + $0x1a0] sm:$0xff]
        %v2028 = vld [vmem:[%s679 + $0x1a8] sm:$0xff]
        %v2029 = vld [vmem:[%s679 + $0x1b0] sm:$0xff]
        %v2030 = vld [vmem:[%s679 + $0x1b8] sm:$0xff]
        %v2031 = vld [vmem:[%s679 + $0x1c0] sm:$0xff]
        %v2032 = vld [vmem:[%s679 + $0x1c8] sm:$0xff]
        %v2033 = vld [vmem:[%s679 + $0x1d0] sm:$0xff]
        %v2034 = vld [vmem:[%s679 + $0x1d8] sm:$0xff]
        %v2035 = vld [vmem:[%s679 + $0x1e0] sm:$0xff]
        %v2036 = vld [vmem:[%s679 + $0x1e8] sm:$0xff]
        %v2037 = vld [vmem:[%s679 + $0x1f0] sm:$0xff]
        %v2038 = vld [vmem:[%s679 + $0x1f8] sm:$0xff]
        %v2039 = vmul.f32 %v1719, %v1975
        %v2040 = vmul.f32 %v1751, %v1976
        %v2041 = vmul.f32 %v1720, %v1977
        %v2042 = vmul.f32 %v1752, %v1978
        %v2043 = vmul.f32 %v1721, %v1979
        %v2044 = vmul.f32 %v1753, %v1980
        %v2045 = vmul.f32 %v1722, %v1981
        %v2046 = vmul.f32 %v1754, %v1982
        %v2047 = vmul.f32 %v1723, %v1983
        %v2048 = vmul.f32 %v1755, %v1984
        %v2049 = vmul.f32 %v1724, %v1985
        %v2050 = vmul.f32 %v1756, %v1986
        %v2051 = vmul.f32 %v1725, %v1987
        %v2052 = vmul.f32 %v1757, %v1988
        %v2053 = vmul.f32 %v1726, %v1989
        %v2054 = vmul.f32 %v1758, %v1990
        %v2055 = vmul.f32 %v1727, %v1991
        %v2056 = vmul.f32 %v1759, %v1992
        %v2057 = vmul.f32 %v1728, %v1993
        %v2058 = vmul.f32 %v1760, %v1994
        %v2059 = vmul.f32 %v1729, %v1995
        %v2060 = vmul.f32 %v1761, %v1996
        %v2061 = vmul.f32 %v1730, %v1997
        %v2062 = vmul.f32 %v1762, %v1998
        %v2063 = vmul.f32 %v1731, %v1999
        %v2064 = vmul.f32 %v1763, %v2000
        %v2065 = vmul.f32 %v1732, %v2001
        %v2066 = vmul.f32 %v1764, %v2002
        %v2067 = vmul.f32 %v1733, %v2003
        %v2068 = vmul.f32 %v1765, %v2004
        %v2069 = vmul.f32 %v1734, %v2005
        %v2070 = vmul.f32 %v1766, %v2006
        %v2071 = vmul.f32 %v1735, %v2007
        %v2072 = vmul.f32 %v1767, %v2008
        %v2073 = vmul.f32 %v1736, %v2009
        %v2074 = vmul.f32 %v1768, %v2010
        %v2075 = vmul.f32 %v1737, %v2011
        %v2076 = vmul.f32 %v1769, %v2012
        %v2077 = vmul.f32 %v1738, %v2013
        %v2078 = vmul.f32 %v1770, %v2014
        %v2079 = vmul.f32 %v1739, %v2015
        %v2080 = vmul.f32 %v1771, %v2016
        %v2081 = vmul.f32 %v1740, %v2017
        %v2082 = vmul.f32 %v1772, %v2018
        %v2083 = vmul.f32 %v1741, %v2019
        %v2084 = vmul.f32 %v1773, %v2020
        %v2085 = vmul.f32 %v1742, %v2021
        %v2086 = vmul.f32 %v1774, %v2022
        %v2087 = vmul.f32 %v1743, %v2023
        %v2088 = vmul.f32 %v1775, %v2024
        %v2089 = vmul.f32 %v1744, %v2025
        %v2090 = vmul.f32 %v1776, %v2026
        %v2091 = vmul.f32 %v1745, %v2027
        %v2092 = vmul.f32 %v1777, %v2028
        %v2093 = vmul.f32 %v1746, %v2029
        %v2094 = vmul.f32 %v1778, %v2030
        %v2095 = vmul.f32 %v1747, %v2031
        %v2096 = vmul.f32 %v1779, %v2032
        %v2097 = vmul.f32 %v1748, %v2033
        %v2098 = vmul.f32 %v1780, %v2034
        %v2099 = vmul.f32 %v1749, %v2035
        %v2100 = vmul.f32 %v1781, %v2036
        %v2101 = vmul.f32 %v1750, %v2037
        %v2102 = vmul.f32 %v1782, %v2038
        %v2103 = vadd.f32 %v1911, %v2039
        %v2104 = vadd.f32 %v1912, %v2040
        %v2105 = vadd.f32 %v1913, %v2041
        %v2106 = vadd.f32 %v1914, %v2042
        %v2107 = vadd.f32 %v1915, %v2043
        %v2108 = vadd.f32 %v1916, %v2044
        %v2109 = vadd.f32 %v1917, %v2045
        %v2110 = vadd.f32 %v1918, %v2046
        %v2111 = vadd.f32 %v1919, %v2047
        %v2112 = vadd.f32 %v1920, %v2048
        %v2113 = vadd.f32 %v1921, %v2049
        %v2114 = vadd.f32 %v1922, %v2050
        %v2115 = vadd.f32 %v1923, %v2051
        %v2116 = vadd.f32 %v1924, %v2052
        %v2117 = vadd.f32 %v1925, %v2053
        %v2118 = vadd.f32 %v1926, %v2054
        %v2119 = vadd.f32 %v1927, %v2055
        %v2120 = vadd.f32 %v1928, %v2056
        %v2121 = vadd.f32 %v1929, %v2057
        %v2122 = vadd.f32 %v1930, %v2058
        %v2123 = vadd.f32 %v1931, %v2059
        %v2124 = vadd.f32 %v1932, %v2060
        %v2125 = vadd.f32 %v1933, %v2061
        %v2126 = vadd.f32 %v1934, %v2062
        %v2127 = vadd.f32 %v1935, %v2063
        %v2128 = vadd.f32 %v1936, %v2064
        %v2129 = vadd.f32 %v1937, %v2065
        %v2130 = vadd.f32 %v1938, %v2066
        %v2131 = vadd.f32 %v1939, %v2067
        %v2132 = vadd.f32 %v1940, %v2068
        %v2133 = vadd.f32 %v1941, %v2069
        %v2134 = vadd.f32 %v1942, %v2070
        %v2135 = vadd.f32 %v1943, %v2071
        %v2136 = vadd.f32 %v1944, %v2072
        %v2137 = vadd.f32 %v1945, %v2073
        %v2138 = vadd.f32 %v1946, %v2074
        %v2139 = vadd.f32 %v1947, %v2075
        %v2140 = vadd.f32 %v1948, %v2076
        %v2141 = vadd.f32 %v1949, %v2077
        %v2142 = vadd.f32 %v1950, %v2078
        %v2143 = vadd.f32 %v1951, %v2079
        %v2144 = vadd.f32 %v1952, %v2080
        %v2145 = vadd.f32 %v1953, %v2081
        %v2146 = vadd.f32 %v1954, %v2082
        %v2147 = vadd.f32 %v1955, %v2083
        %v2148 = vadd.f32 %v1956, %v2084
        %v2149 = vadd.f32 %v1957, %v2085
        %v2150 = vadd.f32 %v1958, %v2086
        %v2151 = vadd.f32 %v1959, %v2087
        %v2152 = vadd.f32 %v1960, %v2088
        %v2153 = vadd.f32 %v1961, %v2089
        %v2154 = vadd.f32 %v1962, %v2090
        %v2155 = vadd.f32 %v1963, %v2091
        %v2156 = vadd.f32 %v1964, %v2092
        %v2157 = vadd.f32 %v1965, %v2093
        %v2158 = vadd.f32 %v1966, %v2094
        %v2159 = vadd.f32 %v1967, %v2095
        %v2160 = vadd.f32 %v1968, %v2096
        %v2161 = vadd.f32 %v1969, %v2097
        %v2162 = vadd.f32 %v1970, %v2098
        %v2163 = vadd.f32 %v1971, %v2099
        %v2164 = vadd.f32 %v1972, %v2100
        %v2165 = vadd.f32 %v1973, %v2101
        %v2166 = vadd.f32 %v1974, %v2102
        %v2167 = vpack.c.bf16 %v2105, %v2103
        %v2168 = vpack.c.bf16 %v2109, %v2107
        %v2169 = vpack.c.bf16 %v2113, %v2111
        %v2170 = vpack.c.bf16 %v2117, %v2115
        %v2171 = vpack.c.bf16 %v2121, %v2119
        %v2172 = vpack.c.bf16 %v2125, %v2123
        %v2173 = vpack.c.bf16 %v2129, %v2127
        %v2174 = vpack.c.bf16 %v2133, %v2131
        %v2175 = vpack.c.bf16 %v2137, %v2135
        %v2176 = vpack.c.bf16 %v2141, %v2139
        %v2177 = vpack.c.bf16 %v2145, %v2143
        %v2178 = vpack.c.bf16 %v2149, %v2147
        %v2179 = vpack.c.bf16 %v2153, %v2151
        %v2180 = vpack.c.bf16 %v2157, %v2155
        %v2181 = vpack.c.bf16 %v2161, %v2159
        %v2182 = vpack.c.bf16 %v2165, %v2163
        %v2199 = vunpack.c.l.b16 %v2167
        %v2200 = vunpack.c.h.b16 %v2167
        %v2201 = vunpack.c.l.b16 %v2168
        %v2202 = vunpack.c.h.b16 %v2168
        %v2203 = vunpack.c.l.b16 %v2169
        %v2204 = vunpack.c.h.b16 %v2169
        %v2205 = vunpack.c.l.b16 %v2170
        %v2206 = vunpack.c.h.b16 %v2170
        %v2207 = vunpack.c.l.b16 %v2171
        %v2208 = vunpack.c.h.b16 %v2171
        %v2209 = vunpack.c.l.b16 %v2172
        %v2210 = vunpack.c.h.b16 %v2172
        %v2211 = vunpack.c.l.b16 %v2173
        %v2212 = vunpack.c.h.b16 %v2173
        %v2213 = vunpack.c.l.b16 %v2174
        %v2214 = vunpack.c.h.b16 %v2174
        %v2215 = vunpack.c.l.b16 %v2175
        %v2216 = vunpack.c.h.b16 %v2175
        %v2217 = vunpack.c.l.b16 %v2176
        %v2218 = vunpack.c.h.b16 %v2176
        %v2219 = vunpack.c.l.b16 %v2177
        %v2220 = vunpack.c.h.b16 %v2177
        %v2221 = vunpack.c.l.b16 %v2178
        %v2222 = vunpack.c.h.b16 %v2178
        %v2223 = vunpack.c.l.b16 %v2179
        %v2224 = vunpack.c.h.b16 %v2179
        %v2225 = vunpack.c.l.b16 %v2180
        %v2226 = vunpack.c.h.b16 %v2180
        %v2227 = vunpack.c.l.b16 %v2181
        %v2228 = vunpack.c.h.b16 %v2181
        %v2229 = vunpack.c.l.b16 %v2182
        %v2230 = vunpack.c.h.b16 %v2182
        %v2231 = vpack.c.b16 %v2199, %v2199
        %v2232 = vpack.c.b16 %v2200, %v2200
        %v2233 = vpack.c.b16 %v2201, %v2201
        %v2234 = vpack.c.b16 %v2202, %v2202
        %v2235 = vpack.c.b16 %v2203, %v2203
        %v2236 = vpack.c.b16 %v2204, %v2204
        %v2237 = vpack.c.b16 %v2205, %v2205
        %v2238 = vpack.c.b16 %v2206, %v2206
        %v2239 = vpack.c.b16 %v2207, %v2207
        %v2240 = vpack.c.b16 %v2208, %v2208
        %v2241 = vpack.c.b16 %v2209, %v2209
        %v2242 = vpack.c.b16 %v2210, %v2210
        %v2243 = vpack.c.b16 %v2211, %v2211
        %v2244 = vpack.c.b16 %v2212, %v2212
        %v2245 = vpack.c.b16 %v2213, %v2213
        %v2246 = vpack.c.b16 %v2214, %v2214
        %v2247 = vpack.c.b16 %v2215, %v2215
        %v2248 = vpack.c.b16 %v2216, %v2216
        %v2249 = vpack.c.b16 %v2217, %v2217
        %v2250 = vpack.c.b16 %v2218, %v2218
        %v2251 = vpack.c.b16 %v2219, %v2219
        %v2252 = vpack.c.b16 %v2220, %v2220
        %v2253 = vpack.c.b16 %v2221, %v2221
        %v2254 = vpack.c.b16 %v2222, %v2222
        %v2255 = vpack.c.b16 %v2223, %v2223
        %v2256 = vpack.c.b16 %v2224, %v2224
        %v2257 = vpack.c.b16 %v2225, %v2225
        %v2258 = vpack.c.b16 %v2226, %v2226
        %v2259 = vpack.c.b16 %v2227, %v2227
        %v2260 = vpack.c.b16 %v2228, %v2228
        %v2261 = vpack.c.b16 %v2229, %v2229
        %v2262 = vpack.c.b16 %v2230, %v2230
        %2295 = vst [vmem:[%s782] sm:$0xf] %v2231
        %2296 = vst [vmem:[%s782 + $0x4] sm:$0xf] %v2232
        %2297 = vst [vmem:[%s782 + $0x8] sm:$0xf] %v2233
        %2298 = vst [vmem:[%s782 + $0xc] sm:$0xf] %v2234
        %2299 = vst [vmem:[%s782 + $0x10] sm:$0xf] %v2235
        %2300 = vst [vmem:[%s782 + $0x14] sm:$0xf] %v2236
        %2301 = vst [vmem:[%s782 + $0x18] sm:$0xf] %v2237
        %2302 = vst [vmem:[%s782 + $0x1c] sm:$0xf] %v2238
        %2303 = vst [vmem:[%s782 + $0x20] sm:$0xf] %v2239
        %2304 = vst [vmem:[%s782 + $0x24] sm:$0xf] %v2240
        %2305 = vst [vmem:[%s782 + $0x28] sm:$0xf] %v2241
        %2306 = vst [vmem:[%s782 + $0x2c] sm:$0xf] %v2242
        %2307 = vst [vmem:[%s782 + $0x30] sm:$0xf] %v2243
        %2308 = vst [vmem:[%s782 + $0x34] sm:$0xf] %v2244
        %2309 = vst [vmem:[%s782 + $0x38] sm:$0xf] %v2245
        %2310 = vst [vmem:[%s782 + $0x3c] sm:$0xf] %v2246
        %2311 = vst [vmem:[%s782 + $0x40] sm:$0xf] %v2247
        %2312 = vst [vmem:[%s782 + $0x44] sm:$0xf] %v2248
        %2313 = vst [vmem:[%s782 + $0x48] sm:$0xf] %v2249
        %2314 = vst [vmem:[%s782 + $0x4c] sm:$0xf] %v2250
        %2315 = vst [vmem:[%s782 + $0x50] sm:$0xf] %v2251
        %2316 = vst [vmem:[%s782 + $0x54] sm:$0xf] %v2252
        %2317 = vst [vmem:[%s782 + $0x58] sm:$0xf] %v2253
        %2318 = vst [vmem:[%s782 + $0x5c] sm:$0xf] %v2254
        %2319 = vst [vmem:[%s782 + $0x60] sm:$0xf] %v2255
        %2320 = vst [vmem:[%s782 + $0x64] sm:$0xf] %v2256
        %2321 = vst [vmem:[%s782 + $0x68] sm:$0xf] %v2257
        %2322 = vst [vmem:[%s782 + $0x6c] sm:$0xf] %v2258
        %2323 = vst [vmem:[%s782 + $0x70] sm:$0xf] %v2259
        %2324 = vst [vmem:[%s782 + $0x74] sm:$0xf] %v2260
        %2325 = vst [vmem:[%s782 + $0x78] sm:$0xf] %v2261
        %2326 = vst [vmem:[%s782 + $0x7c] sm:$0xf] %v2262
        %v2327 = vpack.c.bf16 %v2106, %v2104
        %v2328 = vpack.c.bf16 %v2110, %v2108
        %v2329 = vpack.c.bf16 %v2114, %v2112
        %v2330 = vpack.c.bf16 %v2118, %v2116
        %v2331 = vpack.c.bf16 %v2122, %v2120
        %v2332 = vpack.c.bf16 %v2126, %v2124
        %v2333 = vpack.c.bf16 %v2130, %v2128
        %v2334 = vpack.c.bf16 %v2134, %v2132
        %v2335 = vpack.c.bf16 %v2138, %v2136
        %v2336 = vpack.c.bf16 %v2142, %v2140
        %v2337 = vpack.c.bf16 %v2146, %v2144
        %v2338 = vpack.c.bf16 %v2150, %v2148
        %v2339 = vpack.c.bf16 %v2154, %v2152
        %v2340 = vpack.c.bf16 %v2158, %v2156
        %v2341 = vpack.c.bf16 %v2162, %v2160
        %v2342 = vpack.c.bf16 %v2166, %v2164
        %v2359 = vunpack.c.l.b16 %v2327
        %v2360 = vunpack.c.h.b16 %v2327
        %v2361 = vunpack.c.l.b16 %v2328
        %v2362 = vunpack.c.h.b16 %v2328
        %v2363 = vunpack.c.l.b16 %v2329
        %v2364 = vunpack.c.h.b16 %v2329
        %v2365 = vunpack.c.l.b16 %v2330
        %v2366 = vunpack.c.h.b16 %v2330
        %v2367 = vunpack.c.l.b16 %v2331
        %v2368 = vunpack.c.h.b16 %v2331
        %v2369 = vunpack.c.l.b16 %v2332
        %v2370 = vunpack.c.h.b16 %v2332
        %v2371 = vunpack.c.l.b16 %v2333
        %v2372 = vunpack.c.h.b16 %v2333
        %v2373 = vunpack.c.l.b16 %v2334
        %v2374 = vunpack.c.h.b16 %v2334
        %v2375 = vunpack.c.l.b16 %v2335
        %v2376 = vunpack.c.h.b16 %v2335
        %v2377 = vunpack.c.l.b16 %v2336
        %v2378 = vunpack.c.h.b16 %v2336
        %v2379 = vunpack.c.l.b16 %v2337
        %v2380 = vunpack.c.h.b16 %v2337
        %v2381 = vunpack.c.l.b16 %v2338
        %v2382 = vunpack.c.h.b16 %v2338
        %v2383 = vunpack.c.l.b16 %v2339
        %v2384 = vunpack.c.h.b16 %v2339
        %v2385 = vunpack.c.l.b16 %v2340
        %v2386 = vunpack.c.h.b16 %v2340
        %v2387 = vunpack.c.l.b16 %v2341
        %v2388 = vunpack.c.h.b16 %v2341
        %v2389 = vunpack.c.l.b16 %v2342
        %v2390 = vunpack.c.h.b16 %v2342
        %v2391 = vpack.c.b16 %v2359, %v2359
        %v2392 = vpack.c.b16 %v2360, %v2360
        %v2393 = vpack.c.b16 %v2361, %v2361
        %v2394 = vpack.c.b16 %v2362, %v2362
        %v2395 = vpack.c.b16 %v2363, %v2363
        %v2396 = vpack.c.b16 %v2364, %v2364
        %v2397 = vpack.c.b16 %v2365, %v2365
        %v2398 = vpack.c.b16 %v2366, %v2366
        %v2399 = vpack.c.b16 %v2367, %v2367
        %v2400 = vpack.c.b16 %v2368, %v2368
        %v2401 = vpack.c.b16 %v2369, %v2369
        %v2402 = vpack.c.b16 %v2370, %v2370
        %v2403 = vpack.c.b16 %v2371, %v2371
        %v2404 = vpack.c.b16 %v2372, %v2372
        %v2405 = vpack.c.b16 %v2373, %v2373
        %v2406 = vpack.c.b16 %v2374, %v2374
        %v2407 = vpack.c.b16 %v2375, %v2375
        %v2408 = vpack.c.b16 %v2376, %v2376
        %v2409 = vpack.c.b16 %v2377, %v2377
        %v2410 = vpack.c.b16 %v2378, %v2378
        %v2411 = vpack.c.b16 %v2379, %v2379
        %v2412 = vpack.c.b16 %v2380, %v2380
        %v2413 = vpack.c.b16 %v2381, %v2381
        %v2414 = vpack.c.b16 %v2382, %v2382
        %v2415 = vpack.c.b16 %v2383, %v2383
        %v2416 = vpack.c.b16 %v2384, %v2384
        %v2417 = vpack.c.b16 %v2385, %v2385
        %v2418 = vpack.c.b16 %v2386, %v2386
        %v2419 = vpack.c.b16 %v2387, %v2387
        %v2420 = vpack.c.b16 %v2388, %v2388
        %v2421 = vpack.c.b16 %v2389, %v2389
        %v2422 = vpack.c.b16 %v2390, %v2390
        %s2455 = scalar_lea.vmem %s782, 128 [#allocation16]
        %2456 = vst [vmem:[%s2455] sm:$0xf] %v2391
        %2457 = vst [vmem:[%s2455 + $0x4] sm:$0xf] %v2392
        %2458 = vst [vmem:[%s2455 + $0x8] sm:$0xf] %v2393
        %2459 = vst [vmem:[%s2455 + $0xc] sm:$0xf] %v2394
        %2460 = vst [vmem:[%s2455 + $0x10] sm:$0xf] %v2395
        %2461 = vst [vmem:[%s2455 + $0x14] sm:$0xf] %v2396
        %2462 = vst [vmem:[%s2455 + $0x18] sm:$0xf] %v2397
        %2463 = vst [vmem:[%s2455 + $0x1c] sm:$0xf] %v2398
        %2464 = vst [vmem:[%s2455 + $0x20] sm:$0xf] %v2399
        %2465 = vst [vmem:[%s2455 + $0x24] sm:$0xf] %v2400
        %2466 = vst [vmem:[%s2455 + $0x28] sm:$0xf] %v2401
        %2467 = vst [vmem:[%s2455 + $0x2c] sm:$0xf] %v2402
        %2468 = vst [vmem:[%s2455 + $0x30] sm:$0xf] %v2403
        %2469 = vst [vmem:[%s2455 + $0x34] sm:$0xf] %v2404
        %2470 = vst [vmem:[%s2455 + $0x38] sm:$0xf] %v2405
        %2471 = vst [vmem:[%s2455 + $0x3c] sm:$0xf] %v2406
        %2472 = vst [vmem:[%s2455 + $0x40] sm:$0xf] %v2407
        %2473 = vst [vmem:[%s2455 + $0x44] sm:$0xf] %v2408
        %2474 = vst [vmem:[%s2455 + $0x48] sm:$0xf] %v2409
        %2475 = vst [vmem:[%s2455 + $0x4c] sm:$0xf] %v2410
        %2476 = vst [vmem:[%s2455 + $0x50] sm:$0xf] %v2411
        %2477 = vst [vmem:[%s2455 + $0x54] sm:$0xf] %v2412
        %2478 = vst [vmem:[%s2455 + $0x58] sm:$0xf] %v2413
        %2479 = vst [vmem:[%s2455 + $0x5c] sm:$0xf] %v2414
        %2480 = vst [vmem:[%s2455 + $0x60] sm:$0xf] %v2415
        %2481 = vst [vmem:[%s2455 + $0x64] sm:$0xf] %v2416
        %2482 = vst [vmem:[%s2455 + $0x68] sm:$0xf] %v2417
        %2483 = vst [vmem:[%s2455 + $0x6c] sm:$0xf] %v2418
        %2484 = vst [vmem:[%s2455 + $0x70] sm:$0xf] %v2419
        %2485 = vst [vmem:[%s2455 + $0x74] sm:$0xf] %v2420
        %2486 = vst [vmem:[%s2455 + $0x78] sm:$0xf] %v2421
        %2487 = vst [vmem:[%s2455 + $0x7c] sm:$0xf] %v2422
        %v2488 = vld [vmem:[%s697] sm:$0xff]
        %v2489 = vld [vmem:[%s697 + $0x8] sm:$0xff]
        %v2490 = vld [vmem:[%s697 + $0x10] sm:$0xff]
        %v2491 = vld [vmem:[%s697 + $0x18] sm:$0xff]
        %v2492 = vld [vmem:[%s697 + $0x20] sm:$0xff]
        %v2493 = vld [vmem:[%s697 + $0x28] sm:$0xff]
        %v2494 = vld [vmem:[%s697 + $0x30] sm:$0xff]
        %v2495 = vld [vmem:[%s697 + $0x38] sm:$0xff]
        %v2496 = vld [vmem:[%s697 + $0x40] sm:$0xff]
        %v2497 = vld [vmem:[%s697 + $0x48] sm:$0xff]
        %v2498 = vld [vmem:[%s697 + $0x50] sm:$0xff]
        %v2499 = vld [vmem:[%s697 + $0x58] sm:$0xff]
        %v2500 = vld [vmem:[%s697 + $0x60] sm:$0xff]
        %v2501 = vld [vmem:[%s697 + $0x68] sm:$0xff]
        %v2502 = vld [vmem:[%s697 + $0x70] sm:$0xff]
        %v2503 = vld [vmem:[%s697 + $0x78] sm:$0xff]
        %2504 = vmatprep.subr.mxu0 0.0
        %2505 = vmatpush1.msra.mxu0 %v2488
        %2506 = vmatprep.subr.mxu0 0.0
        %2507 = vmatpush1.msra.mxu0 %v2489
        %2508 = vmatprep.subr.mxu0 0.0
        %2509 = vmatpush1.msra.mxu0 %v2490
        %2510 = vmatprep.subr.mxu0 0.0
        %2511 = vmatpush1.msra.mxu0 %v2491
        %2512 = vmatprep.subr.mxu0 0.0
        %2513 = vmatpush1.msra.mxu0 %v2492
        %2514 = vmatprep.subr.mxu0 0.0
        %2515 = vmatpush1.msra.mxu0 %v2493
        %2516 = vmatprep.subr.mxu0 0.0
        %2517 = vmatpush1.msra.mxu0 %v2494
        %2518 = vmatprep.subr.mxu0 0.0
        %2519 = vmatpush1.msra.mxu0 %v2495
        %2520 = vmatprep.subr.mxu0 0.0
        %2521 = vmatpush1.msra.mxu0 %v2496
        %2522 = vmatprep.subr.mxu0 0.0
        %2523 = vmatpush1.msra.mxu0 %v2497
        %2524 = vmatprep.subr.mxu0 0.0
        %2525 = vmatpush1.msra.mxu0 %v2498
        %2526 = vmatprep.subr.mxu0 0.0
        %2527 = vmatpush1.msra.mxu0 %v2499
        %2528 = vmatprep.subr.mxu0 0.0
        %2529 = vmatpush1.msra.mxu0 %v2500
        %2530 = vmatprep.subr.mxu0 0.0
        %2531 = vmatpush1.msra.mxu0 %v2501
        %2532 = vmatprep.subr.mxu0 0.0
        %2533 = vmatpush1.msra.mxu0 %v2502
        %2534 = vmatprep.subr.mxu0 0.0
        %2535 = vmatpush1.msra.mxu0 %v2503
        %2536 = vmatprep.subr.mxu0 0.0
        %2537 = vmatpush1.msra.mxu0 0.0
        %2538 = vmatprep.subr.mxu0 0.0
        %2539 = vmatpush1.msra.mxu0 0.0
        %2540 = vmatprep.subr.mxu0 0.0
        %2541 = vmatpush1.msra.mxu0 0.0
        %2542 = vmatprep.subr.mxu0 0.0
        %2543 = vmatpush1.msra.mxu0 0.0
        %2544 = vmatprep.subr.mxu0 0.0
        %2545 = vmatpush1.msra.mxu0 0.0
        %2546 = vmatprep.subr.mxu0 0.0
        %2547 = vmatpush1.msra.mxu0 0.0
        %2548 = vmatprep.subr.mxu0 0.0
        %2549 = vmatpush1.msra.mxu0 0.0
        %2550 = vmatprep.subr.mxu0 0.0
        %2551 = vmatpush1.msra.mxu0 0.0
        %2552 = vmatprep.subr.mxu0 0.0
        %2553 = vmatpush1.msra.mxu0 0.0
        %2554 = vmatprep.subr.mxu0 0.0
        %2555 = vmatpush1.msra.mxu0 0.0
        %2556 = vmatprep.subr.mxu0 0.0
        %2557 = vmatpush1.msra.mxu0 0.0
        %2558 = vmatprep.subr.mxu0 0.0
        %2559 = vmatpush1.msra.mxu0 0.0
        %2560 = vmatprep.subr.mxu0 0.0
        %2561 = vmatpush1.msra.mxu0 0.0
        %2562 = vmatprep.subr.mxu0 0.0
        %2563 = vmatpush1.msra.mxu0 0.0
        %2564 = vmatprep.subr.mxu0 0.0
        %2565 = vmatpush1.msra.mxu0 0.0
        %2566 = vmatprep.subr.mxu0 0.0
        %2567 = vmatpush1.msra.mxu0 0.0
        %2568 = vmatprep.mubr.f32.mxu0 0.0
        %2569 = vmatmul.mubr.f32.gmra.mrb[0].mxu0 %v1139
        %v2570 = vpop.f32.mrb[0].mxu0
        %v2571 = vadd.f32 0.0, %v2570
        %v2572 = vpop.f32.mrb[0].mxu0
        %2573 = vmatprep.mubr.f32.mxu0 0.0
        %2574 = vmatmul.mubr.f32.gmra.mrb[0].mxu0 %v1140
        %v2575 = vpop.f32.mrb[0].mxu0
        %v2576 = vadd.f32 0.0, %v2575
        %v2577 = vpop.f32.mrb[0].mxu0
        %2578 = vmatprep.mubr.f32.mxu0 0.0
        %2579 = vmatmul.mubr.f32.gmra.mrb[0].mxu0 %v1141
        %v2580 = vpop.f32.mrb[0].mxu0
        %v2581 = vadd.f32 0.0, %v2580
        %v2582 = vpop.f32.mrb[0].mxu0
        %2583 = vmatprep.mubr.f32.mxu0 0.0
        %2584 = vmatmul.mubr.f32.gmra.mrb[0].mxu0 %v1142
        %v2585 = vpop.f32.mrb[0].mxu0
        %v2586 = vadd.f32 0.0, %v2585
        %v2587 = vpop.f32.mrb[0].mxu0
        %2588 = vmatprep.mubr.f32.mxu0 0.0
        %2589 = vmatmul.mubr.f32.gmra.mrb[0].mxu0 %v1143
        %v2590 = vpop.f32.mrb[0].mxu0
        %v2591 = vadd.f32 0.0, %v2590
        %v2592 = vpop.f32.mrb[0].mxu0
        %2593 = vmatprep.mubr.f32.mxu0 0.0
        %2594 = vmatmul.mubr.f32.gmra.mrb[0].mxu0 %v1144
        %v2595 = vpop.f32.mrb[0].mxu0
        %v2596 = vadd.f32 0.0, %v2595
        %v2597 = vpop.f32.mrb[0].mxu0
        %2598 = vmatprep.mubr.f32.mxu0 0.0
        %2599 = vmatmul.mubr.f32.gmra.mrb[0].mxu0 %v1145
        %v2600 = vpop.f32.mrb[0].mxu0
        %v2601 = vadd.f32 0.0, %v2600
        %v2602 = vpop.f32.mrb[0].mxu0
        %2603 = vmatprep.mubr.f32.mxu0 0.0
        %2604 = vmatmul.mubr.f32.gmra.mrb[0].mxu0 %v1146
        %v2605 = vpop.f32.mrb[0].mxu0
        %v2606 = vadd.f32 0.0, %v2605
        %v2607 = vpop.f32.mrb[0].mxu0
        %2608 = vmatprep.mubr.f32.mxu0 0.0
        %2609 = vmatmul.mubr.f32.gmra.mrb[0].mxu0 %v1147
        %v2610 = vpop.f32.mrb[0].mxu0
        %v2611 = vadd.f32 0.0, %v2610
        %v2612 = vpop.f32.mrb[0].mxu0
        %2613 = vmatprep.mubr.f32.mxu0 0.0
        %2614 = vmatmul.mubr.f32.gmra.mrb[0].mxu0 %v1148
        %v2615 = vpop.f32.mrb[0].mxu0
        %v2616 = vadd.f32 0.0, %v2615
        %v2617 = vpop.f32.mrb[0].mxu0
        %2618 = vmatprep.mubr.f32.mxu0 0.0
        %2619 = vmatmul.mubr.f32.gmra.mrb[0].mxu0 %v1149
        %v2620 = vpop.f32.mrb[0].mxu0
        %v2621 = vadd.f32 0.0, %v2620
        %v2622 = vpop.f32.mrb[0].mxu0
        %2623 = vmatprep.mubr.f32.mxu0 0.0
        %2624 = vmatmul.mubr.f32.gmra.mrb[0].mxu0 %v1150
        %v2625 = vpop.f32.mrb[0].mxu0
        %v2626 = vadd.f32 0.0, %v2625
        %v2627 = vpop.f32.mrb[0].mxu0
        %2628 = vmatprep.mubr.f32.mxu0 0.0
        %2629 = vmatmul.mubr.f32.gmra.mrb[0].mxu0 %v1151
        %v2630 = vpop.f32.mrb[0].mxu0
        %v2631 = vadd.f32 0.0, %v2630
        %v2632 = vpop.f32.mrb[0].mxu0
        %2633 = vmatprep.mubr.f32.mxu0 0.0
        %2634 = vmatmul.mubr.f32.gmra.mrb[0].mxu0 %v1152
        %v2635 = vpop.f32.mrb[0].mxu0
        %v2636 = vadd.f32 0.0, %v2635
        %v2637 = vpop.f32.mrb[0].mxu0
        %2638 = vmatprep.mubr.f32.mxu0 0.0
        %2639 = vmatmul.mubr.f32.gmra.mrb[0].mxu0 %v1153
        %v2640 = vpop.f32.mrb[0].mxu0
        %v2641 = vadd.f32 0.0, %v2640
        %v2642 = vpop.f32.mrb[0].mxu0
        %2643 = vmatprep.mubr.f32.mxu0 0.0
        %2644 = vmatmul.mubr.f32.gmra.mrb[0].mxu0 %v1154
        %v2645 = vpop.f32.mrb[0].mxu0
        %v2646 = vadd.f32 0.0, %v2645
        %v2647 = vpop.f32.mrb[0].mxu0
        %2648 = vmatprep.mubr.f32.mxu0 0.0
        %2649 = vmatmul.mubr.f32.gmra.mrb[0].mxu0 %v1155
        %v2650 = vpop.f32.mrb[0].mxu0
        %v2651 = vadd.f32 0.0, %v2650
        %v2652 = vpop.f32.mrb[0].mxu0
        %2653 = vmatprep.mubr.f32.mxu0 0.0
        %2654 = vmatmul.mubr.f32.gmra.mrb[0].mxu0 %v1156
        %v2655 = vpop.f32.mrb[0].mxu0
        %v2656 = vadd.f32 0.0, %v2655
        %v2657 = vpop.f32.mrb[0].mxu0
        %2658 = vmatprep.mubr.f32.mxu0 0.0
        %2659 = vmatmul.mubr.f32.gmra.mrb[0].mxu0 %v1157
        %v2660 = vpop.f32.mrb[0].mxu0
        %v2661 = vadd.f32 0.0, %v2660
        %v2662 = vpop.f32.mrb[0].mxu0
        %2663 = vmatprep.mubr.f32.mxu0 0.0
        %2664 = vmatmul.mubr.f32.gmra.mrb[0].mxu0 %v1158
        %v2665 = vpop.f32.mrb[0].mxu0
        %v2666 = vadd.f32 0.0, %v2665
        %v2667 = vpop.f32.mrb[0].mxu0
        %2668 = vmatprep.mubr.f32.mxu0 0.0
        %2669 = vmatmul.mubr.f32.gmra.mrb[0].mxu0 %v1159
        %v2670 = vpop.f32.mrb[0].mxu0
        %v2671 = vadd.f32 0.0, %v2670
        %v2672 = vpop.f32.mrb[0].mxu0
        %2673 = vmatprep.mubr.f32.mxu0 0.0
        %2674 = vmatmul.mubr.f32.gmra.mrb[0].mxu0 %v1160
        %v2675 = vpop.f32.mrb[0].mxu0
        %v2676 = vadd.f32 0.0, %v2675
        %v2677 = vpop.f32.mrb[0].mxu0
        %2678 = vmatprep.mubr.f32.mxu0 0.0
        %2679 = vmatmul.mubr.f32.gmra.mrb[0].mxu0 %v1161
        %v2680 = vpop.f32.mrb[0].mxu0
        %v2681 = vadd.f32 0.0, %v2680
        %v2682 = vpop.f32.mrb[0].mxu0
        %2683 = vmatprep.mubr.f32.mxu0 0.0
        %2684 = vmatmul.mubr.f32.gmra.mrb[0].mxu0 %v1162
        %v2685 = vpop.f32.mrb[0].mxu0
        %v2686 = vadd.f32 0.0, %v2685
        %v2687 = vpop.f32.mrb[0].mxu0
        %2688 = vmatprep.mubr.f32.mxu0 0.0
        %2689 = vmatmul.mubr.f32.gmra.mrb[0].mxu0 %v1163
        %v2690 = vpop.f32.mrb[0].mxu0
        %v2691 = vadd.f32 0.0, %v2690
        %v2692 = vpop.f32.mrb[0].mxu0
        %2693 = vmatprep.mubr.f32.mxu0 0.0
        %2694 = vmatmul.mubr.f32.gmra.mrb[0].mxu0 %v1164
        %v2695 = vpop.f32.mrb[0].mxu0
        %v2696 = vadd.f32 0.0, %v2695
        %v2697 = vpop.f32.mrb[0].mxu0
        %2698 = vmatprep.mubr.f32.mxu0 0.0
        %2699 = vmatmul.mubr.f32.gmra.mrb[0].mxu0 %v1165
        %v2700 = vpop.f32.mrb[0].mxu0
        %v2701 = vadd.f32 0.0, %v2700
        %v2702 = vpop.f32.mrb[0].mxu0
        %2703 = vmatprep.mubr.f32.mxu0 0.0
        %2704 = vmatmul.mubr.f32.gmra.mrb[0].mxu0 %v1166
        %v2705 = vpop.f32.mrb[0].mxu0
        %v2706 = vadd.f32 0.0, %v2705
        %v2707 = vpop.f32.mrb[0].mxu0
        %2708 = vmatprep.mubr.f32.mxu0 0.0
        %2709 = vmatmul.mubr.f32.gmra.mrb[0].mxu0 %v1167
        %v2710 = vpop.f32.mrb[0].mxu0
        %v2711 = vadd.f32 0.0, %v2710
        %v2712 = vpop.f32.mrb[0].mxu0
        %2713 = vmatprep.mubr.f32.mxu0 0.0
        %2714 = vmatmul.mubr.f32.gmra.mrb[0].mxu0 %v1168
        %v2715 = vpop.f32.mrb[0].mxu0
        %v2716 = vadd.f32 0.0, %v2715
        %v2717 = vpop.f32.mrb[0].mxu0
        %2718 = vmatprep.mubr.f32.mxu0 0.0
        %2719 = vmatmul.mubr.f32.gmra.mrb[0].mxu0 %v1169
        %v2720 = vpop.f32.mrb[0].mxu0
        %v2721 = vadd.f32 0.0, %v2720
        %v2722 = vpop.f32.mrb[0].mxu0
        %2723 = vmatprep.mubr.f32.mxu0 0.0
        %2724 = vmatmul.mubr.f32.gmra.mrb[0].mxu0 %v1170
        %v2725 = vpop.f32.mrb[0].mxu0
        %v2726 = vadd.f32 0.0, %v2725
        %v2727 = vpop.f32.mrb[0].mxu0
        %2728 = vdwg.mxu0
        %v2729 = vld [vmem:[%s643] sm:$0xff]
        %v2730 = vld [vmem:[%s643 + $0x8] sm:$0xff]
        %v2731 = vld [vmem:[%s643 + $0x10] sm:$0xff]
        %v2732 = vld [vmem:[%s643 + $0x18] sm:$0xff]
        %v2733 = vld [vmem:[%s643 + $0x20] sm:$0xff]
        %v2734 = vld [vmem:[%s643 + $0x28] sm:$0xff]
        %v2735 = vld [vmem:[%s643 + $0x30] sm:$0xff]
        %v2736 = vld [vmem:[%s643 + $0x38] sm:$0xff]
        %v2737 = vld [vmem:[%s643 + $0x40] sm:$0xff]
        %v2738 = vld [vmem:[%s643 + $0x48] sm:$0xff]
        %v2739 = vld [vmem:[%s643 + $0x50] sm:$0xff]
        %v2740 = vld [vmem:[%s643 + $0x58] sm:$0xff]
        %v2741 = vld [vmem:[%s643 + $0x60] sm:$0xff]
        %v2742 = vld [vmem:[%s643 + $0x68] sm:$0xff]
        %v2743 = vld [vmem:[%s643 + $0x70] sm:$0xff]
        %v2744 = vld [vmem:[%s643 + $0x78] sm:$0xff]
        %v2745 = vld [vmem:[%s643 + $0x80] sm:$0xff]
        %v2746 = vld [vmem:[%s643 + $0x88] sm:$0xff]
        %v2747 = vld [vmem:[%s643 + $0x90] sm:$0xff]
        %v2748 = vld [vmem:[%s643 + $0x98] sm:$0xff]
        %v2749 = vld [vmem:[%s643 + $0xa0] sm:$0xff]
        %v2750 = vld [vmem:[%s643 + $0xa8] sm:$0xff]
        %v2751 = vld [vmem:[%s643 + $0xb0] sm:$0xff]
        %v2752 = vld [vmem:[%s643 + $0xb8] sm:$0xff]
        %v2753 = vld [vmem:[%s643 + $0xc0] sm:$0xff]
        %v2754 = vld [vmem:[%s643 + $0xc8] sm:$0xff]
        %v2755 = vld [vmem:[%s643 + $0xd0] sm:$0xff]
        %v2756 = vld [vmem:[%s643 + $0xd8] sm:$0xff]
        %v2757 = vld [vmem:[%s643 + $0xe0] sm:$0xff]
        %v2758 = vld [vmem:[%s643 + $0xe8] sm:$0xff]
        %v2759 = vld [vmem:[%s643 + $0xf0] sm:$0xff]
        %v2760 = vld [vmem:[%s643 + $0xf8] sm:$0xff]
        %v2761 = vmul.f32 %v2571, %v2729
        %v2762 = vmul.f32 %v2576, %v2730
        %v2763 = vmul.f32 %v2581, %v2731
        %v2764 = vmul.f32 %v2586, %v2732
        %v2765 = vmul.f32 %v2591, %v2733
        %v2766 = vmul.f32 %v2596, %v2734
        %v2767 = vmul.f32 %v2601, %v2735
        %v2768 = vmul.f32 %v2606, %v2736
        %v2769 = vmul.f32 %v2611, %v2737
        %v2770 = vmul.f32 %v2616, %v2738
        %v2771 = vmul.f32 %v2621, %v2739
        %v2772 = vmul.f32 %v2626, %v2740
        %v2773 = vmul.f32 %v2631, %v2741
        %v2774 = vmul.f32 %v2636, %v2742
        %v2775 = vmul.f32 %v2641, %v2743
        %v2776 = vmul.f32 %v2646, %v2744
        %v2777 = vmul.f32 %v2651, %v2745
        %v2778 = vmul.f32 %v2656, %v2746
        %v2779 = vmul.f32 %v2661, %v2747
        %v2780 = vmul.f32 %v2666, %v2748
        %v2781 = vmul.f32 %v2671, %v2749
        %v2782 = vmul.f32 %v2676, %v2750
        %v2783 = vmul.f32 %v2681, %v2751
        %v2784 = vmul.f32 %v2686, %v2752
        %v2785 = vmul.f32 %v2691, %v2753
        %v2786 = vmul.f32 %v2696, %v2754
        %v2787 = vmul.f32 %v2701, %v2755
        %v2788 = vmul.f32 %v2706, %v2756
        %v2789 = vmul.f32 %v2711, %v2757
        %v2790 = vmul.f32 %v2716, %v2758
        %v2791 = vmul.f32 %v2721, %v2759
        %v2792 = vmul.f32 %v2726, %v2760
        %2793 = vrot.lane.b32.xlu0 %v2571, 64
        %v2794 = vpop.permute.xlu0 %2793
        %2795 = vrot.lane.b32.xlu0 %v2576, 64
        %v2796 = vpop.permute.xlu0 %2795
        %2797 = vrot.lane.b32.xlu0 %v2581, 64
        %v2798 = vpop.permute.xlu0 %2797
        %2799 = vrot.lane.b32.xlu0 %v2586, 64
        %v2800 = vpop.permute.xlu0 %2799
        %2801 = vrot.lane.b32.xlu0 %v2591, 64
        %v2802 = vpop.permute.xlu0 %2801
        %2803 = vrot.lane.b32.xlu0 %v2596, 64
        %v2804 = vpop.permute.xlu0 %2803
        %2805 = vrot.lane.b32.xlu0 %v2601, 64
        %v2806 = vpop.permute.xlu0 %2805
        %2807 = vrot.lane.b32.xlu0 %v2606, 64
        %v2808 = vpop.permute.xlu0 %2807
        %2809 = vrot.lane.b32.xlu0 %v2611, 64
        %v2810 = vpop.permute.xlu0 %2809
        %2811 = vrot.lane.b32.xlu0 %v2616, 64
        %v2812 = vpop.permute.xlu0 %2811
        %2813 = vrot.lane.b32.xlu0 %v2621, 64
        %v2814 = vpop.permute.xlu0 %2813
        %2815 = vrot.lane.b32.xlu0 %v2626, 64
        %v2816 = vpop.permute.xlu0 %2815
        %2817 = vrot.lane.b32.xlu0 %v2631, 64
        %v2818 = vpop.permute.xlu0 %2817
        %2819 = vrot.lane.b32.xlu0 %v2636, 64
        %v2820 = vpop.permute.xlu0 %2819
        %2821 = vrot.lane.b32.xlu0 %v2641, 64
        %v2822 = vpop.permute.xlu0 %2821
        %2823 = vrot.lane.b32.xlu0 %v2646, 64
        %v2824 = vpop.permute.xlu0 %2823
        %2825 = vrot.lane.b32.xlu0 %v2651, 64
        %v2826 = vpop.permute.xlu0 %2825
        %2827 = vrot.lane.b32.xlu0 %v2656, 64
        %v2828 = vpop.permute.xlu0 %2827
        %2829 = vrot.lane.b32.xlu0 %v2661, 64
        %v2830 = vpop.permute.xlu0 %2829
        %2831 = vrot.lane.b32.xlu0 %v2666, 64
        %v2832 = vpop.permute.xlu0 %2831
        %2833 = vrot.lane.b32.xlu0 %v2671, 64
        %v2834 = vpop.permute.xlu0 %2833
        %2835 = vrot.lane.b32.xlu0 %v2676, 64
        %v2836 = vpop.permute.xlu0 %2835
        %2837 = vrot.lane.b32.xlu0 %v2681, 64
        %v2838 = vpop.permute.xlu0 %2837
        %2839 = vrot.lane.b32.xlu0 %v2686, 64
        %v2840 = vpop.permute.xlu0 %2839
        %2841 = vrot.lane.b32.xlu0 %v2691, 64
        %v2842 = vpop.permute.xlu0 %2841
        %2843 = vrot.lane.b32.xlu0 %v2696, 64
        %v2844 = vpop.permute.xlu0 %2843
        %2845 = vrot.lane.b32.xlu0 %v2701, 64
        %v2846 = vpop.permute.xlu0 %2845
        %2847 = vrot.lane.b32.xlu0 %v2706, 64
        %v2848 = vpop.permute.xlu0 %2847
        %2849 = vrot.lane.b32.xlu0 %v2711, 64
        %v2850 = vpop.permute.xlu0 %2849
        %2851 = vrot.lane.b32.xlu0 %v2716, 64
        %v2852 = vpop.permute.xlu0 %2851
        %2853 = vrot.lane.b32.xlu0 %v2721, 64
        %v2854 = vpop.permute.xlu0 %2853
        %2855 = vrot.lane.b32.xlu0 %v2726, 64
        %v2856 = vpop.permute.xlu0 %2855
        %v2857 = vld [vmem:[%s652] sm:$0xff]
        %v2858 = vld [vmem:[%s652 + $0x8] sm:$0xff]
        %v2859 = vld [vmem:[%s652 + $0x10] sm:$0xff]
        %v2860 = vld [vmem:[%s652 + $0x18] sm:$0xff]
        %v2861 = vld [vmem:[%s652 + $0x20] sm:$0xff]
        %v2862 = vld [vmem:[%s652 + $0x28] sm:$0xff]
        %v2863 = vld [vmem:[%s652 + $0x30] sm:$0xff]
        %v2864 = vld [vmem:[%s652 + $0x38] sm:$0xff]
        %v2865 = vld [vmem:[%s652 + $0x40] sm:$0xff]
        %v2866 = vld [vmem:[%s652 + $0x48] sm:$0xff]
        %v2867 = vld [vmem:[%s652 + $0x50] sm:$0xff]
        %v2868 = vld [vmem:[%s652 + $0x58] sm:$0xff]
        %v2869 = vld [vmem:[%s652 + $0x60] sm:$0xff]
        %v2870 = vld [vmem:[%s652 + $0x68] sm:$0xff]
        %v2871 = vld [vmem:[%s652 + $0x70] sm:$0xff]
        %v2872 = vld [vmem:[%s652 + $0x78] sm:$0xff]
        %v2873 = vld [vmem:[%s652 + $0x80] sm:$0xff]
        %v2874 = vld [vmem:[%s652 + $0x88] sm:$0xff]
        %v2875 = vld [vmem:[%s652 + $0x90] sm:$0xff]
        %v2876 = vld [vmem:[%s652 + $0x98] sm:$0xff]
        %v2877 = vld [vmem:[%s652 + $0xa0] sm:$0xff]
        %v2878 = vld [vmem:[%s652 + $0xa8] sm:$0xff]
        %v2879 = vld [vmem:[%s652 + $0xb0] sm:$0xff]
        %v2880 = vld [vmem:[%s652 + $0xb8] sm:$0xff]
        %v2881 = vld [vmem:[%s652 + $0xc0] sm:$0xff]
        %v2882 = vld [vmem:[%s652 + $0xc8] sm:$0xff]
        %v2883 = vld [vmem:[%s652 + $0xd0] sm:$0xff]
        %v2884 = vld [vmem:[%s652 + $0xd8] sm:$0xff]
        %v2885 = vld [vmem:[%s652 + $0xe0] sm:$0xff]
        %v2886 = vld [vmem:[%s652 + $0xe8] sm:$0xff]
        %v2887 = vld [vmem:[%s652 + $0xf0] sm:$0xff]
        %v2888 = vld [vmem:[%s652 + $0xf8] sm:$0xff]
        %v2889 = vmul.f32 %v2794, %v2857
        %v2890 = vmul.f32 %v2796, %v2858
        %v2891 = vmul.f32 %v2798, %v2859
        %v2892 = vmul.f32 %v2800, %v2860
        %v2893 = vmul.f32 %v2802, %v2861
        %v2894 = vmul.f32 %v2804, %v2862
        %v2895 = vmul.f32 %v2806, %v2863
        %v2896 = vmul.f32 %v2808, %v2864
        %v2897 = vmul.f32 %v2810, %v2865
        %v2898 = vmul.f32 %v2812, %v2866
        %v2899 = vmul.f32 %v2814, %v2867
        %v2900 = vmul.f32 %v2816, %v2868
        %v2901 = vmul.f32 %v2818, %v2869
        %v2902 = vmul.f32 %v2820, %v2870
        %v2903 = vmul.f32 %v2822, %v2871
        %v2904 = vmul.f32 %v2824, %v2872
        %v2905 = vmul.f32 %v2826, %v2873
        %v2906 = vmul.f32 %v2828, %v2874
        %v2907 = vmul.f32 %v2830, %v2875
        %v2908 = vmul.f32 %v2832, %v2876
        %v2909 = vmul.f32 %v2834, %v2877
        %v2910 = vmul.f32 %v2836, %v2878
        %v2911 = vmul.f32 %v2838, %v2879
        %v2912 = vmul.f32 %v2840, %v2880
        %v2913 = vmul.f32 %v2842, %v2881
        %v2914 = vmul.f32 %v2844, %v2882
        %v2915 = vmul.f32 %v2846, %v2883
        %v2916 = vmul.f32 %v2848, %v2884
        %v2917 = vmul.f32 %v2850, %v2885
        %v2918 = vmul.f32 %v2852, %v2886
        %v2919 = vmul.f32 %v2854, %v2887
        %v2920 = vmul.f32 %v2856, %v2888
        %v2921 = vadd.f32 %v2761, %v2889
        %v2922 = vadd.f32 %v2762, %v2890
        %v2923 = vadd.f32 %v2763, %v2891
        %v2924 = vadd.f32 %v2764, %v2892
        %v2925 = vadd.f32 %v2765, %v2893
        %v2926 = vadd.f32 %v2766, %v2894
        %v2927 = vadd.f32 %v2767, %v2895
        %v2928 = vadd.f32 %v2768, %v2896
        %v2929 = vadd.f32 %v2769, %v2897
        %v2930 = vadd.f32 %v2770, %v2898
        %v2931 = vadd.f32 %v2771, %v2899
        %v2932 = vadd.f32 %v2772, %v2900
        %v2933 = vadd.f32 %v2773, %v2901
        %v2934 = vadd.f32 %v2774, %v2902
        %v2935 = vadd.f32 %v2775, %v2903
        %v2936 = vadd.f32 %v2776, %v2904
        %v2937 = vadd.f32 %v2777, %v2905
        %v2938 = vadd.f32 %v2778, %v2906
        %v2939 = vadd.f32 %v2779, %v2907
        %v2940 = vadd.f32 %v2780, %v2908
        %v2941 = vadd.f32 %v2781, %v2909
        %v2942 = vadd.f32 %v2782, %v2910
        %v2943 = vadd.f32 %v2783, %v2911
        %v2944 = vadd.f32 %v2784, %v2912
        %v2945 = vadd.f32 %v2785, %v2913
        %v2946 = vadd.f32 %v2786, %v2914
        %v2947 = vadd.f32 %v2787, %v2915
        %v2948 = vadd.f32 %v2788, %v2916
        %v2949 = vadd.f32 %v2789, %v2917
        %v2950 = vadd.f32 %v2790, %v2918
        %v2951 = vadd.f32 %v2791, %v2919
        %v2952 = vadd.f32 %v2792, %v2920
        %v2953 = vpack.c.bf16 %v2922, %v2921
        %v2954 = vpack.c.bf16 %v2924, %v2923
        %v2955 = vpack.c.bf16 %v2926, %v2925
        %v2956 = vpack.c.bf16 %v2928, %v2927
        %v2957 = vpack.c.bf16 %v2930, %v2929
        %v2958 = vpack.c.bf16 %v2932, %v2931
        %v2959 = vpack.c.bf16 %v2934, %v2933
        %v2960 = vpack.c.bf16 %v2936, %v2935
        %v2961 = vpack.c.bf16 %v2938, %v2937
        %v2962 = vpack.c.bf16 %v2940, %v2939
        %v2963 = vpack.c.bf16 %v2942, %v2941
        %v2964 = vpack.c.bf16 %v2944, %v2943
        %v2965 = vpack.c.bf16 %v2946, %v2945
        %v2966 = vpack.c.bf16 %v2948, %v2947
        %v2967 = vpack.c.bf16 %v2950, %v2949
        %v2968 = vpack.c.bf16 %v2952, %v2951
        %v2985 = vunpack.c.l.b16 %v2953
        %v2986 = vunpack.c.h.b16 %v2953
        %v2987 = vunpack.c.l.b16 %v2954
        %v2988 = vunpack.c.h.b16 %v2954
        %v2989 = vunpack.c.l.b16 %v2955
        %v2990 = vunpack.c.h.b16 %v2955
        %v2991 = vunpack.c.l.b16 %v2956
        %v2992 = vunpack.c.h.b16 %v2956
        %v2993 = vunpack.c.l.b16 %v2957
        %v2994 = vunpack.c.h.b16 %v2957
        %v2995 = vunpack.c.l.b16 %v2958
        %v2996 = vunpack.c.h.b16 %v2958
        %v2997 = vunpack.c.l.b16 %v2959
        %v2998 = vunpack.c.h.b16 %v2959
        %v2999 = vunpack.c.l.b16 %v2960
        %v3000 = vunpack.c.h.b16 %v2960
        %v3001 = vunpack.c.l.b16 %v2961
        %v3002 = vunpack.c.h.b16 %v2961
        %v3003 = vunpack.c.l.b16 %v2962
        %v3004 = vunpack.c.h.b16 %v2962
        %v3005 = vunpack.c.l.b16 %v2963
        %v3006 = vunpack.c.h.b16 %v2963
        %v3007 = vunpack.c.l.b16 %v2964
        %v3008 = vunpack.c.h.b16 %v2964
        %v3009 = vunpack.c.l.b16 %v2965
        %v3010 = vunpack.c.h.b16 %v2965
        %v3011 = vunpack.c.l.b16 %v2966
        %v3012 = vunpack.c.h.b16 %v2966
        %v3013 = vunpack.c.l.b16 %v2967
        %v3014 = vunpack.c.h.b16 %v2967
        %v3015 = vunpack.c.l.b16 %v2968
        %v3016 = vunpack.c.h.b16 %v2968
        %v3017 = vpack.c.b16 %v2985, %v2985
        %v3018 = vpack.c.b16 %v2986, %v2986
        %v3019 = vpack.c.b16 %v2987, %v2987
        %v3020 = vpack.c.b16 %v2988, %v2988
        %v3021 = vpack.c.b16 %v2989, %v2989
        %v3022 = vpack.c.b16 %v2990, %v2990
        %v3023 = vpack.c.b16 %v2991, %v2991
        %v3024 = vpack.c.b16 %v2992, %v2992
        %v3025 = vpack.c.b16 %v2993, %v2993
        %v3026 = vpack.c.b16 %v2994, %v2994
        %v3027 = vpack.c.b16 %v2995, %v2995
        %v3028 = vpack.c.b16 %v2996, %v2996
        %v3029 = vpack.c.b16 %v2997, %v2997
        %v3030 = vpack.c.b16 %v2998, %v2998
        %v3031 = vpack.c.b16 %v2999, %v2999
        %v3032 = vpack.c.b16 %v3000, %v3000
        %v3033 = vpack.c.b16 %v3001, %v3001
        %v3034 = vpack.c.b16 %v3002, %v3002
        %v3035 = vpack.c.b16 %v3003, %v3003
        %v3036 = vpack.c.b16 %v3004, %v3004
        %v3037 = vpack.c.b16 %v3005, %v3005
        %v3038 = vpack.c.b16 %v3006, %v3006
        %v3039 = vpack.c.b16 %v3007, %v3007
        %v3040 = vpack.c.b16 %v3008, %v3008
        %v3041 = vpack.c.b16 %v3009, %v3009
        %v3042 = vpack.c.b16 %v3010, %v3010
        %v3043 = vpack.c.b16 %v3011, %v3011
        %v3044 = vpack.c.b16 %v3012, %v3012
        %v3045 = vpack.c.b16 %v3013, %v3013
        %v3046 = vpack.c.b16 %v3014, %v3014
        %v3047 = vpack.c.b16 %v3015, %v3015
        %v3048 = vpack.c.b16 %v3016, %v3016
        %3081 = vst [vmem:[%s789] sm:$0xf] %v3017
        %3082 = vst [vmem:[%s789 + $0x4] sm:$0xf] %v3018
        %3083 = vst [vmem:[%s789 + $0x8] sm:$0xf] %v3019
        %3084 = vst [vmem:[%s789 + $0xc] sm:$0xf] %v3020
        %3085 = vst [vmem:[%s789 + $0x10] sm:$0xf] %v3021
        %3086 = vst [vmem:[%s789 + $0x14] sm:$0xf] %v3022
        %3087 = vst [vmem:[%s789 + $0x18] sm:$0xf] %v3023
        %3088 = vst [vmem:[%s789 + $0x1c] sm:$0xf] %v3024
        %3089 = vst [vmem:[%s789 + $0x20] sm:$0xf] %v3025
        %3090 = vst [vmem:[%s789 + $0x24] sm:$0xf] %v3026
        %3091 = vst [vmem:[%s789 + $0x28] sm:$0xf] %v3027
        %3092 = vst [vmem:[%s789 + $0x2c] sm:$0xf] %v3028
        %3093 = vst [vmem:[%s789 + $0x30] sm:$0xf] %v3029
        %3094 = vst [vmem:[%s789 + $0x34] sm:$0xf] %v3030
        %3095 = vst [vmem:[%s789 + $0x38] sm:$0xf] %v3031
        %3096 = vst [vmem:[%s789 + $0x3c] sm:$0xf] %v3032
        %3097 = vst [vmem:[%s789 + $0x40] sm:$0xf] %v3033
        %3098 = vst [vmem:[%s789 + $0x44] sm:$0xf] %v3034
        %3099 = vst [vmem:[%s789 + $0x48] sm:$0xf] %v3035
        %3100 = vst [vmem:[%s789 + $0x4c] sm:$0xf] %v3036
        %3101 = vst [vmem:[%s789 + $0x50] sm:$0xf] %v3037
        %3102 = vst [vmem:[%s789 + $0x54] sm:$0xf] %v3038
        %3103 = vst [vmem:[%s789 + $0x58] sm:$0xf] %v3039
        %3104 = vst [vmem:[%s789 + $0x5c] sm:$0xf] %v3040
        %3105 = vst [vmem:[%s789 + $0x60] sm:$0xf] %v3041
        %3106 = vst [vmem:[%s789 + $0x64] sm:$0xf] %v3042
        %3107 = vst [vmem:[%s789 + $0x68] sm:$0xf] %v3043
        %3108 = vst [vmem:[%s789 + $0x6c] sm:$0xf] %v3044
        %3109 = vst [vmem:[%s789 + $0x70] sm:$0xf] %v3045
        %3110 = vst [vmem:[%s789 + $0x74] sm:$0xf] %v3046
        %3111 = vst [vmem:[%s789 + $0x78] sm:$0xf] %v3047
        %3112 = vst [vmem:[%s789 + $0x7c] sm:$0xf] %v3048
        %v3113 = vld [vmem:[%s706] sm:$0xff]
        %v3114 = vld [vmem:[%s706 + $0x8] sm:$0xff]
        %v3115 = vld [vmem:[%s706 + $0x10] sm:$0xff]
        %v3116 = vld [vmem:[%s706 + $0x18] sm:$0xff]
        %v3117 = vld [vmem:[%s706 + $0x20] sm:$0xff]
        %v3118 = vld [vmem:[%s706 + $0x28] sm:$0xff]
        %v3119 = vld [vmem:[%s706 + $0x30] sm:$0xff]
        %v3120 = vld [vmem:[%s706 + $0x38] sm:$0xff]
        %v3121 = vld [vmem:[%s706 + $0x40] sm:$0xff]
        %v3122 = vld [vmem:[%s706 + $0x48] sm:$0xff]
        %v3123 = vld [vmem:[%s706 + $0x50] sm:$0xff]
        %v3124 = vld [vmem:[%s706 + $0x58] sm:$0xff]
        %v3125 = vld [vmem:[%s706 + $0x60] sm:$0xff]
        %v3126 = vld [vmem:[%s706 + $0x68] sm:$0xff]
        %v3127 = vld [vmem:[%s706 + $0x70] sm:$0xff]
        %v3128 = vld [vmem:[%s706 + $0x78] sm:$0xff]
        %3129 = vmatprep.subr.mxu0 0.0
        %3130 = vmatpush1.msra.mxu0 %v3113
        %3131 = vmatprep.subr.mxu0 0.0
        %3132 = vmatpush1.msra.mxu0 %v3114
        %3133 = vmatprep.subr.mxu0 0.0
        %3134 = vmatpush1.msra.mxu0 %v3115
        %3135 = vmatprep.subr.mxu0 0.0
        %3136 = vmatpush1.msra.mxu0 %v3116
        %3137 = vmatprep.subr.mxu0 0.0
        %3138 = vmatpush1.msra.mxu0 %v3117
        %3139 = vmatprep.subr.mxu0 0.0
        %3140 = vmatpush1.msra.mxu0 %v3118
        %3141 = vmatprep.subr.mxu0 0.0
        %3142 = vmatpush1.msra.mxu0 %v3119
        %3143 = vmatprep.subr.mxu0 0.0
        %3144 = vmatpush1.msra.mxu0 %v3120
        %3145 = vmatprep.subr.mxu0 0.0
        %3146 = vmatpush1.msra.mxu0 %v3121
        %3147 = vmatprep.subr.mxu0 0.0
        %3148 = vmatpush1.msra.mxu0 %v3122
        %3149 = vmatprep.subr.mxu0 0.0
        %3150 = vmatpush1.msra.mxu0 %v3123
        %3151 = vmatprep.subr.mxu0 0.0
        %3152 = vmatpush1.msra.mxu0 %v3124
        %3153 = vmatprep.subr.mxu0 0.0
        %3154 = vmatpush1.msra.mxu0 %v3125
        %3155 = vmatprep.subr.mxu0 0.0
        %3156 = vmatpush1.msra.mxu0 %v3126
        %3157 = vmatprep.subr.mxu0 0.0
        %3158 = vmatpush1.msra.mxu0 %v3127
        %3159 = vmatprep.subr.mxu0 0.0
        %3160 = vmatpush1.msra.mxu0 %v3128
        %3161 = vmatprep.subr.mxu0 0.0
        %3162 = vmatpush1.msra.mxu0 0.0
        %3163 = vmatprep.subr.mxu0 0.0
        %3164 = vmatpush1.msra.mxu0 0.0
        %3165 = vmatprep.subr.mxu0 0.0
        %3166 = vmatpush1.msra.mxu0 0.0
        %3167 = vmatprep.subr.mxu0 0.0
        %3168 = vmatpush1.msra.mxu0 0.0
        %3169 = vmatprep.subr.mxu0 0.0
        %3170 = vmatpush1.msra.mxu0 0.0
        %3171 = vmatprep.subr.mxu0 0.0
        %3172 = vmatpush1.msra.mxu0 0.0
        %3173 = vmatprep.subr.mxu0 0.0
        %3174 = vmatpush1.msra.mxu0 0.0
        %3175 = vmatprep.subr.mxu0 0.0
        %3176 = vmatpush1.msra.mxu0 0.0
        %3177 = vmatprep.subr.mxu0 0.0
        %3178 = vmatpush1.msra.mxu0 0.0
        %3179 = vmatprep.subr.mxu0 0.0
        %3180 = vmatpush1.msra.mxu0 0.0
        %3181 = vmatprep.subr.mxu0 0.0
        %3182 = vmatpush1.msra.mxu0 0.0
        %3183 = vmatprep.subr.mxu0 0.0
        %3184 = vmatpush1.msra.mxu0 0.0
        %3185 = vmatprep.subr.mxu0 0.0
        %3186 = vmatpush1.msra.mxu0 0.0
        %3187 = vmatprep.subr.mxu0 0.0
        %3188 = vmatpush1.msra.mxu0 0.0
        %3189 = vmatprep.subr.mxu0 0.0
        %3190 = vmatpush1.msra.mxu0 0.0
        %3191 = vmatprep.subr.mxu0 0.0
        %3192 = vmatpush1.msra.mxu0 0.0
        %3193 = vmatprep.mubr.f32.mxu0 0.0
        %3194 = vmatmul.mubr.f32.gmra.mrb[0].mxu0 %v1139
        %v3195 = vpop.f32.mrb[0].mxu0
        %v3196 = vadd.f32 0.0, %v3195
        %v3197 = vpop.f32.mrb[0].mxu0
        %3198 = vmatprep.mubr.f32.mxu0 0.0
        %3199 = vmatmul.mubr.f32.gmra.mrb[0].mxu0 %v1140
        %v3200 = vpop.f32.mrb[0].mxu0
        %v3201 = vadd.f32 0.0, %v3200
        %v3202 = vpop.f32.mrb[0].mxu0
        %3203 = vmatprep.mubr.f32.mxu0 0.0
        %3204 = vmatmul.mubr.f32.gmra.mrb[0].mxu0 %v1141
        %v3205 = vpop.f32.mrb[0].mxu0
        %v3206 = vadd.f32 0.0, %v3205
        %v3207 = vpop.f32.mrb[0].mxu0
        %3208 = vmatprep.mubr.f32.mxu0 0.0
        %3209 = vmatmul.mubr.f32.gmra.mrb[0].mxu0 %v1142
        %v3210 = vpop.f32.mrb[0].mxu0
        %v3211 = vadd.f32 0.0, %v3210
        %v3212 = vpop.f32.mrb[0].mxu0
        %3213 = vmatprep.mubr.f32.mxu0 0.0
        %3214 = vmatmul.mubr.f32.gmra.mrb[0].mxu0 %v1143
        %v3215 = vpop.f32.mrb[0].mxu0
        %v3216 = vadd.f32 0.0, %v3215
        %v3217 = vpop.f32.mrb[0].mxu0
        %3218 = vmatprep.mubr.f32.mxu0 0.0
        %3219 = vmatmul.mubr.f32.gmra.mrb[0].mxu0 %v1144
        %v3220 = vpop.f32.mrb[0].mxu0
        %v3221 = vadd.f32 0.0, %v3220
        %v3222 = vpop.f32.mrb[0].mxu0
        %3223 = vmatprep.mubr.f32.mxu0 0.0
        %3224 = vmatmul.mubr.f32.gmra.mrb[0].mxu0 %v1145
        %v3225 = vpop.f32.mrb[0].mxu0
        %v3226 = vadd.f32 0.0, %v3225
        %v3227 = vpop.f32.mrb[0].mxu0
        %3228 = vmatprep.mubr.f32.mxu0 0.0
        %3229 = vmatmul.mubr.f32.gmra.mrb[0].mxu0 %v1146
        %v3230 = vpop.f32.mrb[0].mxu0
        %v3231 = vadd.f32 0.0, %v3230
        %v3232 = vpop.f32.mrb[0].mxu0
        %3233 = vmatprep.mubr.f32.mxu0 0.0
        %3234 = vmatmul.mubr.f32.gmra.mrb[0].mxu0 %v1147
        %v3235 = vpop.f32.mrb[0].mxu0
        %v3236 = vadd.f32 0.0, %v3235
        %v3237 = vpop.f32.mrb[0].mxu0
        %3238 = vmatprep.mubr.f32.mxu0 0.0
        %3239 = vmatmul.mubr.f32.gmra.mrb[0].mxu0 %v1148
        %v3240 = vpop.f32.mrb[0].mxu0
        %v3241 = vadd.f32 0.0, %v3240
        %v3242 = vpop.f32.mrb[0].mxu0
        %3243 = vmatprep.mubr.f32.mxu0 0.0
        %3244 = vmatmul.mubr.f32.gmra.mrb[0].mxu0 %v1149
        %v3245 = vpop.f32.mrb[0].mxu0
        %v3246 = vadd.f32 0.0, %v3245
        %v3247 = vpop.f32.mrb[0].mxu0
        %3248 = vmatprep.mubr.f32.mxu0 0.0
        %3249 = vmatmul.mubr.f32.gmra.mrb[0].mxu0 %v1150
        %v3250 = vpop.f32.mrb[0].mxu0
        %v3251 = vadd.f32 0.0, %v3250
        %v3252 = vpop.f32.mrb[0].mxu0
        %3253 = vmatprep.mubr.f32.mxu0 0.0
        %3254 = vmatmul.mubr.f32.gmra.mrb[0].mxu0 %v1151
        %v3255 = vpop.f32.mrb[0].mxu0
        %v3256 = vadd.f32 0.0, %v3255
        %v3257 = vpop.f32.mrb[0].mxu0
        %3258 = vmatprep.mubr.f32.mxu0 0.0
        %3259 = vmatmul.mubr.f32.gmra.mrb[0].mxu0 %v1152
        %v3260 = vpop.f32.mrb[0].mxu0
        %v3261 = vadd.f32 0.0, %v3260
        %v3262 = vpop.f32.mrb[0].mxu0
        %3263 = vmatprep.mubr.f32.mxu0 0.0
        %3264 = vmatmul.mubr.f32.gmra.mrb[0].mxu0 %v1153
        %v3265 = vpop.f32.mrb[0].mxu0
        %v3266 = vadd.f32 0.0, %v3265
        %v3267 = vpop.f32.mrb[0].mxu0
        %3268 = vmatprep.mubr.f32.mxu0 0.0
        %3269 = vmatmul.mubr.f32.gmra.mrb[0].mxu0 %v1154
        %v3270 = vpop.f32.mrb[0].mxu0
        %v3271 = vadd.f32 0.0, %v3270
        %v3272 = vpop.f32.mrb[0].mxu0
        %3273 = vmatprep.mubr.f32.mxu0 0.0
        %3274 = vmatmul.mubr.f32.gmra.mrb[0].mxu0 %v1155
        %v3275 = vpop.f32.mrb[0].mxu0
        %v3276 = vadd.f32 0.0, %v3275
        %v3277 = vpop.f32.mrb[0].mxu0
        %3278 = vmatprep.mubr.f32.mxu0 0.0
        %3279 = vmatmul.mubr.f32.gmra.mrb[0].mxu0 %v1156
        %v3280 = vpop.f32.mrb[0].mxu0
        %v3281 = vadd.f32 0.0, %v3280
        %v3282 = vpop.f32.mrb[0].mxu0
        %3283 = vmatprep.mubr.f32.mxu0 0.0
        %3284 = vmatmul.mubr.f32.gmra.mrb[0].mxu0 %v1157
        %v3285 = vpop.f32.mrb[0].mxu0
        %v3286 = vadd.f32 0.0, %v3285
        %v3287 = vpop.f32.mrb[0].mxu0
        %3288 = vmatprep.mubr.f32.mxu0 0.0
        %3289 = vmatmul.mubr.f32.gmra.mrb[0].mxu0 %v1158
        %v3290 = vpop.f32.mrb[0].mxu0
        %v3291 = vadd.f32 0.0, %v3290
        %v3292 = vpop.f32.mrb[0].mxu0
        %3293 = vmatprep.mubr.f32.mxu0 0.0
        %3294 = vmatmul.mubr.f32.gmra.mrb[0].mxu0 %v1159
        %v3295 = vpop.f32.mrb[0].mxu0
        %v3296 = vadd.f32 0.0, %v3295
        %v3297 = vpop.f32.mrb[0].mxu0
        %3298 = vmatprep.mubr.f32.mxu0 0.0
        %3299 = vmatmul.mubr.f32.gmra.mrb[0].mxu0 %v1160
        %v3300 = vpop.f32.mrb[0].mxu0
        %v3301 = vadd.f32 0.0, %v3300
        %v3302 = vpop.f32.mrb[0].mxu0
        %3303 = vmatprep.mubr.f32.mxu0 0.0
        %3304 = vmatmul.mubr.f32.gmra.mrb[0].mxu0 %v1161
        %v3305 = vpop.f32.mrb[0].mxu0
        %v3306 = vadd.f32 0.0, %v3305
        %v3307 = vpop.f32.mrb[0].mxu0
        %3308 = vmatprep.mubr.f32.mxu0 0.0
        %3309 = vmatmul.mubr.f32.gmra.mrb[0].mxu0 %v1162
        %v3310 = vpop.f32.mrb[0].mxu0
        %v3311 = vadd.f32 0.0, %v3310
        %v3312 = vpop.f32.mrb[0].mxu0
        %3313 = vmatprep.mubr.f32.mxu0 0.0
        %3314 = vmatmul.mubr.f32.gmra.mrb[0].mxu0 %v1163
        %v3315 = vpop.f32.mrb[0].mxu0
        %v3316 = vadd.f32 0.0, %v3315
        %v3317 = vpop.f32.mrb[0].mxu0
        %3318 = vmatprep.mubr.f32.mxu0 0.0
        %3319 = vmatmul.mubr.f32.gmra.mrb[0].mxu0 %v1164
        %v3320 = vpop.f32.mrb[0].mxu0
        %v3321 = vadd.f32 0.0, %v3320
        %v3322 = vpop.f32.mrb[0].mxu0
        %3323 = vmatprep.mubr.f32.mxu0 0.0
        %3324 = vmatmul.mubr.f32.gmra.mrb[0].mxu0 %v1165
        %v3325 = vpop.f32.mrb[0].mxu0
        %v3326 = vadd.f32 0.0, %v3325
        %v3327 = vpop.f32.mrb[0].mxu0
        %3328 = vmatprep.mubr.f32.mxu0 0.0
        %3329 = vmatmul.mubr.f32.gmra.mrb[0].mxu0 %v1166
        %v3330 = vpop.f32.mrb[0].mxu0
        %v3331 = vadd.f32 0.0, %v3330
        %v3332 = vpop.f32.mrb[0].mxu0
        %3333 = vmatprep.mubr.f32.mxu0 0.0
        %3334 = vmatmul.mubr.f32.gmra.mrb[0].mxu0 %v1167
        %v3335 = vpop.f32.mrb[0].mxu0
        %v3336 = vadd.f32 0.0, %v3335
        %v3337 = vpop.f32.mrb[0].mxu0
        %3338 = vmatprep.mubr.f32.mxu0 0.0
        %3339 = vmatmul.mubr.f32.gmra.mrb[0].mxu0 %v1168
        %v3340 = vpop.f32.mrb[0].mxu0
        %v3341 = vadd.f32 0.0, %v3340
        %v3342 = vpop.f32.mrb[0].mxu0
        %3343 = vmatprep.mubr.f32.mxu0 0.0
        %3344 = vmatmul.mubr.f32.gmra.mrb[0].mxu0 %v1169
        %v3345 = vpop.f32.mrb[0].mxu0
        %v3346 = vadd.f32 0.0, %v3345
        %v3347 = vpop.f32.mrb[0].mxu0
        %3348 = vmatprep.mubr.f32.mxu0 0.0
        %3349 = vmatmul.mubr.f32.gmra.mrb[0].mxu0 %v1170
        %v3350 = vpop.f32.mrb[0].mxu0
        %v3351 = vadd.f32 0.0, %v3350
        %v3352 = vpop.f32.mrb[0].mxu0
        %3353 = vdwg.mxu0
        %v3354 = vpack.c.bf16 %v3201, %v3196
        %v3355 = vpack.c.bf16 %v3211, %v3206
        %v3356 = vpack.c.bf16 %v3221, %v3216
        %v3357 = vpack.c.bf16 %v3231, %v3226
        %v3358 = vpack.c.bf16 %v3241, %v3236
        %v3359 = vpack.c.bf16 %v3251, %v3246
        %v3360 = vpack.c.bf16 %v3261, %v3256
        %v3361 = vpack.c.bf16 %v3271, %v3266
        %v3362 = vpack.c.bf16 %v3281, %v3276
        %v3363 = vpack.c.bf16 %v3291, %v3286
        %v3364 = vpack.c.bf16 %v3301, %v3296
        %v3365 = vpack.c.bf16 %v3311, %v3306
        %v3366 = vpack.c.bf16 %v3321, %v3316
        %v3367 = vpack.c.bf16 %v3331, %v3326
        %v3368 = vpack.c.bf16 %v3341, %v3336
        %v3369 = vpack.c.bf16 %v3351, %v3346
        %v3386 = vunpack.c.l.b16 %v3354
        %v3387 = vunpack.c.h.b16 %v3354
        %v3388 = vunpack.c.l.b16 %v3355
        %v3389 = vunpack.c.h.b16 %v3355
        %v3390 = vunpack.c.l.b16 %v3356
        %v3391 = vunpack.c.h.b16 %v3356
        %v3392 = vunpack.c.l.b16 %v3357
        %v3393 = vunpack.c.h.b16 %v3357
        %v3394 = vunpack.c.l.b16 %v3358
        %v3395 = vunpack.c.h.b16 %v3358
        %v3396 = vunpack.c.l.b16 %v3359
        %v3397 = vunpack.c.h.b16 %v3359
        %v3398 = vunpack.c.l.b16 %v3360
        %v3399 = vunpack.c.h.b16 %v3360
        %v3400 = vunpack.c.l.b16 %v3361
        %v3401 = vunpack.c.h.b16 %v3361
        %v3402 = vunpack.c.l.b16 %v3362
        %v3403 = vunpack.c.h.b16 %v3362
        %v3404 = vunpack.c.l.b16 %v3363
        %v3405 = vunpack.c.h.b16 %v3363
        %v3406 = vunpack.c.l.b16 %v3364
        %v3407 = vunpack.c.h.b16 %v3364
        %v3408 = vunpack.c.l.b16 %v3365
        %v3409 = vunpack.c.h.b16 %v3365
        %v3410 = vunpack.c.l.b16 %v3366
        %v3411 = vunpack.c.h.b16 %v3366
        %v3412 = vunpack.c.l.b16 %v3367
        %v3413 = vunpack.c.h.b16 %v3367
        %v3414 = vunpack.c.l.b16 %v3368
        %v3415 = vunpack.c.h.b16 %v3368
        %v3416 = vunpack.c.l.b16 %v3369
        %v3417 = vunpack.c.h.b16 %v3369
        %v3418 = vpack.c.b16 %v3386, %v3386
        %v3419 = vpack.c.b16 %v3387, %v3387
        %v3420 = vpack.c.b16 %v3388, %v3388
        %v3421 = vpack.c.b16 %v3389, %v3389
        %v3422 = vpack.c.b16 %v3390, %v3390
        %v3423 = vpack.c.b16 %v3391, %v3391
        %v3424 = vpack.c.b16 %v3392, %v3392
        %v3425 = vpack.c.b16 %v3393, %v3393
        %v3426 = vpack.c.b16 %v3394, %v3394
        %v3427 = vpack.c.b16 %v3395, %v3395
        %v3428 = vpack.c.b16 %v3396, %v3396
        %v3429 = vpack.c.b16 %v3397, %v3397
        %v3430 = vpack.c.b16 %v3398, %v3398
        %v3431 = vpack.c.b16 %v3399, %v3399
        %v3432 = vpack.c.b16 %v3400, %v3400
        %v3433 = vpack.c.b16 %v3401, %v3401
        %v3434 = vpack.c.b16 %v3402, %v3402
        %v3435 = vpack.c.b16 %v3403, %v3403
        %v3436 = vpack.c.b16 %v3404, %v3404
        %v3437 = vpack.c.b16 %v3405, %v3405
        %v3438 = vpack.c.b16 %v3406, %v3406
        %v3439 = vpack.c.b16 %v3407, %v3407
        %v3440 = vpack.c.b16 %v3408, %v3408
        %v3441 = vpack.c.b16 %v3409, %v3409
        %v3442 = vpack.c.b16 %v3410, %v3410
        %v3443 = vpack.c.b16 %v3411, %v3411
        %v3444 = vpack.c.b16 %v3412, %v3412
        %v3445 = vpack.c.b16 %v3413, %v3413
        %v3446 = vpack.c.b16 %v3414, %v3414
        %v3447 = vpack.c.b16 %v3415, %v3415
        %v3448 = vpack.c.b16 %v3416, %v3416
        %v3449 = vpack.c.b16 %v3417, %v3417
        %3482 = vst [vmem:[%s796] sm:$0xf] %v3418
        %3483 = vst [vmem:[%s796 + $0x4] sm:$0xf] %v3419
        %3484 = vst [vmem:[%s796 + $0x8] sm:$0xf] %v3420
        %3485 = vst [vmem:[%s796 + $0xc] sm:$0xf] %v3421
        %3486 = vst [vmem:[%s796 + $0x10] sm:$0xf] %v3422
        %3487 = vst [vmem:[%s796 + $0x14] sm:$0xf] %v3423
        %3488 = vst [vmem:[%s796 + $0x18] sm:$0xf] %v3424
        %3489 = vst [vmem:[%s796 + $0x1c] sm:$0xf] %v3425
        %3490 = vst [vmem:[%s796 + $0x20] sm:$0xf] %v3426
        %3491 = vst [vmem:[%s796 + $0x24] sm:$0xf] %v3427
        %3492 = vst [vmem:[%s796 + $0x28] sm:$0xf] %v3428
        %3493 = vst [vmem:[%s796 + $0x2c] sm:$0xf] %v3429
        %3494 = vst [vmem:[%s796 + $0x30] sm:$0xf] %v3430
        %3495 = vst [vmem:[%s796 + $0x34] sm:$0xf] %v3431
        %3496 = vst [vmem:[%s796 + $0x38] sm:$0xf] %v3432
        %3497 = vst [vmem:[%s796 + $0x3c] sm:$0xf] %v3433
        %3498 = vst [vmem:[%s796 + $0x40] sm:$0xf] %v3434
        %3499 = vst [vmem:[%s796 + $0x44] sm:$0xf] %v3435
        %3500 = vst [vmem:[%s796 + $0x48] sm:$0xf] %v3436
        %3501 = vst [vmem:[%s796 + $0x4c] sm:$0xf] %v3437
        %3502 = vst [vmem:[%s796 + $0x50] sm:$0xf] %v3438
        %3503 = vst [vmem:[%s796 + $0x54] sm:$0xf] %v3439
        %3504 = vst [vmem:[%s796 + $0x58] sm:$0xf] %v3440
        %3505 = vst [vmem:[%s796 + $0x5c] sm:$0xf] %v3441
        %3506 = vst [vmem:[%s796 + $0x60] sm:$0xf] %v3442
        %3507 = vst [vmem:[%s796 + $0x64] sm:$0xf] %v3443
        %3508 = vst [vmem:[%s796 + $0x68] sm:$0xf] %v3444
        %3509 = vst [vmem:[%s796 + $0x6c] sm:$0xf] %v3445
        %3510 = vst [vmem:[%s796 + $0x70] sm:$0xf] %v3446
        %3511 = vst [vmem:[%s796 + $0x74] sm:$0xf] %v3447
        %3512 = vst [vmem:[%s796 + $0x78] sm:$0xf] %v3448
        %3513 = vst [vmem:[%s796 + $0x7c] sm:$0xf] %v3449
        %s3514 = sand.u32 %s322, 1
        %s3515 = scalar_lea.sflag [#allocation5], %s3514
        %s3516 = sand.u32 %s322, 1
        %s3517 = smul.addr %s3516, 256
        %s3518 = scalar_lea.vmem [#allocation16], %s3517
        %s3519 = sand.u32 %s34, 1
        %s3520 = scalar_lea.sflag [#allocation18], %s3519
        %s3521 = sand.u32 %s352, 1
        %s3522 = smul.addr %s3521, 128
        %s3523 = scalar_lea.vmem [#allocation17], %s3522
        %s3524 = sand.u32 %s34, 1
        %s3525 = scalar_lea.sflag [#allocation18], %s3524
        %s3526 = sand.u32 %s382, 1
        %s3527 = smul.addr %s3526, 128
        %s3528 = scalar_lea.vmem [#allocation19], %s3527
        // Predicated region
        $region105: #{tpu_custom_call.1} parent=59 // pred_check
          %p3529 = pneg %p332
        $region106: #{tpu_custom_call.1} parent=59 // pred_check_branch
          %3531 = sbr.rel (%p3529) target = $region108
        $region107: #{tpu_custom_call.1} parent=59 // pred_region
          #allocation21 [shape = 'u32[6]{0}', space=smem, size = 0x18, scoped, tag = 'DMA stride descriptor']
          %s3532 = smul.u32 2, %s41
          %s3533 = smul.u32 32, %s40
          %s3535 = ssub.s32 4096, 4096
          %3536 = vsyncadd %s3515, %s3535
          %s3537 = smul.addr %s3532, 128
          %s3538 = sadd.s32 %s3533, %s3537
          %s3539 = smul.addr %s39, 512
          %s3540 = sadd.s32 %s3538, %s3539
          %s3541 = smul.addr %s3540, 64
          %s3542 = scalar_lea.hbm %s10, %s3541
          %s3544 = sshll.u32 1, 14
          %s3545 = sxor.u32 4294967295, %s3544
          %s3548 = sshll.u32 7, 18
          %s3549 = sxor.u32 4294967295, %s3548
          %s3550 = sand.u32 0, %s3549
          %s3552 = sor.u32 %s3550, 0
          %s3554 = sshll.u32 3, 24
          %s3555 = sxor.u32 4294967295, %s3554
          %s3556 = sand.u32 %s3552, %s3555
          %s3558 = sor.u32 %s3556, 0
          %s3559 = sshll.u32 %s3518, 4
          %s3560 = int_to_ptr.vmem [resolvable:$true] %s3559
          %3566 = sst [smem:[#allocation21]] 2048
          %s3567 = scalar_lea.smem [#allocation21], 1
          %3568 = sst [smem:[%s3567]] 8192
          %s3569 = scalar_lea.smem [#allocation21], 2
          %3570 = sst [smem:[%s3569]] 32
          %s3571 = scalar_lea.smem [#allocation21], 3
          %3572 = sst [smem:[%s3571]] 64
          %s3573 = scalar_lea.smem [#allocation21], 4
          %3574 = sst [smem:[%s3573]] 64
          %s3575 = scalar_lea.smem [#allocation21], 5
          %3576 = sst [smem:[%s3575]] 4
          %3578 = dma.general %s3560, 4096, %s3542, %s3515, [#allocation20], [#allocation21], %s3558, 0
        $region108: #{tpu_custom_call.1} parent=59 // pred_fallthru
          _
        // Predicated region
        $region109: #{tpu_custom_call.1} parent=59 // pred_check
          %p3579 = pneg %p362
        $region110: #{tpu_custom_call.1} parent=59 // pred_check_branch
          %3581 = sbr.rel (%p3579) target = $region112
        $region111: #{tpu_custom_call.1} parent=59 // pred_region
          %s3582 = smul.u32 32, %s40
          %s3584 = ssub.s32 2048, 2048
          %3585 = vsyncadd %s3520, %s3584
          %s3586 = smul.addr %s41, 128
          %s3587 = sadd.s32 %s3582, %s3586
          %s3588 = smul.addr %s39, 256
          %s3589 = sadd.s32 %s3587, %s3588
          %s3590 = smul.addr %s3589, 64
          %s3591 = scalar_lea.hbm %s11, %s3590
          %s3592 = sshll.u32 %s3523, 4
          %s3593 = int_to_ptr.vmem [resolvable:$true] %s3592
          %3598 = dma.vmem_to_hbm [thread:$0]  %s3593, 2048, %s3591, %s3520, 64, 64, 4
        $region112: #{tpu_custom_call.1} parent=59 // pred_fallthru
          _
        // Predicated region
        $region113: #{tpu_custom_call.1} parent=59 // pred_check
          %p3599 = pneg %p392
        $region114: #{tpu_custom_call.1} parent=59 // pred_check_branch
          %3601 = sbr.rel (%p3599) target = $region116
        $region115: #{tpu_custom_call.1} parent=59 // pred_region
          %s3602 = smul.u32 32, %s40
          %s3604 = ssub.s32 2048, 2048
          %3605 = vsyncadd %s3525, %s3604
          %s3606 = smul.addr %s41, 128
          %s3607 = sadd.s32 %s3602, %s3606
          %s3608 = smul.addr %s39, 256
          %s3609 = sadd.s32 %s3607, %s3608
          %s3610 = smul.addr %s3609, 64
          %s3611 = scalar_lea.hbm %s12, %s3610
          %s3612 = sshll.u32 %s3528, 4
          %s3613 = int_to_ptr.vmem [resolvable:$true] %s3612
          %3618 = dma.vmem_to_hbm [thread:$0]  %s3613, 2048, %s3611, %s3525, 64, 64, 4
        $region116: #{tpu_custom_call.1} parent=59 // pred_fallthru
          _
      $region60: #{tpu_custom_call.1} parent=5 // pred_fallthru
        _
      %p3619 = scmp.le.s32.totalorder 2, %s29
      // Predicated region
      $region117: #{tpu_custom_call.1} parent=5 // pred_check
        %p3620 = pneg %p3619
      $region118: #{tpu_custom_call.1} parent=5 // pred_check_branch
        %3622 = sbr.rel (%p3620) target = $region120
      $region119: #{tpu_custom_call.1} parent=5 // pred_region
        %s3623 = ssub.s32 %s29, 2
        // Predicated region
        $region121: #{tpu_custom_call.1} parent=119 // pred_check
          %p3624 = pneg %p338
        $region122: #{tpu_custom_call.1} parent=119 // pred_check_branch
          %3626 = sbr.rel (%p3624) target = $region124
        $region123: #{tpu_custom_call.1} parent=119 // pred_region
          %s3627 = sand.u32 %s323, 1
          %s3628 = scalar_lea.sflag [#allocation5], %s3627
          %s3629 = sand.u32 %s323, 1
          %s3630 = smul.addr %s3629, 256
          %s3631 = scalar_lea.vmem [#allocation16], %s3630
          %3632 = dma.done %s3628, 4096
        $region124: #{tpu_custom_call.1} parent=119 // pred_fallthru
          _
        // Predicated region
        $region125: #{tpu_custom_call.1} parent=119 // pred_check
          %p3633 = pneg %p368
        $region126: #{tpu_custom_call.1} parent=119 // pred_check_branch
          %3635 = sbr.rel (%p3633) target = $region128
        $region127: #{tpu_custom_call.1} parent=119 // pred_region
          %s3636 = sand.u32 %s35, 1
          %s3637 = scalar_lea.sflag [#allocation18], %s3636
          %s3638 = sand.u32 %s353, 1
          %s3639 = smul.addr %s3638, 128
          %s3640 = scalar_lea.vmem [#allocation17], %s3639
          %3641 = dma.done %s3637, 2048
        $region128: #{tpu_custom_call.1} parent=119 // pred_fallthru
          _
        // Predicated region
        $region129: #{tpu_custom_call.1} parent=119 // pred_check
          %p3642 = pneg %p398
        $region130: #{tpu_custom_call.1} parent=119 // pred_check_branch
          %3644 = sbr.rel (%p3642) target = $region132
        $region131: #{tpu_custom_call.1} parent=119 // pred_region
          %s3645 = sand.u32 %s35, 1
          %s3646 = scalar_lea.sflag [#allocation18], %s3645
          %s3647 = sand.u32 %s383, 1
          %s3648 = smul.addr %s3647, 128
          %s3649 = scalar_lea.vmem [#allocation19], %s3648
          %3650 = dma.done %s3646, 2048
        $region132: #{tpu_custom_call.1} parent=119 // pred_fallthru
          _
      $region120: #{tpu_custom_call.1} parent=5 // pred_fallthru
        _
    $region6: #{tpu_custom_call.1} parent=1 // loop_footer
      %s33 = sadd.s32 1, %s29
    $region7: #{tpu_custom_call.1} parent=1 // loop_footer_branch
      %28 = sbr.rel target = $region3
    $region8: #{tpu_custom_call.1} parent=1 // loop_exit
      _
    %3651 = vsyncpa [#allocation4], 1
    %s3652 = scalar_lea.sflag [#allocation4], 1
    %3653 = vsyncpa %s3652, 1
    %3654 = vsyncpa [#allocation7], 1
    %3655 = vsyncpa [#allocation5], 1
    %s3656 = scalar_lea.sflag [#allocation5], 1
    %3657 = vsyncpa %s3656, 1
    %3658 = vsyncpa [#allocation18], 1
    %s3659 = scalar_lea.sflag [#allocation18], 1
    %3660 = vsyncpa %s3659, 1

</llo_original>
